<compile_context>
chip_gen: v6e
topology: v6e:2x2x1
jax: 0.10.0
libtpu: 0.0.40
codegen_flags: <defaults>
</compile_context>

<pallas_src>
import math
import jax
import jax.numpy as jnp
from jax import lax
from jax.experimental import pallas as pl
from jax.experimental.pallas import tpu as pltpu


# ----------------------------------------------------------------------------- #
# Fused kernel (one grid step per batch block):
#   - build SAME halo in VMEM scratch
#   - 3 "dynamic" 3x3 convs (c/h/w orientations) via shifted slices of the scratch
#   - per-branch unbiased-variance scaling + bias
#   - Attention(3->1->1), softmax over C, gate, 1/3 combine
#
# x_ref : (NB, C, H, W)          input block (VMEM)
# p_ref : (36,)                  packed params (SMEM):
#           [ 0: 9] c_hw 3x3 weights (row-major)  [ 9] c_hw bias
#           [10:19] h_cw 3x3 weights              [19] h_cw bias
#           [20:29] w_hc 3x3 weights              [29] w_hc bias
#           [30:33] att fc weight (3) [33] fc bias [34] fc2 weight [35] fc2 bias
# o_ref : (NB, C, H, W)          output block (VMEM)
# xp_ref: (NB, C+2, H+2, W+2)    zero-halo scratch (VMEM)
# ----------------------------------------------------------------------------- #
def _mca_fused_kernel(x_ref, p_ref, o_ref, xp_ref):
    NB, C, H, W = x_ref.shape

    x = x_ref[...]                                    # (NB, C, H, W), f32

    # ---- in-kernel SAME halo: zero the scratch, store the block interior -------
    xp_ref[...] = jnp.zeros_like(xp_ref)
    xp_ref[:, 1:C + 1, 1:H + 1, 1:W + 1] = x

    # ---- one-pass unbiased variances, sharing partial sums ---------------------
    x2 = x * x
    sW = jnp.sum(x, axis=3, keepdims=True)            # (NB, C, H, 1)
    sW2 = jnp.sum(x2, axis=3, keepdims=True)
    sC = jnp.sum(x, axis=1, keepdims=True)            # (NB, 1, H, W)
    sC2 = jnp.sum(x2, axis=1, keepdims=True)

    def uvar(s1, s2, n):                              # (sum(x^2) - sum(x)^2/n)/(n-1)
        return (s2 - s1 * s1 * (1.0 / n)) * (1.0 / (n - 1.0))

    var_c = uvar(jnp.sum(sW, axis=2, keepdims=True),
                 jnp.sum(sW2, axis=2, keepdims=True), H * W)   # (NB, C, 1, 1)
    var_h = uvar(jnp.sum(sW, axis=1, keepdims=True),
                 jnp.sum(sW2, axis=1, keepdims=True), C * W)   # (NB, 1, H, 1)
    var_w = uvar(jnp.sum(sC, axis=2, keepdims=True),
                 jnp.sum(sC2, axis=2, keepdims=True), C * H)   # (NB, 1, 1, W)

    # ---- three 3x3 SAME convs as shifted slices of the one padded scratch ------
    # branch c: taps shift (h, w); branch h: (c, w); branch w: (c, h).
    # Centre tap (offset (1,1,1)) is x itself for all three; the other slices are
    # de-duplicated across branches via a trace-time cache (19 distinct loads).
    taps = {(1, 1, 1): x}

    def tap(dc, dh, dw):
        key = (dc, dh, dw)
        if key not in taps:
            taps[key] = xp_ref[:, dc:dc + C, dh:dh + H, dw:dw + W]
        return taps[key]

    acc_c = p_ref[4] * x                               # centre-tap init (k = 3*1+1)
    acc_h = p_ref[14] * x
    acc_w = p_ref[24] * x
    for di in range(3):
        for dj in range(3):
            if di == 1 and dj == 1:
                continue
            k = 3 * di + dj
            acc_c = acc_c + p_ref[k] * tap(1, di, dj)
            acc_h = acc_h + p_ref[10 + k] * tap(di, 1, dj)
            acc_w = acc_w + p_ref[20 + k] * tap(dj, di, 1)
    xc = var_c * acc_c + p_ref[9]
    xh = var_h * acc_h + p_ref[19]
    xw = var_w * acc_w + p_ref[29]

    # ---- Attention(3 -> 1 -> 1) + softmax over C, gate, 1/3 combine ------------
    # All per-branch-invariant broadcasts are hoisted out of the 3 gated() calls.
    lane = lax.broadcasted_iota(jnp.int32, (1, 1, 1, W), 3)
    w1v = jnp.where(lane == 0, p_ref[30],
                    jnp.where(lane == 1, p_ref[31], p_ref[32]))   # fc weights (..,3)
    b1v = jnp.zeros((NB, C, H, 1), jnp.float32) + p_ref[33]
    w2 = p_ref[34]
    b2v = jnp.zeros((NB, C, H, 1), jnp.float32) + p_ref[35]

    def gated_third(t):                                # t * softmax_C(att(t)) / 3
        logit = jnp.sum(t * w1v, axis=3, keepdims=True) + b1v     # fc1: reduce over W
        z = jnp.maximum(logit, 0.0) * w2 + b2v                    # relu + fc2
        z = z - jnp.max(z, axis=1, keepdims=True)                 # softmax over C
        e = jnp.exp(z)
        d3 = 3.0 * jnp.sum(e, axis=1, keepdims=True)              # fold 1/3 combine
        inv = pl.reciprocal(d3, approx=True)                      # EUP slot
        inv = inv * (2.0 - d3 * inv)                              # Newton -> f32-exact
        return t * (e * inv)

    o_ref[...] = (gated_third(xc) + gated_third(xh) + gated_third(xw)).astype(o_ref.dtype)


# ----------------------------------------------------------------------------- #
# Wrapper: ONLY the pallas_call (no per-call pad / concat dispatches)
# ----------------------------------------------------------------------------- #
def pack_params(params):
    """Pack the 36 scalar parameters once, outside the per-call path."""
    return jnp.concatenate([
        params["c_hw_w"].reshape(-1), params["c_hw_b"],
        params["h_cw_w"].reshape(-1), params["h_cw_b"],
        params["w_hc_w"].reshape(-1), params["w_hc_b"],
        params["att_w1"].reshape(-1), params["att_b1"],
        params["att_w2"].reshape(-1), params["att_b2"],
    ]).astype(jnp.float32)


def _default_grid_blocks(n):
    # v7x is the only target with 2 TensorCores per chip: split the batch 2-way so
    # both cores work.  Single-TC chips (v5e/v6e): one grid step over the whole
    # batch, removing the ~0.35us-per-step grid overhead.
    try:
        kind = jax.devices()[0].device_kind.lower()
    except Exception:
        kind = ""
    if ("v7" in kind or "7x" in kind) and n % 2 == 0:
        return 2
    return 1


def mca_layer(x, packed_params, *, grid_blocks=None):
    N, C, H, W = x.shape
    assert W == 3, "Attention(3, 1) in the module requires last dim == 3"
    if grid_blocks is None:
        grid_blocks = _default_grid_blocks(N)
    assert N % grid_blocks == 0
    NB = N // grid_blocks

    return pl.pallas_call(
        _mca_fused_kernel,
        out_shape=jax.ShapeDtypeStruct((N, C, H, W), jnp.float32),
        grid=(grid_blocks,),
        in_specs=[
            pl.BlockSpec((NB, C, H, W), lambda n: (n, 0, 0, 0)),
            pl.BlockSpec(memory_space=pltpu.MemorySpace.SMEM),
        ],
        out_specs=pl.BlockSpec((NB, C, H, W), lambda n: (n, 0, 0, 0)),
        scratch_shapes=[pltpu.VMEM((NB, C + 2, H + 2, W + 2), jnp.float32)],
        compiler_params=pltpu.CompilerParams(dimension_semantics=("parallel",)),
    )(x.astype(jnp.float32), packed_params)


# ----------------------------------------------------------------------------- #
# Deterministic parameter init (matches PyTorch kaiming_uniform(a=sqrt(5)) bounds)
# ----------------------------------------------------------------------------- #
def init_params(key):
    ks = jax.random.split(key, 10)

    def u(k, shape, bound):
        return jax.random.uniform(k, shape, jnp.float32, -bound, bound)

    cb = 1.0 / math.sqrt(1 * 3 * 3)          # conv fan_in = in_ch * k * k = 9
    lb1 = 1.0 / math.sqrt(3.0)                # Linear(3, 1)
    lb2 = 1.0                                 # Linear(1, 1)
    return dict(
        h_cw_w=u(ks[0], (3, 3), cb), h_cw_b=u(ks[1], (1,), cb),
        w_hc_w=u(ks[2], (3, 3), cb), w_hc_b=u(ks[3], (1,), cb),
        c_hw_w=u(ks[4], (3, 3), cb), c_hw_b=u(ks[5], (1,), cb),
        att_w1=u(ks[6], (1, 3), lb1), att_b1=u(ks[7], (1,), lb1),
        att_w2=u(ks[8], (1, 1), lb2), att_b2=u(ks[9], (1,), lb2),
    )


# ----------------------------------------------------------------------------- #
# Pure-JAX reference (same semantics) for correctness check
# ----------------------------------------------------------------------------- #
def reference(x, params):
    N, C, H, W = x.shape

    def dyn_conv(slices, w, b):
        B, Hc, Wc = slices.shape
        mean = slices.mean(axis=(1, 2), keepdims=True)
        var = ((slices - mean) ** 2).sum(axis=(1, 2), keepdims=True) / (Hc * Wc - 1)
        xpad = jnp.pad(slices, ((0, 0), (1, 1), (1, 1)))
        out = jnp.zeros_like(slices)
        for di in range(3):
            for dj in range(3):
                out = out + w[di, dj] * xpad[:, di:di + Hc, dj:dj + Wc]
        return var * out + b[0]

    xh = jnp.transpose(x, (0, 2, 1, 3)).reshape(N * H, C, W)
    xh = jnp.transpose(dyn_conv(xh, params["h_cw_w"], params["h_cw_b"])
                       .reshape(N, H, C, W), (0, 2, 1, 3))
    xw = jnp.transpose(x, (0, 3, 2, 1)).reshape(N * W, H, C)
    xw = jnp.transpose(dyn_conv(xw, params["w_hc_w"], params["w_hc_b"])
                       .reshape(N, W, H, C), (0, 3, 2, 1))
    xc = dyn_conv(x.reshape(N * C, H, W),
                  params["c_hw_w"], params["c_hw_b"]).reshape(N, C, H, W)

    def attn(t):
        logit = jnp.einsum("nchw,ow->ncho", t, params["att_w1"]) + params["att_b1"][0]
        h = jnp.maximum(logit, 0.0)
        z = h * params["att_w2"][0, 0] + params["att_b2"][0]
        z = z - z.max(axis=1, keepdims=True)
        e = jnp.exp(z)
        return e / e.sum(axis=1, keepdims=True)

    return (xc * attn(xc) + xh * attn(xh) + xw * attn(xw)) / 3.0


if __name__ == "__main__":
    key = jax.random.PRNGKey(0)
    kx, kp = jax.random.split(key)

    N, C, H, W = 2, 8, 16, 3          # W=3 to match Attention(input_size=3)
    # MCALayer.__init__ kernel formula for inp=C:
    temp = round(abs((math.log2(C) - 1) / 1.5))
    kern = temp if temp % 2 else temp - 1
    assert kern == 1, "c_hw branch implemented for in_channels == 1 (holds for C=8)"

    x = jax.random.normal(kx, (N, C, H, W), jnp.float32)
    params = init_params(kp)
    p = pack_params(params)            # packed ONCE, outside the jitted per-call path

    fwd = jax.jit(mca_layer)
    out = jax.block_until_ready(fwd(x, p))
    ref = reference(x, params)

    assert out.shape == (N, C, H, W)
    assert jnp.allclose(out, ref, rtol=1e-4, atol=1e-5), float(jnp.max(jnp.abs(out - ref)))
    print("KERNEL_OK")
</pallas_src>

<mosaic_0001>
module attributes {stable_mosaic.version = 11 : i64} {
  func.func @_mca_fused_kernel(%arg0: i32, %arg1: memref<2x8x16x3xf32, #tpu.memory_space<vmem>>, %arg2: memref<36xf32, #tpu.memory_space<smem>>, %arg3: memref<2x8x16x3xf32, #tpu.memory_space<vmem>>, %arg4: memref<2x10x18x5xf32, #tpu.memory_space<vmem>>) attributes {dimension_semantics = [#tpu.dimension_semantics<parallel>], iteration_bounds = array<i64: 1>, scalar_prefetch = 0 : i64, scratch_operands = 1 : i64, tpu.core_type = #tpu.core_type<tc>, window_params = [{transform_indices = @transform_0, window_bounds = array<i64: 2, 8, 16, 3>}, {transform_indices = @transform_1, window_bounds = array<i64: 36>}, {transform_indices = @transform_2, window_bounds = array<i64: 2, 8, 16, 3>}]} {
    %c0 = arith.constant 0 : index
    %c0_0 = arith.constant 0 : index
    %c0_1 = arith.constant 0 : index
    %c0_2 = arith.constant 0 : index
    %0 = vector.load %arg1[%c0, %c0_0, %c0_1, %c0_2] : memref<2x8x16x3xf32, #tpu.memory_space<vmem>>, vector<2x8x16x3xf32>
    %cst = arith.constant 0.000000e+00 : f32
    %1 = vector.broadcast %cst : f32 to vector<2x10x18x5xf32>
    %c0_3 = arith.constant 0 : index
    %c0_4 = arith.constant 0 : index
    %c0_5 = arith.constant 0 : index
    %c0_6 = arith.constant 0 : index
    %2 = vector.load %arg4[%c0_3, %c0_4, %c0_5, %c0_6] : memref<2x10x18x5xf32, #tpu.memory_space<vmem>>, vector<2x10x18x5xf32>
    tpu.vector_store %arg4[%c0_3, %c0_4, %c0_5, %c0_6], %1 {strides = array<i32>} : memref<2x10x18x5xf32, #tpu.memory_space<vmem>>, vector<2x10x18x5xf32>,
    %c0_7 = arith.constant 0 : index
    %c1 = arith.constant 1 : index
    %c1_8 = arith.constant 1 : index
    %c1_9 = arith.constant 1 : index
    %3 = vector.load %arg4[%c0_7, %c1, %c1_8, %c1_9] : memref<2x10x18x5xf32, #tpu.memory_space<vmem>>, vector<2x8x16x3xf32>
    tpu.vector_store %arg4[%c0_7, %c1, %c1_8, %c1_9], %0 {strides = array<i32>} : memref<2x10x18x5xf32, #tpu.memory_space<vmem>>, vector<2x8x16x3xf32>,
    %4 = arith.mulf %0, %0 : vector<2x8x16x3xf32>
    %cst_10 = arith.constant dense<0.000000e+00> : vector<2x8x16xf32>
    %5 = vector.multi_reduction <add>, %0, %cst_10 [3] : vector<2x8x16x3xf32> to vector<2x8x16xf32>
    %6 = vector.shape_cast %5 : vector<2x8x16xf32> to vector<2x8x16x1xf32>
    %cst_11 = arith.constant dense<0.000000e+00> : vector<2x8x16xf32>
    %7 = vector.multi_reduction <add>, %4, %cst_11 [3] : vector<2x8x16x3xf32> to vector<2x8x16xf32>
    %8 = vector.shape_cast %7 : vector<2x8x16xf32> to vector<2x8x16x1xf32>
    %cst_12 = arith.constant dense<0.000000e+00> : vector<2x16x3xf32>
    %9 = vector.multi_reduction <add>, %0, %cst_12 [1] : vector<2x8x16x3xf32> to vector<2x16x3xf32>
    %10 = vector.shape_cast %9 : vector<2x16x3xf32> to vector<2x1x16x3xf32>
    %cst_13 = arith.constant dense<0.000000e+00> : vector<2x16x3xf32>
    %11 = vector.multi_reduction <add>, %4, %cst_13 [1] : vector<2x8x16x3xf32> to vector<2x16x3xf32>
    %12 = vector.shape_cast %11 : vector<2x16x3xf32> to vector<2x1x16x3xf32>
    %cst_14 = arith.constant dense<0.000000e+00> : vector<2x8x1xf32>
    %13 = vector.multi_reduction <add>, %6, %cst_14 [2] : vector<2x8x16x1xf32> to vector<2x8x1xf32>
    %14 = vector.shape_cast %13 : vector<2x8x1xf32> to vector<2x8x1x1xf32>
    %cst_15 = arith.constant dense<0.000000e+00> : vector<2x8x1xf32>
    %15 = vector.multi_reduction <add>, %8, %cst_15 [2] : vector<2x8x16x1xf32> to vector<2x8x1xf32>
    %16 = vector.shape_cast %15 : vector<2x8x1xf32> to vector<2x8x1x1xf32>
    %17 = arith.mulf %14, %14 : vector<2x8x1x1xf32>
    %cst_16 = arith.constant 0.020833334 : f32
    %18 = vector.broadcast %cst_16 : f32 to vector<2x8x1x1xf32>
    %19 = arith.mulf %17, %18 : vector<2x8x1x1xf32>
    %20 = arith.subf %16, %19 : vector<2x8x1x1xf32>
    %cst_17 = arith.constant 0.0212765951 : f32
    %21 = vector.broadcast %cst_17 : f32 to vector<2x8x1x1xf32>
    %22 = arith.mulf %20, %21 : vector<2x8x1x1xf32>
    %cst_18 = arith.constant dense<0.000000e+00> : vector<2x16x1xf32>
    %23 = vector.multi_reduction <add>, %6, %cst_18 [1] : vector<2x8x16x1xf32> to vector<2x16x1xf32>
    %24 = vector.shape_cast %23 : vector<2x16x1xf32> to vector<2x1x16x1xf32>
    %cst_19 = arith.constant dense<0.000000e+00> : vector<2x16x1xf32>
    %25 = vector.multi_reduction <add>, %8, %cst_19 [1] : vector<2x8x16x1xf32> to vector<2x16x1xf32>
    %26 = vector.shape_cast %25 : vector<2x16x1xf32> to vector<2x1x16x1xf32>
    %27 = arith.mulf %24, %24 : vector<2x1x16x1xf32>
    %cst_20 = arith.constant 0.0416666679 : f32
    %28 = vector.broadcast %cst_20 : f32 to vector<2x1x16x1xf32>
    %29 = arith.mulf %27, %28 : vector<2x1x16x1xf32>
    %30 = arith.subf %26, %29 : vector<2x1x16x1xf32>
    %cst_21 = arith.constant 0.0434782617 : f32
    %31 = vector.broadcast %cst_21 : f32 to vector<2x1x16x1xf32>
    %32 = arith.mulf %30, %31 : vector<2x1x16x1xf32>
    %cst_22 = arith.constant dense<0.000000e+00> : vector<2x1x3xf32>
    %33 = vector.multi_reduction <add>, %10, %cst_22 [2] : vector<2x1x16x3xf32> to vector<2x1x3xf32>
    %34 = vector.shape_cast %33 : vector<2x1x3xf32> to vector<2x1x1x3xf32>
    %cst_23 = arith.constant dense<0.000000e+00> : vector<2x1x3xf32>
    %35 = vector.multi_reduction <add>, %12, %cst_23 [2] : vector<2x1x16x3xf32> to vector<2x1x3xf32>
    %36 = vector.shape_cast %35 : vector<2x1x3xf32> to vector<2x1x1x3xf32>
    %37 = arith.mulf %34, %34 : vector<2x1x1x3xf32>
    %cst_24 = arith.constant 7.812500e-03 : f32
    %38 = vector.broadcast %cst_24 : f32 to vector<2x1x1x3xf32>
    %39 = arith.mulf %37, %38 : vector<2x1x1x3xf32>
    %40 = arith.subf %36, %39 : vector<2x1x1x3xf32>
    %cst_25 = arith.constant 0.00787401571 : f32
    %41 = vector.broadcast %cst_25 : f32 to vector<2x1x1x3xf32>
    %42 = arith.mulf %40, %41 : vector<2x1x1x3xf32>
    %c4 = arith.constant 4 : index
    %43 = memref.load %arg2[%c4] : memref<36xf32, #tpu.memory_space<smem>>
    %44 = vector.broadcast %43 : f32 to vector<2x8x16x3xf32>
    %45 = arith.mulf %44, %0 : vector<2x8x16x3xf32>
    %c14 = arith.constant 14 : index
    %46 = memref.load %arg2[%c14] : memref<36xf32, #tpu.memory_space<smem>>
    %47 = vector.broadcast %46 : f32 to vector<2x8x16x3xf32>
    %48 = arith.mulf %47, %0 : vector<2x8x16x3xf32>
    %c24 = arith.constant 24 : index
    %49 = memref.load %arg2[%c24] : memref<36xf32, #tpu.memory_space<smem>>
    %50 = vector.broadcast %49 : f32 to vector<2x8x16x3xf32>
    %51 = arith.mulf %50, %0 : vector<2x8x16x3xf32>
    %c0_26 = arith.constant 0 : index
    %52 = memref.load %arg2[%c0_26] : memref<36xf32, #tpu.memory_space<smem>>
    %c0_27 = arith.constant 0 : index
    %c1_28 = arith.constant 1 : index
    %c0_29 = arith.constant 0 : index
    %c0_30 = arith.constant 0 : index
    %53 = vector.load %arg4[%c0_27, %c1_28, %c0_29, %c0_30] : memref<2x10x18x5xf32, #tpu.memory_space<vmem>>, vector<2x8x16x3xf32>
    %54 = vector.broadcast %52 : f32 to vector<2x8x16x3xf32>
    %55 = arith.mulf %54, %53 : vector<2x8x16x3xf32>
    %56 = arith.addf %45, %55 : vector<2x8x16x3xf32>
    %c10 = arith.constant 10 : index
    %57 = memref.load %arg2[%c10] : memref<36xf32, #tpu.memory_space<smem>>
    %c0_31 = arith.constant 0 : index
    %c0_32 = arith.constant 0 : index
    %c1_33 = arith.constant 1 : index
    %c0_34 = arith.constant 0 : index
    %58 = vector.load %arg4[%c0_31, %c0_32, %c1_33, %c0_34] : memref<2x10x18x5xf32, #tpu.memory_space<vmem>>, vector<2x8x16x3xf32>
    %59 = vector.broadcast %57 : f32 to vector<2x8x16x3xf32>
    %60 = arith.mulf %59, %58 : vector<2x8x16x3xf32>
    %61 = arith.addf %48, %60 : vector<2x8x16x3xf32>
    %c20 = arith.constant 20 : index
    %62 = memref.load %arg2[%c20] : memref<36xf32, #tpu.memory_space<smem>>
    %c0_35 = arith.constant 0 : index
    %c0_36 = arith.constant 0 : index
    %c0_37 = arith.constant 0 : index
    %c1_38 = arith.constant 1 : index
    %63 = vector.load %arg4[%c0_35, %c0_36, %c0_37, %c1_38] : memref<2x10x18x5xf32, #tpu.memory_space<vmem>>, vector<2x8x16x3xf32>
    %64 = vector.broadcast %62 : f32 to vector<2x8x16x3xf32>
    %65 = arith.mulf %64, %63 : vector<2x8x16x3xf32>
    %66 = arith.addf %51, %65 : vector<2x8x16x3xf32>
    %c1_39 = arith.constant 1 : index
    %67 = memref.load %arg2[%c1_39] : memref<36xf32, #tpu.memory_space<smem>>
    %c0_40 = arith.constant 0 : index
    %c1_41 = arith.constant 1 : index
    %c0_42 = arith.constant 0 : index
    %c1_43 = arith.constant 1 : index
    %68 = vector.load %arg4[%c0_40, %c1_41, %c0_42, %c1_43] : memref<2x10x18x5xf32, #tpu.memory_space<vmem>>, vector<2x8x16x3xf32>
    %69 = vector.broadcast %67 : f32 to vector<2x8x16x3xf32>
    %70 = arith.mulf %69, %68 : vector<2x8x16x3xf32>
    %71 = arith.addf %56, %70 : vector<2x8x16x3xf32>
    %c11 = arith.constant 11 : index
    %72 = memref.load %arg2[%c11] : memref<36xf32, #tpu.memory_space<smem>>
    %c0_44 = arith.constant 0 : index
    %c0_45 = arith.constant 0 : index
    %c1_46 = arith.constant 1 : index
    %c1_47 = arith.constant 1 : index
    %73 = vector.load %arg4[%c0_44, %c0_45, %c1_46, %c1_47] : memref<2x10x18x5xf32, #tpu.memory_space<vmem>>, vector<2x8x16x3xf32>
    %74 = vector.broadcast %72 : f32 to vector<2x8x16x3xf32>
    %75 = arith.mulf %74, %73 : vector<2x8x16x3xf32>
    %76 = arith.addf %61, %75 : vector<2x8x16x3xf32>
    %c21 = arith.constant 21 : index
    %77 = memref.load %arg2[%c21] : memref<36xf32, #tpu.memory_space<smem>>
    %78 = vector.broadcast %77 : f32 to vector<2x8x16x3xf32>
    %79 = arith.mulf %78, %68 : vector<2x8x16x3xf32>
    %80 = arith.addf %66, %79 : vector<2x8x16x3xf32>
    %c2 = arith.constant 2 : index
    %81 = memref.load %arg2[%c2] : memref<36xf32, #tpu.memory_space<smem>>
    %c0_48 = arith.constant 0 : index
    %c1_49 = arith.constant 1 : index
    %c0_50 = arith.constant 0 : index
    %c2_51 = arith.constant 2 : index
    %82 = vector.load %arg4[%c0_48, %c1_49, %c0_50, %c2_51] : memref<2x10x18x5xf32, #tpu.memory_space<vmem>>, vector<2x8x16x3xf32>
    %83 = vector.broadcast %81 : f32 to vector<2x8x16x3xf32>
    %84 = arith.mulf %83, %82 : vector<2x8x16x3xf32>
    %85 = arith.addf %71, %84 : vector<2x8x16x3xf32>
    %c12 = arith.constant 12 : index
    %86 = memref.load %arg2[%c12] : memref<36xf32, #tpu.memory_space<smem>>
    %c0_52 = arith.constant 0 : index
    %c0_53 = arith.constant 0 : index
    %c1_54 = arith.constant 1 : index
    %c2_55 = arith.constant 2 : index
    %87 = vector.load %arg4[%c0_52, %c0_53, %c1_54, %c2_55] : memref<2x10x18x5xf32, #tpu.memory_space<vmem>>, vector<2x8x16x3xf32>
    %88 = vector.broadcast %86 : f32 to vector<2x8x16x3xf32>
    %89 = arith.mulf %88, %87 : vector<2x8x16x3xf32>
    %90 = arith.addf %76, %89 : vector<2x8x16x3xf32>
    %c22 = arith.constant 22 : index
    %91 = memref.load %arg2[%c22] : memref<36xf32, #tpu.memory_space<smem>>
    %c0_56 = arith.constant 0 : index
    %c2_57 = arith.constant 2 : index
    %c0_58 = arith.constant 0 : index
    %c1_59 = arith.constant 1 : index
    %92 = vector.load %arg4[%c0_56, %c2_57, %c0_58, %c1_59] : memref<2x10x18x5xf32, #tpu.memory_space<vmem>>, vector<2x8x16x3xf32>
    %93 = vector.broadcast %91 : f32 to vector<2x8x16x3xf32>
    %94 = arith.mulf %93, %92 : vector<2x8x16x3xf32>
    %95 = arith.addf %80, %94 : vector<2x8x16x3xf32>
    %c3 = arith.constant 3 : index
    %96 = memref.load %arg2[%c3] : memref<36xf32, #tpu.memory_space<smem>>
    %c0_60 = arith.constant 0 : index
    %c1_61 = arith.constant 1 : index
    %c1_62 = arith.constant 1 : index
    %c0_63 = arith.constant 0 : index
    %97 = vector.load %arg4[%c0_60, %c1_61, %c1_62, %c0_63] : memref<2x10x18x5xf32, #tpu.memory_space<vmem>>, vector<2x8x16x3xf32>
    %98 = vector.broadcast %96 : f32 to vector<2x8x16x3xf32>
    %99 = arith.mulf %98, %97 : vector<2x8x16x3xf32>
    %100 = arith.addf %85, %99 : vector<2x8x16x3xf32>
    %c13 = arith.constant 13 : index
    %101 = memref.load %arg2[%c13] : memref<36xf32, #tpu.memory_space<smem>>
    %102 = vector.broadcast %101 : f32 to vector<2x8x16x3xf32>
    %103 = arith.mulf %102, %97 : vector<2x8x16x3xf32>
    %104 = arith.addf %90, %103 : vector<2x8x16x3xf32>
    %c23 = arith.constant 23 : index
    %105 = memref.load %arg2[%c23] : memref<36xf32, #tpu.memory_space<smem>>
    %106 = vector.broadcast %105 : f32 to vector<2x8x16x3xf32>
    %107 = arith.mulf %106, %73 : vector<2x8x16x3xf32>
    %108 = arith.addf %95, %107 : vector<2x8x16x3xf32>
    %c5 = arith.constant 5 : index
    %109 = memref.load %arg2[%c5] : memref<36xf32, #tpu.memory_space<smem>>
    %c0_64 = arith.constant 0 : index
    %c1_65 = arith.constant 1 : index
    %c1_66 = arith.constant 1 : index
    %c2_67 = arith.constant 2 : index
    %110 = vector.load %arg4[%c0_64, %c1_65, %c1_66, %c2_67] : memref<2x10x18x5xf32, #tpu.memory_space<vmem>>, vector<2x8x16x3xf32>
    %111 = vector.broadcast %109 : f32 to vector<2x8x16x3xf32>
    %112 = arith.mulf %111, %110 : vector<2x8x16x3xf32>
    %113 = arith.addf %100, %112 : vector<2x8x16x3xf32>
    %c15 = arith.constant 15 : index
    %114 = memref.load %arg2[%c15] : memref<36xf32, #tpu.memory_space<smem>>
    %115 = vector.broadcast %114 : f32 to vector<2x8x16x3xf32>
    %116 = arith.mulf %115, %110 : vector<2x8x16x3xf32>
    %117 = arith.addf %104, %116 : vector<2x8x16x3xf32>
    %c25 = arith.constant 25 : index
    %118 = memref.load %arg2[%c25] : memref<36xf32, #tpu.memory_space<smem>>
    %c0_68 = arith.constant 0 : index
    %c2_69 = arith.constant 2 : index
    %c1_70 = arith.constant 1 : index
    %c1_71 = arith.constant 1 : index
    %119 = vector.load %arg4[%c0_68, %c2_69, %c1_70, %c1_71] : memref<2x10x18x5xf32, #tpu.memory_space<vmem>>, vector<2x8x16x3xf32>
    %120 = vector.broadcast %118 : f32 to vector<2x8x16x3xf32>
    %121 = arith.mulf %120, %119 : vector<2x8x16x3xf32>
    %122 = arith.addf %108, %121 : vector<2x8x16x3xf32>
    %c6 = arith.constant 6 : index
    %123 = memref.load %arg2[%c6] : memref<36xf32, #tpu.memory_space<smem>>
    %c0_72 = arith.constant 0 : index
    %c1_73 = arith.constant 1 : index
    %c2_74 = arith.constant 2 : index
    %c0_75 = arith.constant 0 : index
    %124 = vector.load %arg4[%c0_72, %c1_73, %c2_74, %c0_75] : memref<2x10x18x5xf32, #tpu.memory_space<vmem>>, vector<2x8x16x3xf32>
    %125 = vector.broadcast %123 : f32 to vector<2x8x16x3xf32>
    %126 = arith.mulf %125, %124 : vector<2x8x16x3xf32>
    %127 = arith.addf %113, %126 : vector<2x8x16x3xf32>
    %c16 = arith.constant 16 : index
    %128 = memref.load %arg2[%c16] : memref<36xf32, #tpu.memory_space<smem>>
    %c0_76 = arith.constant 0 : index
    %c2_77 = arith.constant 2 : index
    %c1_78 = arith.constant 1 : index
    %c0_79 = arith.constant 0 : index
    %129 = vector.load %arg4[%c0_76, %c2_77, %c1_78, %c0_79] : memref<2x10x18x5xf32, #tpu.memory_space<vmem>>, vector<2x8x16x3xf32>
    %130 = vector.broadcast %128 : f32 to vector<2x8x16x3xf32>
    %131 = arith.mulf %130, %129 : vector<2x8x16x3xf32>
    %132 = arith.addf %117, %131 : vector<2x8x16x3xf32>
    %c26 = arith.constant 26 : index
    %133 = memref.load %arg2[%c26] : memref<36xf32, #tpu.memory_space<smem>>
    %c0_80 = arith.constant 0 : index
    %c0_81 = arith.constant 0 : index
    %c2_82 = arith.constant 2 : index
    %c1_83 = arith.constant 1 : index
    %134 = vector.load %arg4[%c0_80, %c0_81, %c2_82, %c1_83] : memref<2x10x18x5xf32, #tpu.memory_space<vmem>>, vector<2x8x16x3xf32>
    %135 = vector.broadcast %133 : f32 to vector<2x8x16x3xf32>
    %136 = arith.mulf %135, %134 : vector<2x8x16x3xf32>
    %137 = arith.addf %122, %136 : vector<2x8x16x3xf32>
    %c7 = arith.constant 7 : index
    %138 = memref.load %arg2[%c7] : memref<36xf32, #tpu.memory_space<smem>>
    %c0_84 = arith.constant 0 : index
    %c1_85 = arith.constant 1 : index
    %c2_86 = arith.constant 2 : index
    %c1_87 = arith.constant 1 : index
    %139 = vector.load %arg4[%c0_84, %c1_85, %c2_86, %c1_87] : memref<2x10x18x5xf32, #tpu.memory_space<vmem>>, vector<2x8x16x3xf32>
    %140 = vector.broadcast %138 : f32 to vector<2x8x16x3xf32>
    %141 = arith.mulf %140, %139 : vector<2x8x16x3xf32>
    %142 = arith.addf %127, %141 : vector<2x8x16x3xf32>
    %c17 = arith.constant 17 : index
    %143 = memref.load %arg2[%c17] : memref<36xf32, #tpu.memory_space<smem>>
    %144 = vector.broadcast %143 : f32 to vector<2x8x16x3xf32>
    %145 = arith.mulf %144, %119 : vector<2x8x16x3xf32>
    %146 = arith.addf %132, %145 : vector<2x8x16x3xf32>
    %c27 = arith.constant 27 : index
    %147 = memref.load %arg2[%c27] : memref<36xf32, #tpu.memory_space<smem>>
    %148 = vector.broadcast %147 : f32 to vector<2x8x16x3xf32>
    %149 = arith.mulf %148, %139 : vector<2x8x16x3xf32>
    %150 = arith.addf %137, %149 : vector<2x8x16x3xf32>
    %c8 = arith.constant 8 : index
    %151 = memref.load %arg2[%c8] : memref<36xf32, #tpu.memory_space<smem>>
    %c0_88 = arith.constant 0 : index
    %c1_89 = arith.constant 1 : index
    %c2_90 = arith.constant 2 : index
    %c2_91 = arith.constant 2 : index
    %152 = vector.load %arg4[%c0_88, %c1_89, %c2_90, %c2_91] : memref<2x10x18x5xf32, #tpu.memory_space<vmem>>, vector<2x8x16x3xf32>
    %153 = vector.broadcast %151 : f32 to vector<2x8x16x3xf32>
    %154 = arith.mulf %153, %152 : vector<2x8x16x3xf32>
    %155 = arith.addf %142, %154 : vector<2x8x16x3xf32>
    %c18 = arith.constant 18 : index
    %156 = memref.load %arg2[%c18] : memref<36xf32, #tpu.memory_space<smem>>
    %c0_92 = arith.constant 0 : index
    %c2_93 = arith.constant 2 : index
    %c1_94 = arith.constant 1 : index
    %c2_95 = arith.constant 2 : index
    %157 = vector.load %arg4[%c0_92, %c2_93, %c1_94, %c2_95] : memref<2x10x18x5xf32, #tpu.memory_space<vmem>>, vector<2x8x16x3xf32>
    %158 = vector.broadcast %156 : f32 to vector<2x8x16x3xf32>
    %159 = arith.mulf %158, %157 : vector<2x8x16x3xf32>
    %160 = arith.addf %146, %159 : vector<2x8x16x3xf32>
    %c28 = arith.constant 28 : index
    %161 = memref.load %arg2[%c28] : memref<36xf32, #tpu.memory_space<smem>>
    %c0_96 = arith.constant 0 : index
    %c2_97 = arith.constant 2 : index
    %c2_98 = arith.constant 2 : index
    %c1_99 = arith.constant 1 : index
    %162 = vector.load %arg4[%c0_96, %c2_97, %c2_98, %c1_99] : memref<2x10x18x5xf32, #tpu.memory_space<vmem>>, vector<2x8x16x3xf32>
    %163 = vector.broadcast %161 : f32 to vector<2x8x16x3xf32>
    %164 = arith.mulf %163, %162 : vector<2x8x16x3xf32>
    %165 = arith.addf %150, %164 : vector<2x8x16x3xf32>
    %166 = vector.broadcast %22 : vector<2x8x1x1xf32> to vector<2x8x16x3xf32>
    %167 = arith.mulf %166, %155 : vector<2x8x16x3xf32>
    %c9 = arith.constant 9 : index
    %168 = memref.load %arg2[%c9] : memref<36xf32, #tpu.memory_space<smem>>
    %169 = vector.broadcast %168 : f32 to vector<2x8x16x3xf32>
    %170 = arith.addf %167, %169 : vector<2x8x16x3xf32>
    %171 = vector.broadcast %32 : vector<2x1x16x1xf32> to vector<2x8x16x3xf32>
    %172 = arith.mulf %171, %160 : vector<2x8x16x3xf32>
    %c19 = arith.constant 19 : index
    %173 = memref.load %arg2[%c19] : memref<36xf32, #tpu.memory_space<smem>>
    %174 = vector.broadcast %173 : f32 to vector<2x8x16x3xf32>
    %175 = arith.addf %172, %174 : vector<2x8x16x3xf32>
    %176 = vector.broadcast %42 : vector<2x1x1x3xf32> to vector<2x8x16x3xf32>
    %177 = arith.mulf %176, %165 : vector<2x8x16x3xf32>
    %c29 = arith.constant 29 : index
    %178 = memref.load %arg2[%c29] : memref<36xf32, #tpu.memory_space<smem>>
    %179 = vector.broadcast %178 : f32 to vector<2x8x16x3xf32>
    %180 = arith.addf %177, %179 : vector<2x8x16x3xf32>
    %181 = tpu.iota {dimensions = array<i32: 3>} : vector<1x1x1x3xi32>
    %c0_i32 = arith.constant 0 : i32
    %182 = vector.broadcast %c0_i32 : i32 to vector<1x1x1x3xi32>
    %183 = arith.cmpi eq, %181, %182 : vector<1x1x1x3xi32>
    %c30 = arith.constant 30 : index
    %184 = memref.load %arg2[%c30] : memref<36xf32, #tpu.memory_space<smem>>
    %c1_i32 = arith.constant 1 : i32
    %185 = vector.broadcast %c1_i32 : i32 to vector<1x1x1x3xi32>
    %186 = arith.cmpi eq, %181, %185 : vector<1x1x1x3xi32>
    %c31 = arith.constant 31 : index
    %187 = memref.load %arg2[%c31] : memref<36xf32, #tpu.memory_space<smem>>
    %c32 = arith.constant 32 : index
    %188 = memref.load %arg2[%c32] : memref<36xf32, #tpu.memory_space<smem>>
    %189 = vector.broadcast %187 : f32 to vector<1x1x1x3xf32>
    %190 = vector.broadcast %188 : f32 to vector<1x1x1x3xf32>
    %191 = arith.select %186, %189, %190 : vector<1x1x1x3xi1>, vector<1x1x1x3xf32>
    %192 = vector.broadcast %184 : f32 to vector<1x1x1x3xf32>
    %193 = arith.select %183, %192, %191 : vector<1x1x1x3xi1>, vector<1x1x1x3xf32>
    %cst_100 = arith.constant 0.000000e+00 : f32
    %194 = vector.broadcast %cst_100 : f32 to vector<2x8x16x1xf32>
    %c33 = arith.constant 33 : index
    %195 = memref.load %arg2[%c33] : memref<36xf32, #tpu.memory_space<smem>>
    %196 = vector.broadcast %195 : f32 to vector<2x8x16x1xf32>
    %197 = arith.addf %194, %196 : vector<2x8x16x1xf32>
    %c34 = arith.constant 34 : index
    %198 = memref.load %arg2[%c34] : memref<36xf32, #tpu.memory_space<smem>>
    %cst_101 = arith.constant 0.000000e+00 : f32
    %199 = vector.broadcast %cst_101 : f32 to vector<2x8x16x1xf32>
    %c35 = arith.constant 35 : index
    %200 = memref.load %arg2[%c35] : memref<36xf32, #tpu.memory_space<smem>>
    %201 = vector.broadcast %200 : f32 to vector<2x8x16x1xf32>
    %202 = arith.addf %199, %201 : vector<2x8x16x1xf32>
    %203 = vector.broadcast %193 : vector<1x1x1x3xf32> to vector<2x8x16x3xf32>
    %204 = arith.mulf %170, %203 : vector<2x8x16x3xf32>
    %cst_102 = arith.constant dense<0.000000e+00> : vector<2x8x16xf32>
    %205 = vector.multi_reduction <add>, %204, %cst_102 [3] : vector<2x8x16x3xf32> to vector<2x8x16xf32>
    %206 = vector.shape_cast %205 : vector<2x8x16xf32> to vector<2x8x16x1xf32>
    %207 = arith.addf %206, %197 : vector<2x8x16x1xf32>
    %cst_103 = arith.constant 0.000000e+00 : f32
    %208 = vector.broadcast %cst_103 : f32 to vector<2x8x16x1xf32>
    %209 = arith.maximumf %207, %208 : vector<2x8x16x1xf32>
    %210 = vector.broadcast %198 : f32 to vector<2x8x16x1xf32>
    %211 = arith.mulf %209, %210 : vector<2x8x16x1xf32>
    %212 = arith.addf %211, %202 : vector<2x8x16x1xf32>
    %cst_104 = arith.constant dense<0xFF800000> : vector<2x16x1xf32>
    %213 = vector.multi_reduction <maximumf>, %212, %cst_104 [1] : vector<2x8x16x1xf32> to vector<2x16x1xf32>
    %214 = vector.shape_cast %213 : vector<2x16x1xf32> to vector<2x1x16x1xf32>
    %215 = vector.broadcast %214 : vector<2x1x16x1xf32> to vector<2x8x16x1xf32>
    %216 = arith.subf %212, %215 : vector<2x8x16x1xf32>
    %217 = math.exp %216 : vector<2x8x16x1xf32>
    %cst_105 = arith.constant dense<0.000000e+00> : vector<2x16x1xf32>
    %218 = vector.multi_reduction <add>, %217, %cst_105 [1] : vector<2x8x16x1xf32> to vector<2x16x1xf32>
    %219 = vector.shape_cast %218 : vector<2x16x1xf32> to vector<2x1x16x1xf32>
    %cst_106 = arith.constant 3.000000e+00 : f32
    %220 = vector.broadcast %cst_106 : f32 to vector<2x1x16x1xf32>
    %221 = arith.mulf %220, %219 : vector<2x1x16x1xf32>
    %222 = tpu.reciprocal %221 {approx = true} : vector<2x1x16x1xf32> -> vector<2x1x16x1xf32>
    %223 = arith.mulf %221, %222 : vector<2x1x16x1xf32>
    %cst_107 = arith.constant 2.000000e+00 : f32
    %224 = vector.broadcast %cst_107 : f32 to vector<2x1x16x1xf32>
    %225 = arith.subf %224, %223 : vector<2x1x16x1xf32>
    %226 = arith.mulf %222, %225 : vector<2x1x16x1xf32>
    %227 = vector.broadcast %226 : vector<2x1x16x1xf32> to vector<2x8x16x1xf32>
    %228 = arith.mulf %217, %227 : vector<2x8x16x1xf32>
    %229 = vector.broadcast %228 : vector<2x8x16x1xf32> to vector<2x8x16x3xf32>
    %230 = arith.mulf %170, %229 : vector<2x8x16x3xf32>
    %231 = vector.broadcast %193 : vector<1x1x1x3xf32> to vector<2x8x16x3xf32>
    %232 = arith.mulf %175, %231 : vector<2x8x16x3xf32>
    %cst_108 = arith.constant dense<0.000000e+00> : vector<2x8x16xf32>
    %233 = vector.multi_reduction <add>, %232, %cst_108 [3] : vector<2x8x16x3xf32> to vector<2x8x16xf32>
    %234 = vector.shape_cast %233 : vector<2x8x16xf32> to vector<2x8x16x1xf32>
    %235 = arith.addf %234, %197 : vector<2x8x16x1xf32>
    %cst_109 = arith.constant 0.000000e+00 : f32
    %236 = vector.broadcast %cst_109 : f32 to vector<2x8x16x1xf32>
    %237 = arith.maximumf %235, %236 : vector<2x8x16x1xf32>
    %238 = vector.broadcast %198 : f32 to vector<2x8x16x1xf32>
    %239 = arith.mulf %237, %238 : vector<2x8x16x1xf32>
    %240 = arith.addf %239, %202 : vector<2x8x16x1xf32>
    %cst_110 = arith.constant dense<0xFF800000> : vector<2x16x1xf32>
    %241 = vector.multi_reduction <maximumf>, %240, %cst_110 [1] : vector<2x8x16x1xf32> to vector<2x16x1xf32>
    %242 = vector.shape_cast %241 : vector<2x16x1xf32> to vector<2x1x16x1xf32>
    %243 = vector.broadcast %242 : vector<2x1x16x1xf32> to vector<2x8x16x1xf32>
    %244 = arith.subf %240, %243 : vector<2x8x16x1xf32>
    %245 = math.exp %244 : vector<2x8x16x1xf32>
    %cst_111 = arith.constant dense<0.000000e+00> : vector<2x16x1xf32>
    %246 = vector.multi_reduction <add>, %245, %cst_111 [1] : vector<2x8x16x1xf32> to vector<2x16x1xf32>
    %247 = vector.shape_cast %246 : vector<2x16x1xf32> to vector<2x1x16x1xf32>
    %cst_112 = arith.constant 3.000000e+00 : f32
    %248 = vector.broadcast %cst_112 : f32 to vector<2x1x16x1xf32>
    %249 = arith.mulf %248, %247 : vector<2x1x16x1xf32>
    %250 = tpu.reciprocal %249 {approx = true} : vector<2x1x16x1xf32> -> vector<2x1x16x1xf32>
    %251 = arith.mulf %249, %250 : vector<2x1x16x1xf32>
    %cst_113 = arith.constant 2.000000e+00 : f32
    %252 = vector.broadcast %cst_113 : f32 to vector<2x1x16x1xf32>
    %253 = arith.subf %252, %251 : vector<2x1x16x1xf32>
    %254 = arith.mulf %250, %253 : vector<2x1x16x1xf32>
    %255 = vector.broadcast %254 : vector<2x1x16x1xf32> to vector<2x8x16x1xf32>
    %256 = arith.mulf %245, %255 : vector<2x8x16x1xf32>
    %257 = vector.broadcast %256 : vector<2x8x16x1xf32> to vector<2x8x16x3xf32>
    %258 = arith.mulf %175, %257 : vector<2x8x16x3xf32>
    %259 = arith.addf %230, %258 : vector<2x8x16x3xf32>
    %260 = vector.broadcast %193 : vector<1x1x1x3xf32> to vector<2x8x16x3xf32>
    %261 = arith.mulf %180, %260 : vector<2x8x16x3xf32>
    %cst_114 = arith.constant dense<0.000000e+00> : vector<2x8x16xf32>
    %262 = vector.multi_reduction <add>, %261, %cst_114 [3] : vector<2x8x16x3xf32> to vector<2x8x16xf32>
    %263 = vector.shape_cast %262 : vector<2x8x16xf32> to vector<2x8x16x1xf32>
    %264 = arith.addf %263, %197 : vector<2x8x16x1xf32>
    %cst_115 = arith.constant 0.000000e+00 : f32
    %265 = vector.broadcast %cst_115 : f32 to vector<2x8x16x1xf32>
    %266 = arith.maximumf %264, %265 : vector<2x8x16x1xf32>
    %267 = vector.broadcast %198 : f32 to vector<2x8x16x1xf32>
    %268 = arith.mulf %266, %267 : vector<2x8x16x1xf32>
    %269 = arith.addf %268, %202 : vector<2x8x16x1xf32>
    %cst_116 = arith.constant dense<0xFF800000> : vector<2x16x1xf32>
    %270 = vector.multi_reduction <maximumf>, %269, %cst_116 [1] : vector<2x8x16x1xf32> to vector<2x16x1xf32>
    %271 = vector.shape_cast %270 : vector<2x16x1xf32> to vector<2x1x16x1xf32>
    %272 = vector.broadcast %271 : vector<2x1x16x1xf32> to vector<2x8x16x1xf32>
    %273 = arith.subf %269, %272 : vector<2x8x16x1xf32>
    %274 = math.exp %273 : vector<2x8x16x1xf32>
    %cst_117 = arith.constant dense<0.000000e+00> : vector<2x16x1xf32>
    %275 = vector.multi_reduction <add>, %274, %cst_117 [1] : vector<2x8x16x1xf32> to vector<2x16x1xf32>
    %276 = vector.shape_cast %275 : vector<2x16x1xf32> to vector<2x1x16x1xf32>
    %cst_118 = arith.constant 3.000000e+00 : f32
    %277 = vector.broadcast %cst_118 : f32 to vector<2x1x16x1xf32>
    %278 = arith.mulf %277, %276 : vector<2x1x16x1xf32>
    %279 = tpu.reciprocal %278 {approx = true} : vector<2x1x16x1xf32> -> vector<2x1x16x1xf32>
    %280 = arith.mulf %278, %279 : vector<2x1x16x1xf32>
    %cst_119 = arith.constant 2.000000e+00 : f32
    %281 = vector.broadcast %cst_119 : f32 to vector<2x1x16x1xf32>
    %282 = arith.subf %281, %280 : vector<2x1x16x1xf32>
    %283 = arith.mulf %279, %282 : vector<2x1x16x1xf32>
    %284 = vector.broadcast %283 : vector<2x1x16x1xf32> to vector<2x8x16x1xf32>
    %285 = arith.mulf %274, %284 : vector<2x8x16x1xf32>
    %286 = vector.broadcast %285 : vector<2x8x16x1xf32> to vector<2x8x16x3xf32>
    %287 = arith.mulf %180, %286 : vector<2x8x16x3xf32>
    %288 = arith.addf %259, %287 : vector<2x8x16x3xf32>
    %c0_120 = arith.constant 0 : index
    %c0_121 = arith.constant 0 : index
    %c0_122 = arith.constant 0 : index
    %c0_123 = arith.constant 0 : index
    %289 = vector.load %arg3[%c0_120, %c0_121, %c0_122, %c0_123] : memref<2x8x16x3xf32, #tpu.memory_space<vmem>>, vector<2x8x16x3xf32>
    tpu.vector_store %arg3[%c0_120, %c0_121, %c0_122, %c0_123], %288 {strides = array<i32>} : memref<2x8x16x3xf32, #tpu.memory_space<vmem>>, vector<2x8x16x3xf32>,
    return
  }
  func.func @transform_0(%arg0: i32) -> (i32, i32, i32, i32) {
    %c0_i32 = arith.constant 0 : i32
    %c0_i32_0 = arith.constant 0 : i32
    %c0_i32_1 = arith.constant 0 : i32
    %c0_i32_2 = arith.constant 0 : i32
    return %arg0, %c0_i32, %c0_i32_0, %c0_i32_1 : i32, i32, i32, i32
  }
  func.func @transform_1(%arg0: i32) -> i32 {
    %c0_i32 = arith.constant 0 : i32
    %c0_i32_0 = arith.constant 0 : i32
    return %c0_i32 : i32
  }
  func.func @transform_2(%arg0: i32) -> (i32, i32, i32, i32) {
    %c0_i32 = arith.constant 0 : i32
    %c0_i32_0 = arith.constant 0 : i32
    %c0_i32_1 = arith.constant 0 : i32
    %c0_i32_2 = arith.constant 0 : i32
    return %arg0, %c0_i32, %c0_i32_0, %c0_i32_1 : i32, i32, i32, i32
  }
}

</mosaic_0001>

<llo_original>
// kernel: mca_layer.1
$region0: #{mca_layer.1}
  #allocation0 [shape = 'u32[]', space=smem, size = 0x4, offset = 0x4, fixed_abs, tag = 'smem constant byte address 0x4 - core index']
  #allocation1 [shape = 'u32[144,128]{1,0:T(1,128)}', space=vmem, size = 0x12000, scoped, tag = 'internal scratch']
  #allocation2 [shape = 'f32[2,10,18,5]{3,2,1,0:T(8,128)}', space=vmem, size = 0x3c000, scoped, tag = 'scratch operand']
  %s0 = inlined_call_operand.vmem [shape: f32[2,8,16,3], index: 0, kind: input, shape index: {}]
  %s1 = inlined_call_operand.vmem [shape: f32[36], index: 1, kind: input, shape index: {}]
  %s2 = inlined_call_operand.vmem [shape: f32[2,8,16,3], index: 2, kind: output, shape index: {}]
  %s3 = sld [smem:[#allocation0]]
  $region22: #{mca_layer.1} parent=0
    _
  %s5 = ssub.s32 1, %s3
  %s6 = scalar_select 0, %s5, %s3
  $region1: #{mca_layer.1} parent=0
    #allocation3 [shape = 'u8[512]{0}', space=smem, size = 0x200, scoped, tag = 'input window, operand 1, single buffered']
    #allocation4 [shape = 's32[1]{0}', space=sflag, size = 0x4, scoped, tag = 'scoped memory for mca_layer.1']
    %7 = vsyncpa [#allocation4], 0
    // Predicated region
    $region2: #{mca_layer.1} parent=1 // pred_check
      _
    $region3: #{mca_layer.1} parent=1 // pred_check_branch
      %9 = sbr.rel (0) target = $region5
    $region4: #{mca_layer.1} parent=1 // pred_region
      _
    $region5: #{mca_layer.1} parent=1 // pred_fallthru
      _
    // Predicated region
    $region6: #{mca_layer.1} parent=1 // pred_check
      _
    $region7: #{mca_layer.1} parent=1 // pred_check_branch
      %11 = sbr.rel (0) target = $region9
    $region8: #{mca_layer.1} parent=1 // pred_region
      %s13 = ssub.s32 16, 16
      %14 = vsyncadd [#allocation4], %s13
      %s16 = sshll.u32 %s1, 4
      %s17 = int_to_ptr.vmem [resolvable:$true] %s16
      %19 = dma.vmem_to_smem %s17, 16, [#allocation3], [#allocation4]
    $region9: #{mca_layer.1} parent=1 // pred_fallthru
      _
    // Predicated region
    $region10: #{mca_layer.1} parent=1 // pred_check
      _
    $region11: #{mca_layer.1} parent=1 // pred_check_branch
      %21 = sbr.rel (0) target = $region13
    $region12: #{mca_layer.1} parent=1 // pred_region
      %22 = dma.done [#allocation4], 16
    $region13: #{mca_layer.1} parent=1 // pred_fallthru
      _
    %23 = sfence
    %v24 = vld [vmem:[%s0] sm:$0xff]
    %v25 = vld [vmem:[%s0 + $0x8] sm:$0xff]
    %v26 = vld [vmem:[%s0 + $0x10] sm:$0xff]
    %v27 = vld [vmem:[%s0 + $0x18] sm:$0xff]
    %v28 = vld [vmem:[%s0 + $0x20] sm:$0xff]
    %v29 = vld [vmem:[%s0 + $0x28] sm:$0xff]
    %v30 = vld [vmem:[%s0 + $0x30] sm:$0xff]
    %v31 = vld [vmem:[%s0 + $0x38] sm:$0xff]
    %v32 = vld [vmem:[%s0 + $0x40] sm:$0xff]
    %v33 = vld [vmem:[%s0 + $0x48] sm:$0xff]
    %v34 = vld [vmem:[%s0 + $0x50] sm:$0xff]
    %v35 = vld [vmem:[%s0 + $0x58] sm:$0xff]
    %v36 = vld [vmem:[%s0 + $0x60] sm:$0xff]
    %v37 = vld [vmem:[%s0 + $0x68] sm:$0xff]
    %v38 = vld [vmem:[%s0 + $0x70] sm:$0xff]
    %v39 = vld [vmem:[%s0 + $0x78] sm:$0xff]
    %v40 = vld [vmem:[%s0 + $0x80] sm:$0xff]
    %v41 = vld [vmem:[%s0 + $0x88] sm:$0xff]
    %v42 = vld [vmem:[%s0 + $0x90] sm:$0xff]
    %v43 = vld [vmem:[%s0 + $0x98] sm:$0xff]
    %v44 = vld [vmem:[%s0 + $0xa0] sm:$0xff]
    %v45 = vld [vmem:[%s0 + $0xa8] sm:$0xff]
    %v46 = vld [vmem:[%s0 + $0xb0] sm:$0xff]
    %v47 = vld [vmem:[%s0 + $0xb8] sm:$0xff]
    %v48 = vld [vmem:[%s0 + $0xc0] sm:$0xff]
    %v49 = vld [vmem:[%s0 + $0xc8] sm:$0xff]
    %v50 = vld [vmem:[%s0 + $0xd0] sm:$0xff]
    %v51 = vld [vmem:[%s0 + $0xd8] sm:$0xff]
    %v52 = vld [vmem:[%s0 + $0xe0] sm:$0xff]
    %v53 = vld [vmem:[%s0 + $0xe8] sm:$0xff]
    %v54 = vld [vmem:[%s0 + $0xf0] sm:$0xff]
    %v55 = vld [vmem:[%s0 + $0xf8] sm:$0xff]
    %vm56 = vcmask 39936
    %57 = vst.msk [vmem:[#allocation2] sm:$0xff] %vm56, 0.0
    %58 = vst.msk [vmem:[#allocation2 + $0x8] sm:$0xff] %vm56, 0.0
    %vm59 = vcmask 33792
    %60 = vst.msk [vmem:[#allocation2 + $0x10] sm:$0x3] %vm59, 0.0
    %61 = vst.msk [vmem:[#allocation2 + $0x18] sm:$0xff] %vm56, 0.0
    %62 = vst.msk [vmem:[#allocation2 + $0x20] sm:$0xff] %vm56, 0.0
    %63 = vst.msk [vmem:[#allocation2 + $0x28] sm:$0x3] %vm59, 0.0
    %64 = vst.msk [vmem:[#allocation2 + $0x30] sm:$0xff] %vm56, 0.0
    %65 = vst.msk [vmem:[#allocation2 + $0x38] sm:$0xff] %vm56, 0.0
    %66 = vst.msk [vmem:[#allocation2 + $0x40] sm:$0x3] %vm59, 0.0
    %67 = vst.msk [vmem:[#allocation2 + $0x48] sm:$0xff] %vm56, 0.0
    %68 = vst.msk [vmem:[#allocation2 + $0x50] sm:$0xff] %vm56, 0.0
    %69 = vst.msk [vmem:[#allocation2 + $0x58] sm:$0x3] %vm59, 0.0
    %70 = vst.msk [vmem:[#allocation2 + $0x60] sm:$0xff] %vm56, 0.0
    %71 = vst.msk [vmem:[#allocation2 + $0x68] sm:$0xff] %vm56, 0.0
    %72 = vst.msk [vmem:[#allocation2 + $0x70] sm:$0x3] %vm59, 0.0
    %73 = vst.msk [vmem:[#allocation2 + $0x78] sm:$0xff] %vm56, 0.0
    %74 = vst.msk [vmem:[#allocation2 + $0x80] sm:$0xff] %vm56, 0.0
    %75 = vst.msk [vmem:[#allocation2 + $0x88] sm:$0x3] %vm59, 0.0
    %76 = vst.msk [vmem:[#allocation2 + $0x90] sm:$0xff] %vm56, 0.0
    %77 = vst.msk [vmem:[#allocation2 + $0x98] sm:$0xff] %vm56, 0.0
    %78 = vst.msk [vmem:[#allocation2 + $0xa0] sm:$0x3] %vm59, 0.0
    %79 = vst.msk [vmem:[#allocation2 + $0xa8] sm:$0xff] %vm56, 0.0
    %80 = vst.msk [vmem:[#allocation2 + $0xb0] sm:$0xff] %vm56, 0.0
    %81 = vst.msk [vmem:[#allocation2 + $0xb8] sm:$0x3] %vm59, 0.0
    %82 = vst.msk [vmem:[#allocation2 + $0xc0] sm:$0xff] %vm56, 0.0
    %83 = vst.msk [vmem:[#allocation2 + $0xc8] sm:$0xff] %vm56, 0.0
    %84 = vst.msk [vmem:[#allocation2 + $0xd0] sm:$0x3] %vm59, 0.0
    %85 = vst.msk [vmem:[#allocation2 + $0xd8] sm:$0xff] %vm56, 0.0
    %86 = vst.msk [vmem:[#allocation2 + $0xe0] sm:$0xff] %vm56, 0.0
    %87 = vst.msk [vmem:[#allocation2 + $0xe8] sm:$0x3] %vm59, 0.0
    %88 = vst.msk [vmem:[#allocation2 + $0xf0] sm:$0xff] %vm56, 0.0
    %89 = vst.msk [vmem:[#allocation2 + $0xf8] sm:$0xff] %vm56, 0.0
    %90 = vst.msk [vmem:[#allocation2 + $0x100] sm:$0x3] %vm59, 0.0
    %91 = vst.msk [vmem:[#allocation2 + $0x108] sm:$0xff] %vm56, 0.0
    %92 = vst.msk [vmem:[#allocation2 + $0x110] sm:$0xff] %vm56, 0.0
    %93 = vst.msk [vmem:[#allocation2 + $0x118] sm:$0x3] %vm59, 0.0
    %94 = vst.msk [vmem:[#allocation2 + $0x120] sm:$0xff] %vm56, 0.0
    %95 = vst.msk [vmem:[#allocation2 + $0x128] sm:$0xff] %vm56, 0.0
    %96 = vst.msk [vmem:[#allocation2 + $0x130] sm:$0x3] %vm59, 0.0
    %97 = vst.msk [vmem:[#allocation2 + $0x138] sm:$0xff] %vm56, 0.0
    %98 = vst.msk [vmem:[#allocation2 + $0x140] sm:$0xff] %vm56, 0.0
    %99 = vst.msk [vmem:[#allocation2 + $0x148] sm:$0x3] %vm59, 0.0
    %100 = vst.msk [vmem:[#allocation2 + $0x150] sm:$0xff] %vm56, 0.0
    %101 = vst.msk [vmem:[#allocation2 + $0x158] sm:$0xff] %vm56, 0.0
    %102 = vst.msk [vmem:[#allocation2 + $0x160] sm:$0x3] %vm59, 0.0
    %103 = vst.msk [vmem:[#allocation2 + $0x168] sm:$0xff] %vm56, 0.0
    %104 = vst.msk [vmem:[#allocation2 + $0x170] sm:$0xff] %vm56, 0.0
    %105 = vst.msk [vmem:[#allocation2 + $0x178] sm:$0x3] %vm59, 0.0
    %106 = vst.msk [vmem:[#allocation2 + $0x180] sm:$0xff] %vm56, 0.0
    %107 = vst.msk [vmem:[#allocation2 + $0x188] sm:$0xff] %vm56, 0.0
    %108 = vst.msk [vmem:[#allocation2 + $0x190] sm:$0x3] %vm59, 0.0
    %109 = vst.msk [vmem:[#allocation2 + $0x198] sm:$0xff] %vm56, 0.0
    %110 = vst.msk [vmem:[#allocation2 + $0x1a0] sm:$0xff] %vm56, 0.0
    %111 = vst.msk [vmem:[#allocation2 + $0x1a8] sm:$0x3] %vm59, 0.0
    %112 = vst.msk [vmem:[#allocation2 + $0x1b0] sm:$0xff] %vm56, 0.0
    %113 = vst.msk [vmem:[#allocation2 + $0x1b8] sm:$0xff] %vm56, 0.0
    %114 = vst.msk [vmem:[#allocation2 + $0x1c0] sm:$0x3] %vm59, 0.0
    %115 = vst.msk [vmem:[#allocation2 + $0x1c8] sm:$0xff] %vm56, 0.0
    %116 = vst.msk [vmem:[#allocation2 + $0x1d0] sm:$0xff] %vm56, 0.0
    %117 = vst.msk [vmem:[#allocation2 + $0x1d8] sm:$0x3] %vm59, 0.0
    %150 = vrot.lane.b32.xlu0 %v24, 1
    %v151 = vpop.permute.xlu0 %150
    %152 = vrot.lane.b32.xlu0 %v25, 1
    %v153 = vpop.permute.xlu0 %152
    %154 = vrot.lane.b32.xlu0 %v26, 1
    %v155 = vpop.permute.xlu0 %154
    %156 = vrot.lane.b32.xlu0 %v27, 1
    %v157 = vpop.permute.xlu0 %156
    %158 = vrot.lane.b32.xlu0 %v28, 1
    %v159 = vpop.permute.xlu0 %158
    %160 = vrot.lane.b32.xlu0 %v29, 1
    %v161 = vpop.permute.xlu0 %160
    %162 = vrot.lane.b32.xlu0 %v30, 1
    %v163 = vpop.permute.xlu0 %162
    %164 = vrot.lane.b32.xlu0 %v31, 1
    %v165 = vpop.permute.xlu0 %164
    %166 = vrot.lane.b32.xlu0 %v32, 1
    %v167 = vpop.permute.xlu0 %166
    %168 = vrot.lane.b32.xlu0 %v33, 1
    %v169 = vpop.permute.xlu0 %168
    %170 = vrot.lane.b32.xlu0 %v34, 1
    %v171 = vpop.permute.xlu0 %170
    %172 = vrot.lane.b32.xlu0 %v35, 1
    %v173 = vpop.permute.xlu0 %172
    %174 = vrot.lane.b32.xlu0 %v36, 1
    %v175 = vpop.permute.xlu0 %174
    %176 = vrot.lane.b32.xlu0 %v37, 1
    %v177 = vpop.permute.xlu0 %176
    %178 = vrot.lane.b32.xlu0 %v38, 1
    %v179 = vpop.permute.xlu0 %178
    %180 = vrot.lane.b32.xlu0 %v39, 1
    %v181 = vpop.permute.xlu0 %180
    %182 = vrot.lane.b32.xlu0 %v40, 1
    %v183 = vpop.permute.xlu0 %182
    %184 = vrot.lane.b32.xlu0 %v41, 1
    %v185 = vpop.permute.xlu0 %184
    %186 = vrot.lane.b32.xlu0 %v42, 1
    %v187 = vpop.permute.xlu0 %186
    %188 = vrot.lane.b32.xlu0 %v43, 1
    %v189 = vpop.permute.xlu0 %188
    %190 = vrot.lane.b32.xlu0 %v44, 1
    %v191 = vpop.permute.xlu0 %190
    %192 = vrot.lane.b32.xlu0 %v45, 1
    %v193 = vpop.permute.xlu0 %192
    %194 = vrot.lane.b32.xlu0 %v46, 1
    %v195 = vpop.permute.xlu0 %194
    %196 = vrot.lane.b32.xlu0 %v47, 1
    %v197 = vpop.permute.xlu0 %196
    %198 = vrot.lane.b32.xlu0 %v48, 1
    %v199 = vpop.permute.xlu0 %198
    %200 = vrot.lane.b32.xlu0 %v49, 1
    %v201 = vpop.permute.xlu0 %200
    %202 = vrot.lane.b32.xlu0 %v50, 1
    %v203 = vpop.permute.xlu0 %202
    %204 = vrot.lane.b32.xlu0 %v51, 1
    %v205 = vpop.permute.xlu0 %204
    %206 = vrot.lane.b32.xlu0 %v52, 1
    %v207 = vpop.permute.xlu0 %206
    %208 = vrot.lane.b32.xlu0 %v53, 1
    %v209 = vpop.permute.xlu0 %208
    %210 = vrot.lane.b32.xlu0 %v54, 1
    %v211 = vpop.permute.xlu0 %210
    %212 = vrot.lane.b32.xlu0 %v55, 1
    %v213 = vpop.permute.xlu0 %212
    %s246 = scalar_lea.vmem [#allocation2], 24
    %vm247 = vcmask 31752
    %248 = vst.msk [vmem:[%s246 + $0x1] sm:$0xff] %vm247, %v151
    %249 = vst.msk [vmem:[%s246 + $0x9] sm:$0xff] %vm247, %v153
    %250 = vst.msk [vmem:[%s246 + $0x19] sm:$0xff] %vm247, %v155
    %251 = vst.msk [vmem:[%s246 + $0x21] sm:$0xff] %vm247, %v157
    %252 = vst.msk [vmem:[%s246 + $0x31] sm:$0xff] %vm247, %v159
    %253 = vst.msk [vmem:[%s246 + $0x39] sm:$0xff] %vm247, %v161
    %254 = vst.msk [vmem:[%s246 + $0x49] sm:$0xff] %vm247, %v163
    %255 = vst.msk [vmem:[%s246 + $0x51] sm:$0xff] %vm247, %v165
    %256 = vst.msk [vmem:[%s246 + $0x61] sm:$0xff] %vm247, %v167
    %257 = vst.msk [vmem:[%s246 + $0x69] sm:$0xff] %vm247, %v169
    %258 = vst.msk [vmem:[%s246 + $0x79] sm:$0xff] %vm247, %v171
    %259 = vst.msk [vmem:[%s246 + $0x81] sm:$0xff] %vm247, %v173
    %260 = vst.msk [vmem:[%s246 + $0x91] sm:$0xff] %vm247, %v175
    %261 = vst.msk [vmem:[%s246 + $0x99] sm:$0xff] %vm247, %v177
    %262 = vst.msk [vmem:[%s246 + $0xa9] sm:$0xff] %vm247, %v179
    %263 = vst.msk [vmem:[%s246 + $0xb1] sm:$0xff] %vm247, %v181
    %264 = vst.msk [vmem:[%s246 + $0xf1] sm:$0xff] %vm247, %v183
    %265 = vst.msk [vmem:[%s246 + $0xf9] sm:$0xff] %vm247, %v185
    %266 = vst.msk [vmem:[%s246 + $0x109] sm:$0xff] %vm247, %v187
    %267 = vst.msk [vmem:[%s246 + $0x111] sm:$0xff] %vm247, %v189
    %268 = vst.msk [vmem:[%s246 + $0x121] sm:$0xff] %vm247, %v191
    %269 = vst.msk [vmem:[%s246 + $0x129] sm:$0xff] %vm247, %v193
    %270 = vst.msk [vmem:[%s246 + $0x139] sm:$0xff] %vm247, %v195
    %271 = vst.msk [vmem:[%s246 + $0x141] sm:$0xff] %vm247, %v197
    %272 = vst.msk [vmem:[%s246 + $0x151] sm:$0xff] %vm247, %v199
    %273 = vst.msk [vmem:[%s246 + $0x159] sm:$0xff] %vm247, %v201
    %274 = vst.msk [vmem:[%s246 + $0x169] sm:$0xff] %vm247, %v203
    %275 = vst.msk [vmem:[%s246 + $0x171] sm:$0xff] %vm247, %v205
    %276 = vst.msk [vmem:[%s246 + $0x181] sm:$0xff] %vm247, %v207
    %277 = vst.msk [vmem:[%s246 + $0x189] sm:$0xff] %vm247, %v209
    %278 = vst.msk [vmem:[%s246 + $0x199] sm:$0xff] %vm247, %v211
    %279 = vst.msk [vmem:[%s246 + $0x1a1] sm:$0xff] %vm247, %v213
    %v280 = vmul.f32 %v24, %v24
    %v281 = vmul.f32 %v25, %v25
    %v282 = vmul.f32 %v26, %v26
    %v283 = vmul.f32 %v27, %v27
    %v284 = vmul.f32 %v28, %v28
    %v285 = vmul.f32 %v29, %v29
    %v286 = vmul.f32 %v30, %v30
    %v287 = vmul.f32 %v31, %v31
    %v288 = vmul.f32 %v32, %v32
    %v289 = vmul.f32 %v33, %v33
    %v290 = vmul.f32 %v34, %v34
    %v291 = vmul.f32 %v35, %v35
    %v292 = vmul.f32 %v36, %v36
    %v293 = vmul.f32 %v37, %v37
    %v294 = vmul.f32 %v38, %v38
    %v295 = vmul.f32 %v39, %v39
    %v296 = vmul.f32 %v40, %v40
    %v297 = vmul.f32 %v41, %v41
    %v298 = vmul.f32 %v42, %v42
    %v299 = vmul.f32 %v43, %v43
    %v300 = vmul.f32 %v44, %v44
    %v301 = vmul.f32 %v45, %v45
    %v302 = vmul.f32 %v46, %v46
    %v303 = vmul.f32 %v47, %v47
    %v304 = vmul.f32 %v48, %v48
    %v305 = vmul.f32 %v49, %v49
    %v306 = vmul.f32 %v50, %v50
    %v307 = vmul.f32 %v51, %v51
    %v308 = vmul.f32 %v52, %v52
    %v309 = vmul.f32 %v53, %v53
    %v310 = vmul.f32 %v54, %v54
    %v311 = vmul.f32 %v55, %v55
    %vm312 = vcmask 23552
    %v313 = vsel %vm312, %v24, 0.0
    %314 = vadd.xlane.f32.xlu0 %v313
    %v315 = vpop.xlane.xlu0 %314
    %v316 = vsel %vm312, %v25, 0.0
    %317 = vadd.xlane.f32.xlu0 %v316
    %v318 = vpop.xlane.xlu0 %317
    %v319 = vsel %vm312, %v26, 0.0
    %320 = vadd.xlane.f32.xlu0 %v319
    %v321 = vpop.xlane.xlu0 %320
    %v322 = vsel %vm312, %v27, 0.0
    %323 = vadd.xlane.f32.xlu0 %v322
    %v324 = vpop.xlane.xlu0 %323
    %v325 = vsel %vm312, %v28, 0.0
    %326 = vadd.xlane.f32.xlu0 %v325
    %v327 = vpop.xlane.xlu0 %326
    %v328 = vsel %vm312, %v29, 0.0
    %329 = vadd.xlane.f32.xlu0 %v328
    %v330 = vpop.xlane.xlu0 %329
    %v331 = vsel %vm312, %v30, 0.0
    %332 = vadd.xlane.f32.xlu0 %v331
    %v333 = vpop.xlane.xlu0 %332
    %v334 = vsel %vm312, %v31, 0.0
    %335 = vadd.xlane.f32.xlu0 %v334
    %v336 = vpop.xlane.xlu0 %335
    %v337 = vsel %vm312, %v32, 0.0
    %338 = vadd.xlane.f32.xlu0 %v337
    %v339 = vpop.xlane.xlu0 %338
    %v340 = vsel %vm312, %v33, 0.0
    %341 = vadd.xlane.f32.xlu0 %v340
    %v342 = vpop.xlane.xlu0 %341
    %v343 = vsel %vm312, %v34, 0.0
    %344 = vadd.xlane.f32.xlu0 %v343
    %v345 = vpop.xlane.xlu0 %344
    %v346 = vsel %vm312, %v35, 0.0
    %347 = vadd.xlane.f32.xlu0 %v346
    %v348 = vpop.xlane.xlu0 %347
    %v349 = vsel %vm312, %v36, 0.0
    %350 = vadd.xlane.f32.xlu0 %v349
    %v351 = vpop.xlane.xlu0 %350
    %v352 = vsel %vm312, %v37, 0.0
    %353 = vadd.xlane.f32.xlu0 %v352
    %v354 = vpop.xlane.xlu0 %353
    %v355 = vsel %vm312, %v38, 0.0
    %356 = vadd.xlane.f32.xlu0 %v355
    %v357 = vpop.xlane.xlu0 %356
    %v358 = vsel %vm312, %v39, 0.0
    %359 = vadd.xlane.f32.xlu0 %v358
    %v360 = vpop.xlane.xlu0 %359
    %v361 = vsel %vm312, %v40, 0.0
    %362 = vadd.xlane.f32.xlu0 %v361
    %v363 = vpop.xlane.xlu0 %362
    %v364 = vsel %vm312, %v41, 0.0
    %365 = vadd.xlane.f32.xlu0 %v364
    %v366 = vpop.xlane.xlu0 %365
    %v367 = vsel %vm312, %v42, 0.0
    %368 = vadd.xlane.f32.xlu0 %v367
    %v369 = vpop.xlane.xlu0 %368
    %v370 = vsel %vm312, %v43, 0.0
    %371 = vadd.xlane.f32.xlu0 %v370
    %v372 = vpop.xlane.xlu0 %371
    %v373 = vsel %vm312, %v44, 0.0
    %374 = vadd.xlane.f32.xlu0 %v373
    %v375 = vpop.xlane.xlu0 %374
    %v376 = vsel %vm312, %v45, 0.0
    %377 = vadd.xlane.f32.xlu0 %v376
    %v378 = vpop.xlane.xlu0 %377
    %v379 = vsel %vm312, %v46, 0.0
    %380 = vadd.xlane.f32.xlu0 %v379
    %v381 = vpop.xlane.xlu0 %380
    %v382 = vsel %vm312, %v47, 0.0
    %383 = vadd.xlane.f32.xlu0 %v382
    %v384 = vpop.xlane.xlu0 %383
    %v385 = vsel %vm312, %v48, 0.0
    %386 = vadd.xlane.f32.xlu0 %v385
    %v387 = vpop.xlane.xlu0 %386
    %v388 = vsel %vm312, %v49, 0.0
    %389 = vadd.xlane.f32.xlu0 %v388
    %v390 = vpop.xlane.xlu0 %389
    %v391 = vsel %vm312, %v50, 0.0
    %392 = vadd.xlane.f32.xlu0 %v391
    %v393 = vpop.xlane.xlu0 %392
    %v394 = vsel %vm312, %v51, 0.0
    %395 = vadd.xlane.f32.xlu0 %v394
    %v396 = vpop.xlane.xlu0 %395
    %v397 = vsel %vm312, %v52, 0.0
    %398 = vadd.xlane.f32.xlu0 %v397
    %v399 = vpop.xlane.xlu0 %398
    %v400 = vsel %vm312, %v53, 0.0
    %401 = vadd.xlane.f32.xlu0 %v400
    %v402 = vpop.xlane.xlu0 %401
    %v403 = vsel %vm312, %v54, 0.0
    %404 = vadd.xlane.f32.xlu0 %v403
    %v405 = vpop.xlane.xlu0 %404
    %v406 = vsel %vm312, %v55, 0.0
    %407 = vadd.xlane.f32.xlu0 %v406
    %v408 = vpop.xlane.xlu0 %407
    %v409 = vsel %vm312, %v280, 0.0
    %410 = vadd.xlane.f32.xlu0 %v409
    %v411 = vpop.xlane.xlu0 %410
    %v412 = vsel %vm312, %v281, 0.0
    %413 = vadd.xlane.f32.xlu0 %v412
    %v414 = vpop.xlane.xlu0 %413
    %v415 = vsel %vm312, %v282, 0.0
    %416 = vadd.xlane.f32.xlu0 %v415
    %v417 = vpop.xlane.xlu0 %416
    %v418 = vsel %vm312, %v283, 0.0
    %419 = vadd.xlane.f32.xlu0 %v418
    %v420 = vpop.xlane.xlu0 %419
    %v421 = vsel %vm312, %v284, 0.0
    %422 = vadd.xlane.f32.xlu0 %v421
    %v423 = vpop.xlane.xlu0 %422
    %v424 = vsel %vm312, %v285, 0.0
    %425 = vadd.xlane.f32.xlu0 %v424
    %v426 = vpop.xlane.xlu0 %425
    %v427 = vsel %vm312, %v286, 0.0
    %428 = vadd.xlane.f32.xlu0 %v427
    %v429 = vpop.xlane.xlu0 %428
    %v430 = vsel %vm312, %v287, 0.0
    %431 = vadd.xlane.f32.xlu0 %v430
    %v432 = vpop.xlane.xlu0 %431
    %v433 = vsel %vm312, %v288, 0.0
    %434 = vadd.xlane.f32.xlu0 %v433
    %v435 = vpop.xlane.xlu0 %434
    %v436 = vsel %vm312, %v289, 0.0
    %437 = vadd.xlane.f32.xlu0 %v436
    %v438 = vpop.xlane.xlu0 %437
    %v439 = vsel %vm312, %v290, 0.0
    %440 = vadd.xlane.f32.xlu0 %v439
    %v441 = vpop.xlane.xlu0 %440
    %v442 = vsel %vm312, %v291, 0.0
    %443 = vadd.xlane.f32.xlu0 %v442
    %v444 = vpop.xlane.xlu0 %443
    %v445 = vsel %vm312, %v292, 0.0
    %446 = vadd.xlane.f32.xlu0 %v445
    %v447 = vpop.xlane.xlu0 %446
    %v448 = vsel %vm312, %v293, 0.0
    %449 = vadd.xlane.f32.xlu0 %v448
    %v450 = vpop.xlane.xlu0 %449
    %v451 = vsel %vm312, %v294, 0.0
    %452 = vadd.xlane.f32.xlu0 %v451
    %v453 = vpop.xlane.xlu0 %452
    %v454 = vsel %vm312, %v295, 0.0
    %455 = vadd.xlane.f32.xlu0 %v454
    %v456 = vpop.xlane.xlu0 %455
    %v457 = vsel %vm312, %v296, 0.0
    %458 = vadd.xlane.f32.xlu0 %v457
    %v459 = vpop.xlane.xlu0 %458
    %v460 = vsel %vm312, %v297, 0.0
    %461 = vadd.xlane.f32.xlu0 %v460
    %v462 = vpop.xlane.xlu0 %461
    %v463 = vsel %vm312, %v298, 0.0
    %464 = vadd.xlane.f32.xlu0 %v463
    %v465 = vpop.xlane.xlu0 %464
    %v466 = vsel %vm312, %v299, 0.0
    %467 = vadd.xlane.f32.xlu0 %v466
    %v468 = vpop.xlane.xlu0 %467
    %v469 = vsel %vm312, %v300, 0.0
    %470 = vadd.xlane.f32.xlu0 %v469
    %v471 = vpop.xlane.xlu0 %470
    %v472 = vsel %vm312, %v301, 0.0
    %473 = vadd.xlane.f32.xlu0 %v472
    %v474 = vpop.xlane.xlu0 %473
    %v475 = vsel %vm312, %v302, 0.0
    %476 = vadd.xlane.f32.xlu0 %v475
    %v477 = vpop.xlane.xlu0 %476
    %v478 = vsel %vm312, %v303, 0.0
    %479 = vadd.xlane.f32.xlu0 %v478
    %v480 = vpop.xlane.xlu0 %479
    %v481 = vsel %vm312, %v304, 0.0
    %482 = vadd.xlane.f32.xlu0 %v481
    %v483 = vpop.xlane.xlu0 %482
    %v484 = vsel %vm312, %v305, 0.0
    %485 = vadd.xlane.f32.xlu0 %v484
    %v486 = vpop.xlane.xlu0 %485
    %v487 = vsel %vm312, %v306, 0.0
    %488 = vadd.xlane.f32.xlu0 %v487
    %v489 = vpop.xlane.xlu0 %488
    %v490 = vsel %vm312, %v307, 0.0
    %491 = vadd.xlane.f32.xlu0 %v490
    %v492 = vpop.xlane.xlu0 %491
    %v493 = vsel %vm312, %v308, 0.0
    %494 = vadd.xlane.f32.xlu0 %v493
    %v495 = vpop.xlane.xlu0 %494
    %v496 = vsel %vm312, %v309, 0.0
    %497 = vadd.xlane.f32.xlu0 %v496
    %v498 = vpop.xlane.xlu0 %497
    %v499 = vsel %vm312, %v310, 0.0
    %500 = vadd.xlane.f32.xlu0 %v499
    %v501 = vpop.xlane.xlu0 %500
    %v502 = vsel %vm312, %v311, 0.0
    %503 = vadd.xlane.f32.xlu0 %v502
    %v504 = vpop.xlane.xlu0 %503
    %v505 = vadd.f32 %v313, %v319
    %v506 = vadd.f32 %v505, %v325
    %v507 = vadd.f32 %v506, %v331
    %v508 = vadd.f32 %v507, %v337
    %v509 = vadd.f32 %v508, %v343
    %v510 = vadd.f32 %v509, %v349
    %v511 = vadd.f32 %v510, %v355
    %v512 = vadd.f32 %v316, %v322
    %v513 = vadd.f32 %v512, %v328
    %v514 = vadd.f32 %v513, %v334
    %v515 = vadd.f32 %v514, %v340
    %v516 = vadd.f32 %v515, %v346
    %v517 = vadd.f32 %v516, %v352
    %v518 = vadd.f32 %v517, %v358
    %v519 = vadd.f32 %v361, %v367
    %v520 = vadd.f32 %v519, %v373
    %v521 = vadd.f32 %v520, %v379
    %v522 = vadd.f32 %v521, %v385
    %v523 = vadd.f32 %v522, %v391
    %v524 = vadd.f32 %v523, %v397
    %v525 = vadd.f32 %v524, %v403
    %v526 = vadd.f32 %v364, %v370
    %v527 = vadd.f32 %v526, %v376
    %v528 = vadd.f32 %v527, %v382
    %v529 = vadd.f32 %v528, %v388
    %v530 = vadd.f32 %v529, %v394
    %v531 = vadd.f32 %v530, %v400
    %v532 = vadd.f32 %v531, %v406
    %v533 = vadd.f32 %v409, %v415
    %v534 = vadd.f32 %v533, %v421
    %v535 = vadd.f32 %v534, %v427
    %v536 = vadd.f32 %v535, %v433
    %v537 = vadd.f32 %v536, %v439
    %v538 = vadd.f32 %v537, %v445
    %v539 = vadd.f32 %v538, %v451
    %v540 = vadd.f32 %v412, %v418
    %v541 = vadd.f32 %v540, %v424
    %v542 = vadd.f32 %v541, %v430
    %v543 = vadd.f32 %v542, %v436
    %v544 = vadd.f32 %v543, %v442
    %v545 = vadd.f32 %v544, %v448
    %v546 = vadd.f32 %v545, %v454
    %v547 = vadd.f32 %v457, %v463
    %v548 = vadd.f32 %v547, %v469
    %v549 = vadd.f32 %v548, %v475
    %v550 = vadd.f32 %v549, %v481
    %v551 = vadd.f32 %v550, %v487
    %v552 = vadd.f32 %v551, %v493
    %v553 = vadd.f32 %v552, %v499
    %v554 = vadd.f32 %v460, %v466
    %v555 = vadd.f32 %v554, %v472
    %v556 = vadd.f32 %v555, %v478
    %v557 = vadd.f32 %v556, %v484
    %v558 = vadd.f32 %v557, %v490
    %v559 = vadd.f32 %v558, %v496
    %v560 = vadd.f32 %v559, %v502
    %v561 = vadd.f32 %v315, %v318
    %v562 = vrot.slane %v561, 4
    %v563 = vadd.f32 %v561, %v562
    %v564 = vrot.slane %v563, 2
    %v565 = vadd.f32 %v563, %v564
    %v566 = vrot.slane %v565, 1
    %v567 = vadd.f32 %v565, %v566
    %v568 = vadd.f32 %v321, %v324
    %v569 = vrot.slane %v568, 4
    %v570 = vadd.f32 %v568, %v569
    %v571 = vrot.slane %v570, 2
    %v572 = vadd.f32 %v570, %v571
    %v573 = vrot.slane %v572, 1
    %v574 = vadd.f32 %v572, %v573
    %v575 = vadd.f32 %v327, %v330
    %v576 = vrot.slane %v575, 4
    %v577 = vadd.f32 %v575, %v576
    %v578 = vrot.slane %v577, 2
    %v579 = vadd.f32 %v577, %v578
    %v580 = vrot.slane %v579, 1
    %v581 = vadd.f32 %v579, %v580
    %v582 = vadd.f32 %v333, %v336
    %v583 = vrot.slane %v582, 4
    %v584 = vadd.f32 %v582, %v583
    %v585 = vrot.slane %v584, 2
    %v586 = vadd.f32 %v584, %v585
    %v587 = vrot.slane %v586, 1
    %v588 = vadd.f32 %v586, %v587
    %v589 = vadd.f32 %v339, %v342
    %v590 = vrot.slane %v589, 4
    %v591 = vadd.f32 %v589, %v590
    %v592 = vrot.slane %v591, 2
    %v593 = vadd.f32 %v591, %v592
    %v594 = vrot.slane %v593, 1
    %v595 = vadd.f32 %v593, %v594
    %v596 = vadd.f32 %v345, %v348
    %v597 = vrot.slane %v596, 4
    %v598 = vadd.f32 %v596, %v597
    %v599 = vrot.slane %v598, 2
    %v600 = vadd.f32 %v598, %v599
    %v601 = vrot.slane %v600, 1
    %v602 = vadd.f32 %v600, %v601
    %v603 = vadd.f32 %v351, %v354
    %v604 = vrot.slane %v603, 4
    %v605 = vadd.f32 %v603, %v604
    %v606 = vrot.slane %v605, 2
    %v607 = vadd.f32 %v605, %v606
    %v608 = vrot.slane %v607, 1
    %v609 = vadd.f32 %v607, %v608
    %v610 = vadd.f32 %v357, %v360
    %v611 = vrot.slane %v610, 4
    %v612 = vadd.f32 %v610, %v611
    %v613 = vrot.slane %v612, 2
    %v614 = vadd.f32 %v612, %v613
    %v615 = vrot.slane %v614, 1
    %v616 = vadd.f32 %v614, %v615
    %v617 = vadd.f32 %v363, %v366
    %v618 = vrot.slane %v617, 4
    %v619 = vadd.f32 %v617, %v618
    %v620 = vrot.slane %v619, 2
    %v621 = vadd.f32 %v619, %v620
    %v622 = vrot.slane %v621, 1
    %v623 = vadd.f32 %v621, %v622
    %v624 = vadd.f32 %v369, %v372
    %v625 = vrot.slane %v624, 4
    %v626 = vadd.f32 %v624, %v625
    %v627 = vrot.slane %v626, 2
    %v628 = vadd.f32 %v626, %v627
    %v629 = vrot.slane %v628, 1
    %v630 = vadd.f32 %v628, %v629
    %v631 = vadd.f32 %v375, %v378
    %v632 = vrot.slane %v631, 4
    %v633 = vadd.f32 %v631, %v632
    %v634 = vrot.slane %v633, 2
    %v635 = vadd.f32 %v633, %v634
    %v636 = vrot.slane %v635, 1
    %v637 = vadd.f32 %v635, %v636
    %v638 = vadd.f32 %v381, %v384
    %v639 = vrot.slane %v638, 4
    %v640 = vadd.f32 %v638, %v639
    %v641 = vrot.slane %v640, 2
    %v642 = vadd.f32 %v640, %v641
    %v643 = vrot.slane %v642, 1
    %v644 = vadd.f32 %v642, %v643
    %v645 = vadd.f32 %v387, %v390
    %v646 = vrot.slane %v645, 4
    %v647 = vadd.f32 %v645, %v646
    %v648 = vrot.slane %v647, 2
    %v649 = vadd.f32 %v647, %v648
    %v650 = vrot.slane %v649, 1
    %v651 = vadd.f32 %v649, %v650
    %v652 = vadd.f32 %v393, %v396
    %v653 = vrot.slane %v652, 4
    %v654 = vadd.f32 %v652, %v653
    %v655 = vrot.slane %v654, 2
    %v656 = vadd.f32 %v654, %v655
    %v657 = vrot.slane %v656, 1
    %v658 = vadd.f32 %v656, %v657
    %v659 = vadd.f32 %v399, %v402
    %v660 = vrot.slane %v659, 4
    %v661 = vadd.f32 %v659, %v660
    %v662 = vrot.slane %v661, 2
    %v663 = vadd.f32 %v661, %v662
    %v664 = vrot.slane %v663, 1
    %v665 = vadd.f32 %v663, %v664
    %v666 = vadd.f32 %v405, %v408
    %v667 = vrot.slane %v666, 4
    %v668 = vadd.f32 %v666, %v667
    %v669 = vrot.slane %v668, 2
    %v670 = vadd.f32 %v668, %v669
    %v671 = vrot.slane %v670, 1
    %v672 = vadd.f32 %v670, %v671
    %v673 = vadd.f32 %v411, %v414
    %v674 = vrot.slane %v673, 4
    %v675 = vadd.f32 %v673, %v674
    %v676 = vrot.slane %v675, 2
    %v677 = vadd.f32 %v675, %v676
    %v678 = vrot.slane %v677, 1
    %v679 = vadd.f32 %v677, %v678
    %v680 = vadd.f32 %v417, %v420
    %v681 = vrot.slane %v680, 4
    %v682 = vadd.f32 %v680, %v681
    %v683 = vrot.slane %v682, 2
    %v684 = vadd.f32 %v682, %v683
    %v685 = vrot.slane %v684, 1
    %v686 = vadd.f32 %v684, %v685
    %v687 = vadd.f32 %v423, %v426
    %v688 = vrot.slane %v687, 4
    %v689 = vadd.f32 %v687, %v688
    %v690 = vrot.slane %v689, 2
    %v691 = vadd.f32 %v689, %v690
    %v692 = vrot.slane %v691, 1
    %v693 = vadd.f32 %v691, %v692
    %v694 = vadd.f32 %v429, %v432
    %v695 = vrot.slane %v694, 4
    %v696 = vadd.f32 %v694, %v695
    %v697 = vrot.slane %v696, 2
    %v698 = vadd.f32 %v696, %v697
    %v699 = vrot.slane %v698, 1
    %v700 = vadd.f32 %v698, %v699
    %v701 = vadd.f32 %v435, %v438
    %v702 = vrot.slane %v701, 4
    %v703 = vadd.f32 %v701, %v702
    %v704 = vrot.slane %v703, 2
    %v705 = vadd.f32 %v703, %v704
    %v706 = vrot.slane %v705, 1
    %v707 = vadd.f32 %v705, %v706
    %v708 = vadd.f32 %v441, %v444
    %v709 = vrot.slane %v708, 4
    %v710 = vadd.f32 %v708, %v709
    %v711 = vrot.slane %v710, 2
    %v712 = vadd.f32 %v710, %v711
    %v713 = vrot.slane %v712, 1
    %v714 = vadd.f32 %v712, %v713
    %v715 = vadd.f32 %v447, %v450
    %v716 = vrot.slane %v715, 4
    %v717 = vadd.f32 %v715, %v716
    %v718 = vrot.slane %v717, 2
    %v719 = vadd.f32 %v717, %v718
    %v720 = vrot.slane %v719, 1
    %v721 = vadd.f32 %v719, %v720
    %v722 = vadd.f32 %v453, %v456
    %v723 = vrot.slane %v722, 4
    %v724 = vadd.f32 %v722, %v723
    %v725 = vrot.slane %v724, 2
    %v726 = vadd.f32 %v724, %v725
    %v727 = vrot.slane %v726, 1
    %v728 = vadd.f32 %v726, %v727
    %v729 = vadd.f32 %v459, %v462
    %v730 = vrot.slane %v729, 4
    %v731 = vadd.f32 %v729, %v730
    %v732 = vrot.slane %v731, 2
    %v733 = vadd.f32 %v731, %v732
    %v734 = vrot.slane %v733, 1
    %v735 = vadd.f32 %v733, %v734
    %v736 = vadd.f32 %v465, %v468
    %v737 = vrot.slane %v736, 4
    %v738 = vadd.f32 %v736, %v737
    %v739 = vrot.slane %v738, 2
    %v740 = vadd.f32 %v738, %v739
    %v741 = vrot.slane %v740, 1
    %v742 = vadd.f32 %v740, %v741
    %v743 = vadd.f32 %v471, %v474
    %v744 = vrot.slane %v743, 4
    %v745 = vadd.f32 %v743, %v744
    %v746 = vrot.slane %v745, 2
    %v747 = vadd.f32 %v745, %v746
    %v748 = vrot.slane %v747, 1
    %v749 = vadd.f32 %v747, %v748
    %v750 = vadd.f32 %v477, %v480
    %v751 = vrot.slane %v750, 4
    %v752 = vadd.f32 %v750, %v751
    %v753 = vrot.slane %v752, 2
    %v754 = vadd.f32 %v752, %v753
    %v755 = vrot.slane %v754, 1
    %v756 = vadd.f32 %v754, %v755
    %v757 = vadd.f32 %v483, %v486
    %v758 = vrot.slane %v757, 4
    %v759 = vadd.f32 %v757, %v758
    %v760 = vrot.slane %v759, 2
    %v761 = vadd.f32 %v759, %v760
    %v762 = vrot.slane %v761, 1
    %v763 = vadd.f32 %v761, %v762
    %v764 = vadd.f32 %v489, %v492
    %v765 = vrot.slane %v764, 4
    %v766 = vadd.f32 %v764, %v765
    %v767 = vrot.slane %v766, 2
    %v768 = vadd.f32 %v766, %v767
    %v769 = vrot.slane %v768, 1
    %v770 = vadd.f32 %v768, %v769
    %v771 = vadd.f32 %v495, %v498
    %v772 = vrot.slane %v771, 4
    %v773 = vadd.f32 %v771, %v772
    %v774 = vrot.slane %v773, 2
    %v775 = vadd.f32 %v773, %v774
    %v776 = vrot.slane %v775, 1
    %v777 = vadd.f32 %v775, %v776
    %v778 = vadd.f32 %v501, %v504
    %v779 = vrot.slane %v778, 4
    %v780 = vadd.f32 %v778, %v779
    %v781 = vrot.slane %v780, 2
    %v782 = vadd.f32 %v780, %v781
    %v783 = vrot.slane %v782, 1
    %v784 = vadd.f32 %v782, %v783
    %v785 = vmul.f32 %v567, %v567
    %v786 = vmul.f32 %v574, %v574
    %v787 = vmul.f32 %v581, %v581
    %v788 = vmul.f32 %v588, %v588
    %v789 = vmul.f32 %v595, %v595
    %v790 = vmul.f32 %v602, %v602
    %v791 = vmul.f32 %v609, %v609
    %v792 = vmul.f32 %v616, %v616
    %v793 = vmul.f32 %v623, %v623
    %v794 = vmul.f32 %v630, %v630
    %v795 = vmul.f32 %v637, %v637
    %v796 = vmul.f32 %v644, %v644
    %v797 = vmul.f32 %v651, %v651
    %v798 = vmul.f32 %v658, %v658
    %v799 = vmul.f32 %v665, %v665
    %v800 = vmul.f32 %v672, %v672
    %v801 = vmul.f32 %v785, 0.020833334
    %v802 = vmul.f32 %v786, 0.020833334
    %v803 = vmul.f32 %v787, 0.020833334
    %v804 = vmul.f32 %v788, 0.020833334
    %v805 = vmul.f32 %v789, 0.020833334
    %v806 = vmul.f32 %v790, 0.020833334
    %v807 = vmul.f32 %v791, 0.020833334
    %v808 = vmul.f32 %v792, 0.020833334
    %v809 = vmul.f32 %v793, 0.020833334
    %v810 = vmul.f32 %v794, 0.020833334
    %v811 = vmul.f32 %v795, 0.020833334
    %v812 = vmul.f32 %v796, 0.020833334
    %v813 = vmul.f32 %v797, 0.020833334
    %v814 = vmul.f32 %v798, 0.020833334
    %v815 = vmul.f32 %v799, 0.020833334
    %v816 = vmul.f32 %v800, 0.020833334
    %v817 = vsub.f32 %v679, %v801
    %v818 = vsub.f32 %v686, %v802
    %v819 = vsub.f32 %v693, %v803
    %v820 = vsub.f32 %v700, %v804
    %v821 = vsub.f32 %v707, %v805
    %v822 = vsub.f32 %v714, %v806
    %v823 = vsub.f32 %v721, %v807
    %v824 = vsub.f32 %v728, %v808
    %v825 = vsub.f32 %v735, %v809
    %v826 = vsub.f32 %v742, %v810
    %v827 = vsub.f32 %v749, %v811
    %v828 = vsub.f32 %v756, %v812
    %v829 = vsub.f32 %v763, %v813
    %v830 = vsub.f32 %v770, %v814
    %v831 = vsub.f32 %v777, %v815
    %v832 = vsub.f32 %v784, %v816
    %v833 = vmul.f32 %v817, 0.021276595
    %v834 = vmul.f32 %v818, 0.021276595
    %v835 = vmul.f32 %v819, 0.021276595
    %v836 = vmul.f32 %v820, 0.021276595
    %v837 = vmul.f32 %v821, 0.021276595
    %v838 = vmul.f32 %v822, 0.021276595
    %v839 = vmul.f32 %v823, 0.021276595
    %v840 = vmul.f32 %v824, 0.021276595
    %v841 = vmul.f32 %v825, 0.021276595
    %v842 = vmul.f32 %v826, 0.021276595
    %v843 = vmul.f32 %v827, 0.021276595
    %v844 = vmul.f32 %v828, 0.021276595
    %v845 = vmul.f32 %v829, 0.021276595
    %v846 = vmul.f32 %v830, 0.021276595
    %v847 = vmul.f32 %v831, 0.021276595
    %v848 = vmul.f32 %v832, 0.021276595
    %v849 = vadd.f32 %v315, %v321
    %v850 = vadd.f32 %v849, %v327
    %v851 = vadd.f32 %v850, %v333
    %v852 = vadd.f32 %v851, %v339
    %v853 = vadd.f32 %v852, %v345
    %v854 = vadd.f32 %v853, %v351
    %v855 = vadd.f32 %v854, %v357
    %v856 = vadd.f32 %v318, %v324
    %v857 = vadd.f32 %v856, %v330
    %v858 = vadd.f32 %v857, %v336
    %v859 = vadd.f32 %v858, %v342
    %v860 = vadd.f32 %v859, %v348
    %v861 = vadd.f32 %v860, %v354
    %v862 = vadd.f32 %v861, %v360
    %v863 = vadd.f32 %v363, %v369
    %v864 = vadd.f32 %v863, %v375
    %v865 = vadd.f32 %v864, %v381
    %v866 = vadd.f32 %v865, %v387
    %v867 = vadd.f32 %v866, %v393
    %v868 = vadd.f32 %v867, %v399
    %v869 = vadd.f32 %v868, %v405
    %v870 = vadd.f32 %v366, %v372
    %v871 = vadd.f32 %v870, %v378
    %v872 = vadd.f32 %v871, %v384
    %v873 = vadd.f32 %v872, %v390
    %v874 = vadd.f32 %v873, %v396
    %v875 = vadd.f32 %v874, %v402
    %v876 = vadd.f32 %v875, %v408
    %v877 = vadd.f32 %v411, %v417
    %v878 = vadd.f32 %v877, %v423
    %v879 = vadd.f32 %v878, %v429
    %v880 = vadd.f32 %v879, %v435
    %v881 = vadd.f32 %v880, %v441
    %v882 = vadd.f32 %v881, %v447
    %v883 = vadd.f32 %v882, %v453
    %v884 = vadd.f32 %v414, %v420
    %v885 = vadd.f32 %v884, %v426
    %v886 = vadd.f32 %v885, %v432
    %v887 = vadd.f32 %v886, %v438
    %v888 = vadd.f32 %v887, %v444
    %v889 = vadd.f32 %v888, %v450
    %v890 = vadd.f32 %v889, %v456
    %v891 = vadd.f32 %v459, %v465
    %v892 = vadd.f32 %v891, %v471
    %v893 = vadd.f32 %v892, %v477
    %v894 = vadd.f32 %v893, %v483
    %v895 = vadd.f32 %v894, %v489
    %v896 = vadd.f32 %v895, %v495
    %v897 = vadd.f32 %v896, %v501
    %v898 = vadd.f32 %v462, %v468
    %v899 = vadd.f32 %v898, %v474
    %v900 = vadd.f32 %v899, %v480
    %v901 = vadd.f32 %v900, %v486
    %v902 = vadd.f32 %v901, %v492
    %v903 = vadd.f32 %v902, %v498
    %v904 = vadd.f32 %v903, %v504
    %v905 = vmul.f32 %v855, %v855
    %v906 = vmul.f32 %v862, %v862
    %v907 = vmul.f32 %v869, %v869
    %v908 = vmul.f32 %v876, %v876
    %v909 = vmul.f32 %v905, 0.041666668
    %v910 = vmul.f32 %v906, 0.041666668
    %v911 = vmul.f32 %v907, 0.041666668
    %v912 = vmul.f32 %v908, 0.041666668
    %v913 = vsub.f32 %v883, %v909
    %v914 = vsub.f32 %v890, %v910
    %v915 = vsub.f32 %v897, %v911
    %v916 = vsub.f32 %v904, %v912
    %v917 = vmul.f32 %v913, 0.04347826
    %v918 = vmul.f32 %v914, 0.04347826
    %v919 = vmul.f32 %v915, 0.04347826
    %v920 = vmul.f32 %v916, 0.04347826
    %v921 = vsel %vm312, %v511, 0.0
    %v922 = vsel %vm312, %v518, 0.0
    %v923 = vadd.f32 %v921, %v922
    %v924 = vrot.slane %v923, 4
    %v925 = vadd.f32 %v923, %v924
    %v926 = vrot.slane %v925, 2
    %v927 = vadd.f32 %v925, %v926
    %v928 = vrot.slane %v927, 1
    %v929 = vadd.f32 %v927, %v928
    %v930 = vsel %vm312, %v525, 0.0
    %v931 = vsel %vm312, %v532, 0.0
    %v932 = vadd.f32 %v930, %v931
    %v933 = vrot.slane %v932, 4
    %v934 = vadd.f32 %v932, %v933
    %v935 = vrot.slane %v934, 2
    %v936 = vadd.f32 %v934, %v935
    %v937 = vrot.slane %v936, 1
    %v938 = vadd.f32 %v936, %v937
    %v939 = vsel %vm312, %v539, 0.0
    %v940 = vsel %vm312, %v546, 0.0
    %v941 = vadd.f32 %v939, %v940
    %v942 = vrot.slane %v941, 4
    %v943 = vadd.f32 %v941, %v942
    %v944 = vrot.slane %v943, 2
    %v945 = vadd.f32 %v943, %v944
    %v946 = vrot.slane %v945, 1
    %v947 = vadd.f32 %v945, %v946
    %v948 = vsel %vm312, %v553, 0.0
    %v949 = vsel %vm312, %v560, 0.0
    %v950 = vadd.f32 %v948, %v949
    %v951 = vrot.slane %v950, 4
    %v952 = vadd.f32 %v950, %v951
    %v953 = vrot.slane %v952, 2
    %v954 = vadd.f32 %v952, %v953
    %v955 = vrot.slane %v954, 1
    %v956 = vadd.f32 %v954, %v955
    %v957 = vmul.f32 %v929, %v929
    %v958 = vmul.f32 %v938, %v938
    %v959 = vmul.f32 %v957, 0.0078125
    %v960 = vmul.f32 %v958, 0.0078125
    %v961 = vsub.f32 %v947, %v959
    %v962 = vsub.f32 %v956, %v960
    %v963 = vmul.f32 %v961, 0.007874016
    %v964 = vmul.f32 %v962, 0.007874016
    %s965 = sld [smem:[#allocation3 + $0x4]]
    %v966 = vstv %s965
    %v967 = vmul.f32 %v966, %v24
    %v968 = vmul.f32 %v966, %v25
    %v969 = vmul.f32 %v966, %v26
    %v970 = vmul.f32 %v966, %v27
    %v971 = vmul.f32 %v966, %v28
    %v972 = vmul.f32 %v966, %v29
    %v973 = vmul.f32 %v966, %v30
    %v974 = vmul.f32 %v966, %v31
    %v975 = vmul.f32 %v966, %v32
    %v976 = vmul.f32 %v966, %v33
    %v977 = vmul.f32 %v966, %v34
    %v978 = vmul.f32 %v966, %v35
    %v979 = vmul.f32 %v966, %v36
    %v980 = vmul.f32 %v966, %v37
    %v981 = vmul.f32 %v966, %v38
    %v982 = vmul.f32 %v966, %v39
    %v983 = vmul.f32 %v966, %v40
    %v984 = vmul.f32 %v966, %v41
    %v985 = vmul.f32 %v966, %v42
    %v986 = vmul.f32 %v966, %v43
    %v987 = vmul.f32 %v966, %v44
    %v988 = vmul.f32 %v966, %v45
    %v989 = vmul.f32 %v966, %v46
    %v990 = vmul.f32 %v966, %v47
    %v991 = vmul.f32 %v966, %v48
    %v992 = vmul.f32 %v966, %v49
    %v993 = vmul.f32 %v966, %v50
    %v994 = vmul.f32 %v966, %v51
    %v995 = vmul.f32 %v966, %v52
    %v996 = vmul.f32 %v966, %v53
    %v997 = vmul.f32 %v966, %v54
    %v998 = vmul.f32 %v966, %v55
    %s999 = sld [smem:[#allocation3 + $0xe]]
    %v1000 = vstv %s999
    %v1001 = vmul.f32 %v1000, %v24
    %v1002 = vmul.f32 %v1000, %v25
    %v1003 = vmul.f32 %v1000, %v26
    %v1004 = vmul.f32 %v1000, %v27
    %v1005 = vmul.f32 %v1000, %v28
    %v1006 = vmul.f32 %v1000, %v29
    %v1007 = vmul.f32 %v1000, %v30
    %v1008 = vmul.f32 %v1000, %v31
    %v1009 = vmul.f32 %v1000, %v32
    %v1010 = vmul.f32 %v1000, %v33
    %v1011 = vmul.f32 %v1000, %v34
    %v1012 = vmul.f32 %v1000, %v35
    %v1013 = vmul.f32 %v1000, %v36
    %v1014 = vmul.f32 %v1000, %v37
    %v1015 = vmul.f32 %v1000, %v38
    %v1016 = vmul.f32 %v1000, %v39
    %v1017 = vmul.f32 %v1000, %v40
    %v1018 = vmul.f32 %v1000, %v41
    %v1019 = vmul.f32 %v1000, %v42
    %v1020 = vmul.f32 %v1000, %v43
    %v1021 = vmul.f32 %v1000, %v44
    %v1022 = vmul.f32 %v1000, %v45
    %v1023 = vmul.f32 %v1000, %v46
    %v1024 = vmul.f32 %v1000, %v47
    %v1025 = vmul.f32 %v1000, %v48
    %v1026 = vmul.f32 %v1000, %v49
    %v1027 = vmul.f32 %v1000, %v50
    %v1028 = vmul.f32 %v1000, %v51
    %v1029 = vmul.f32 %v1000, %v52
    %v1030 = vmul.f32 %v1000, %v53
    %v1031 = vmul.f32 %v1000, %v54
    %v1032 = vmul.f32 %v1000, %v55
    %s1033 = sld [smem:[#allocation3 + $0x18]]
    %v1034 = vstv %s1033
    %v1035 = vmul.f32 %v1034, %v24
    %v1036 = vmul.f32 %v1034, %v25
    %v1037 = vmul.f32 %v1034, %v26
    %v1038 = vmul.f32 %v1034, %v27
    %v1039 = vmul.f32 %v1034, %v28
    %v1040 = vmul.f32 %v1034, %v29
    %v1041 = vmul.f32 %v1034, %v30
    %v1042 = vmul.f32 %v1034, %v31
    %v1043 = vmul.f32 %v1034, %v32
    %v1044 = vmul.f32 %v1034, %v33
    %v1045 = vmul.f32 %v1034, %v34
    %v1046 = vmul.f32 %v1034, %v35
    %v1047 = vmul.f32 %v1034, %v36
    %v1048 = vmul.f32 %v1034, %v37
    %v1049 = vmul.f32 %v1034, %v38
    %v1050 = vmul.f32 %v1034, %v39
    %v1051 = vmul.f32 %v1034, %v40
    %v1052 = vmul.f32 %v1034, %v41
    %v1053 = vmul.f32 %v1034, %v42
    %v1054 = vmul.f32 %v1034, %v43
    %v1055 = vmul.f32 %v1034, %v44
    %v1056 = vmul.f32 %v1034, %v45
    %v1057 = vmul.f32 %v1034, %v46
    %v1058 = vmul.f32 %v1034, %v47
    %v1059 = vmul.f32 %v1034, %v48
    %v1060 = vmul.f32 %v1034, %v49
    %v1061 = vmul.f32 %v1034, %v50
    %v1062 = vmul.f32 %v1034, %v51
    %v1063 = vmul.f32 %v1034, %v52
    %v1064 = vmul.f32 %v1034, %v53
    %v1065 = vmul.f32 %v1034, %v54
    %v1066 = vmul.f32 %v1034, %v55
    %s1067 = sld [smem:[#allocation3]]
    %v1068 = vld [vmem:[%s246] sm:$0xff]
    %v1069 = vld [vmem:[%s246 + $0x8] sm:$0xff]
    %v1070 = vld [vmem:[%s246 + $0x18] sm:$0xff]
    %v1071 = vld [vmem:[%s246 + $0x20] sm:$0xff]
    %v1072 = vld [vmem:[%s246 + $0x30] sm:$0xff]
    %v1073 = vld [vmem:[%s246 + $0x38] sm:$0xff]
    %v1074 = vld [vmem:[%s246 + $0x48] sm:$0xff]
    %v1075 = vld [vmem:[%s246 + $0x50] sm:$0xff]
    %v1076 = vld [vmem:[%s246 + $0x60] sm:$0xff]
    %v1077 = vld [vmem:[%s246 + $0x68] sm:$0xff]
    %v1078 = vld [vmem:[%s246 + $0x78] sm:$0xff]
    %v1079 = vld [vmem:[%s246 + $0x80] sm:$0xff]
    %v1080 = vld [vmem:[%s246 + $0x90] sm:$0xff]
    %v1081 = vld [vmem:[%s246 + $0x98] sm:$0xff]
    %v1082 = vld [vmem:[%s246 + $0xa8] sm:$0xff]
    %v1083 = vld [vmem:[%s246 + $0xb0] sm:$0xff]
    %v1084 = vld [vmem:[%s246 + $0xf0] sm:$0xff]
    %v1085 = vld [vmem:[%s246 + $0xf8] sm:$0xff]
    %v1086 = vld [vmem:[%s246 + $0x108] sm:$0xff]
    %v1087 = vld [vmem:[%s246 + $0x110] sm:$0xff]
    %v1088 = vld [vmem:[%s246 + $0x120] sm:$0xff]
    %v1089 = vld [vmem:[%s246 + $0x128] sm:$0xff]
    %v1090 = vld [vmem:[%s246 + $0x138] sm:$0xff]
    %v1091 = vld [vmem:[%s246 + $0x140] sm:$0xff]
    %v1092 = vld [vmem:[%s246 + $0x150] sm:$0xff]
    %v1093 = vld [vmem:[%s246 + $0x158] sm:$0xff]
    %v1094 = vld [vmem:[%s246 + $0x168] sm:$0xff]
    %v1095 = vld [vmem:[%s246 + $0x170] sm:$0xff]
    %v1096 = vld [vmem:[%s246 + $0x180] sm:$0xff]
    %v1097 = vld [vmem:[%s246 + $0x188] sm:$0xff]
    %v1098 = vld [vmem:[%s246 + $0x198] sm:$0xff]
    %v1099 = vld [vmem:[%s246 + $0x1a0] sm:$0xff]
    %v1100 = vstv %s1067
    %v1101 = vmul.f32 %v1100, %v1068
    %v1102 = vmul.f32 %v1100, %v1069
    %v1103 = vmul.f32 %v1100, %v1070
    %v1104 = vmul.f32 %v1100, %v1071
    %v1105 = vmul.f32 %v1100, %v1072
    %v1106 = vmul.f32 %v1100, %v1073
    %v1107 = vmul.f32 %v1100, %v1074
    %v1108 = vmul.f32 %v1100, %v1075
    %v1109 = vmul.f32 %v1100, %v1076
    %v1110 = vmul.f32 %v1100, %v1077
    %v1111 = vmul.f32 %v1100, %v1078
    %v1112 = vmul.f32 %v1100, %v1079
    %v1113 = vmul.f32 %v1100, %v1080
    %v1114 = vmul.f32 %v1100, %v1081
    %v1115 = vmul.f32 %v1100, %v1082
    %v1116 = vmul.f32 %v1100, %v1083
    %v1117 = vmul.f32 %v1100, %v1084
    %v1118 = vmul.f32 %v1100, %v1085
    %v1119 = vmul.f32 %v1100, %v1086
    %v1120 = vmul.f32 %v1100, %v1087
    %v1121 = vmul.f32 %v1100, %v1088
    %v1122 = vmul.f32 %v1100, %v1089
    %v1123 = vmul.f32 %v1100, %v1090
    %v1124 = vmul.f32 %v1100, %v1091
    %v1125 = vmul.f32 %v1100, %v1092
    %v1126 = vmul.f32 %v1100, %v1093
    %v1127 = vmul.f32 %v1100, %v1094
    %v1128 = vmul.f32 %v1100, %v1095
    %v1129 = vmul.f32 %v1100, %v1096
    %v1130 = vmul.f32 %v1100, %v1097
    %v1131 = vmul.f32 %v1100, %v1098
    %v1132 = vmul.f32 %v1100, %v1099
    %v1133 = vadd.f32 %v967, %v1101
    %v1134 = vadd.f32 %v968, %v1102
    %v1135 = vadd.f32 %v969, %v1103
    %v1136 = vadd.f32 %v970, %v1104
    %v1137 = vadd.f32 %v971, %v1105
    %v1138 = vadd.f32 %v972, %v1106
    %v1139 = vadd.f32 %v973, %v1107
    %v1140 = vadd.f32 %v974, %v1108
    %v1141 = vadd.f32 %v975, %v1109
    %v1142 = vadd.f32 %v976, %v1110
    %v1143 = vadd.f32 %v977, %v1111
    %v1144 = vadd.f32 %v978, %v1112
    %v1145 = vadd.f32 %v979, %v1113
    %v1146 = vadd.f32 %v980, %v1114
    %v1147 = vadd.f32 %v981, %v1115
    %v1148 = vadd.f32 %v982, %v1116
    %v1149 = vadd.f32 %v983, %v1117
    %v1150 = vadd.f32 %v984, %v1118
    %v1151 = vadd.f32 %v985, %v1119
    %v1152 = vadd.f32 %v986, %v1120
    %v1153 = vadd.f32 %v987, %v1121
    %v1154 = vadd.f32 %v988, %v1122
    %v1155 = vadd.f32 %v989, %v1123
    %v1156 = vadd.f32 %v990, %v1124
    %v1157 = vadd.f32 %v991, %v1125
    %v1158 = vadd.f32 %v992, %v1126
    %v1159 = vadd.f32 %v993, %v1127
    %v1160 = vadd.f32 %v994, %v1128
    %v1161 = vadd.f32 %v995, %v1129
    %v1162 = vadd.f32 %v996, %v1130
    %v1163 = vadd.f32 %v997, %v1131
    %v1164 = vadd.f32 %v998, %v1132
    %s1165 = sld [smem:[#allocation3 + $0xa]]
    %v1166 = vld [vmem:[#allocation2 + $0x1] sm:$0xff]
    %v1167 = vld [vmem:[#allocation2 + $0x9] sm:$0xff]
    %v1168 = vld [vmem:[#allocation2 + $0x19] sm:$0xff]
    %v1169 = vld [vmem:[#allocation2 + $0x21] sm:$0xff]
    %v1170 = vld [vmem:[#allocation2 + $0x31] sm:$0xff]
    %v1171 = vld [vmem:[#allocation2 + $0x39] sm:$0xff]
    %v1172 = vld [vmem:[#allocation2 + $0x49] sm:$0xff]
    %v1173 = vld [vmem:[#allocation2 + $0x51] sm:$0xff]
    %v1174 = vld [vmem:[#allocation2 + $0x61] sm:$0xff]
    %v1175 = vld [vmem:[#allocation2 + $0x69] sm:$0xff]
    %v1176 = vld [vmem:[#allocation2 + $0x79] sm:$0xff]
    %v1177 = vld [vmem:[#allocation2 + $0x81] sm:$0xff]
    %v1178 = vld [vmem:[#allocation2 + $0x91] sm:$0xff]
    %v1179 = vld [vmem:[#allocation2 + $0x99] sm:$0xff]
    %v1180 = vld [vmem:[#allocation2 + $0xa9] sm:$0xff]
    %v1181 = vld [vmem:[#allocation2 + $0xb1] sm:$0xff]
    %v1182 = vld [vmem:[#allocation2 + $0xf1] sm:$0xff]
    %v1183 = vld [vmem:[#allocation2 + $0xf9] sm:$0xff]
    %v1184 = vld [vmem:[#allocation2 + $0x109] sm:$0xff]
    %v1185 = vld [vmem:[#allocation2 + $0x111] sm:$0xff]
    %v1186 = vld [vmem:[#allocation2 + $0x121] sm:$0xff]
    %v1187 = vld [vmem:[#allocation2 + $0x129] sm:$0xff]
    %v1188 = vld [vmem:[#allocation2 + $0x139] sm:$0xff]
    %v1189 = vld [vmem:[#allocation2 + $0x141] sm:$0xff]
    %v1190 = vld [vmem:[#allocation2 + $0x151] sm:$0xff]
    %v1191 = vld [vmem:[#allocation2 + $0x159] sm:$0xff]
    %v1192 = vld [vmem:[#allocation2 + $0x169] sm:$0xff]
    %v1193 = vld [vmem:[#allocation2 + $0x171] sm:$0xff]
    %v1194 = vld [vmem:[#allocation2 + $0x181] sm:$0xff]
    %v1195 = vld [vmem:[#allocation2 + $0x189] sm:$0xff]
    %v1196 = vld [vmem:[#allocation2 + $0x199] sm:$0xff]
    %v1197 = vld [vmem:[#allocation2 + $0x1a1] sm:$0xff]
    %v1198 = vstv %s1165
    %v1199 = vmul.f32 %v1198, %v1166
    %v1200 = vmul.f32 %v1198, %v1167
    %v1201 = vmul.f32 %v1198, %v1168
    %v1202 = vmul.f32 %v1198, %v1169
    %v1203 = vmul.f32 %v1198, %v1170
    %v1204 = vmul.f32 %v1198, %v1171
    %v1205 = vmul.f32 %v1198, %v1172
    %v1206 = vmul.f32 %v1198, %v1173
    %v1207 = vmul.f32 %v1198, %v1174
    %v1208 = vmul.f32 %v1198, %v1175
    %v1209 = vmul.f32 %v1198, %v1176
    %v1210 = vmul.f32 %v1198, %v1177
    %v1211 = vmul.f32 %v1198, %v1178
    %v1212 = vmul.f32 %v1198, %v1179
    %v1213 = vmul.f32 %v1198, %v1180
    %v1214 = vmul.f32 %v1198, %v1181
    %v1215 = vmul.f32 %v1198, %v1182
    %v1216 = vmul.f32 %v1198, %v1183
    %v1217 = vmul.f32 %v1198, %v1184
    %v1218 = vmul.f32 %v1198, %v1185
    %v1219 = vmul.f32 %v1198, %v1186
    %v1220 = vmul.f32 %v1198, %v1187
    %v1221 = vmul.f32 %v1198, %v1188
    %v1222 = vmul.f32 %v1198, %v1189
    %v1223 = vmul.f32 %v1198, %v1190
    %v1224 = vmul.f32 %v1198, %v1191
    %v1225 = vmul.f32 %v1198, %v1192
    %v1226 = vmul.f32 %v1198, %v1193
    %v1227 = vmul.f32 %v1198, %v1194
    %v1228 = vmul.f32 %v1198, %v1195
    %v1229 = vmul.f32 %v1198, %v1196
    %v1230 = vmul.f32 %v1198, %v1197
    %v1231 = vadd.f32 %v1001, %v1199
    %v1232 = vadd.f32 %v1002, %v1200
    %v1233 = vadd.f32 %v1003, %v1201
    %v1234 = vadd.f32 %v1004, %v1202
    %v1235 = vadd.f32 %v1005, %v1203
    %v1236 = vadd.f32 %v1006, %v1204
    %v1237 = vadd.f32 %v1007, %v1205
    %v1238 = vadd.f32 %v1008, %v1206
    %v1239 = vadd.f32 %v1009, %v1207
    %v1240 = vadd.f32 %v1010, %v1208
    %v1241 = vadd.f32 %v1011, %v1209
    %v1242 = vadd.f32 %v1012, %v1210
    %v1243 = vadd.f32 %v1013, %v1211
    %v1244 = vadd.f32 %v1014, %v1212
    %v1245 = vadd.f32 %v1015, %v1213
    %v1246 = vadd.f32 %v1016, %v1214
    %v1247 = vadd.f32 %v1017, %v1215
    %v1248 = vadd.f32 %v1018, %v1216
    %v1249 = vadd.f32 %v1019, %v1217
    %v1250 = vadd.f32 %v1020, %v1218
    %v1251 = vadd.f32 %v1021, %v1219
    %v1252 = vadd.f32 %v1022, %v1220
    %v1253 = vadd.f32 %v1023, %v1221
    %v1254 = vadd.f32 %v1024, %v1222
    %v1255 = vadd.f32 %v1025, %v1223
    %v1256 = vadd.f32 %v1026, %v1224
    %v1257 = vadd.f32 %v1027, %v1225
    %v1258 = vadd.f32 %v1028, %v1226
    %v1259 = vadd.f32 %v1029, %v1227
    %v1260 = vadd.f32 %v1030, %v1228
    %v1261 = vadd.f32 %v1031, %v1229
    %v1262 = vadd.f32 %v1032, %v1230
    %s1263 = sld [smem:[#allocation3 + $0x14]]
    %v1264 = vld [vmem:[#allocation2] sm:$0xff]
    %v1265 = vld [vmem:[#allocation2 + $0x8] sm:$0xff]
    %v1266 = vld [vmem:[#allocation2 + $0x18] sm:$0xff]
    %v1267 = vld [vmem:[#allocation2 + $0x20] sm:$0xff]
    %v1268 = vld [vmem:[#allocation2 + $0x30] sm:$0xff]
    %v1269 = vld [vmem:[#allocation2 + $0x38] sm:$0xff]
    %v1270 = vld [vmem:[#allocation2 + $0x48] sm:$0xff]
    %v1271 = vld [vmem:[#allocation2 + $0x50] sm:$0xff]
    %v1272 = vld [vmem:[#allocation2 + $0x60] sm:$0xff]
    %v1273 = vld [vmem:[#allocation2 + $0x68] sm:$0xff]
    %v1274 = vld [vmem:[#allocation2 + $0x78] sm:$0xff]
    %v1275 = vld [vmem:[#allocation2 + $0x80] sm:$0xff]
    %v1276 = vld [vmem:[#allocation2 + $0x90] sm:$0xff]
    %v1277 = vld [vmem:[#allocation2 + $0x98] sm:$0xff]
    %v1278 = vld [vmem:[#allocation2 + $0xa8] sm:$0xff]
    %v1279 = vld [vmem:[#allocation2 + $0xb0] sm:$0xff]
    %v1280 = vld [vmem:[#allocation2 + $0xf0] sm:$0xff]
    %v1281 = vld [vmem:[#allocation2 + $0xf8] sm:$0xff]
    %v1282 = vld [vmem:[#allocation2 + $0x108] sm:$0xff]
    %v1283 = vld [vmem:[#allocation2 + $0x110] sm:$0xff]
    %v1284 = vld [vmem:[#allocation2 + $0x120] sm:$0xff]
    %v1285 = vld [vmem:[#allocation2 + $0x128] sm:$0xff]
    %v1286 = vld [vmem:[#allocation2 + $0x138] sm:$0xff]
    %v1287 = vld [vmem:[#allocation2 + $0x140] sm:$0xff]
    %v1288 = vld [vmem:[#allocation2 + $0x150] sm:$0xff]
    %v1289 = vld [vmem:[#allocation2 + $0x158] sm:$0xff]
    %v1290 = vld [vmem:[#allocation2 + $0x168] sm:$0xff]
    %v1291 = vld [vmem:[#allocation2 + $0x170] sm:$0xff]
    %v1292 = vld [vmem:[#allocation2 + $0x180] sm:$0xff]
    %v1293 = vld [vmem:[#allocation2 + $0x188] sm:$0xff]
    %v1294 = vld [vmem:[#allocation2 + $0x198] sm:$0xff]
    %v1295 = vld [vmem:[#allocation2 + $0x1a0] sm:$0xff]
    %v1296 = vstv %s1263
    %v1297 = vmul.f32 %v1296, %v1264
    %v1298 = vmul.f32 %v1296, %v1265
    %v1299 = vmul.f32 %v1296, %v1266
    %v1300 = vmul.f32 %v1296, %v1267
    %v1301 = vmul.f32 %v1296, %v1268
    %v1302 = vmul.f32 %v1296, %v1269
    %v1303 = vmul.f32 %v1296, %v1270
    %v1304 = vmul.f32 %v1296, %v1271
    %v1305 = vmul.f32 %v1296, %v1272
    %v1306 = vmul.f32 %v1296, %v1273
    %v1307 = vmul.f32 %v1296, %v1274
    %v1308 = vmul.f32 %v1296, %v1275
    %v1309 = vmul.f32 %v1296, %v1276
    %v1310 = vmul.f32 %v1296, %v1277
    %v1311 = vmul.f32 %v1296, %v1278
    %v1312 = vmul.f32 %v1296, %v1279
    %v1313 = vmul.f32 %v1296, %v1280
    %v1314 = vmul.f32 %v1296, %v1281
    %v1315 = vmul.f32 %v1296, %v1282
    %v1316 = vmul.f32 %v1296, %v1283
    %v1317 = vmul.f32 %v1296, %v1284
    %v1318 = vmul.f32 %v1296, %v1285
    %v1319 = vmul.f32 %v1296, %v1286
    %v1320 = vmul.f32 %v1296, %v1287
    %v1321 = vmul.f32 %v1296, %v1288
    %v1322 = vmul.f32 %v1296, %v1289
    %v1323 = vmul.f32 %v1296, %v1290
    %v1324 = vmul.f32 %v1296, %v1291
    %v1325 = vmul.f32 %v1296, %v1292
    %v1326 = vmul.f32 %v1296, %v1293
    %v1327 = vmul.f32 %v1296, %v1294
    %v1328 = vmul.f32 %v1296, %v1295
    %1361 = vrot.lane.b32.xlu0 %v1297, 127
    %v1362 = vpop.permute.xlu0 %1361
    %1363 = vrot.lane.b32.xlu0 %v1298, 127
    %v1364 = vpop.permute.xlu0 %1363
    %1365 = vrot.lane.b32.xlu0 %v1299, 127
    %v1366 = vpop.permute.xlu0 %1365
    %1367 = vrot.lane.b32.xlu0 %v1300, 127
    %v1368 = vpop.permute.xlu0 %1367
    %1369 = vrot.lane.b32.xlu0 %v1301, 127
    %v1370 = vpop.permute.xlu0 %1369
    %1371 = vrot.lane.b32.xlu0 %v1302, 127
    %v1372 = vpop.permute.xlu0 %1371
    %1373 = vrot.lane.b32.xlu0 %v1303, 127
    %v1374 = vpop.permute.xlu0 %1373
    %1375 = vrot.lane.b32.xlu0 %v1304, 127
    %v1376 = vpop.permute.xlu0 %1375
    %1377 = vrot.lane.b32.xlu0 %v1305, 127
    %v1378 = vpop.permute.xlu0 %1377
    %1379 = vrot.lane.b32.xlu0 %v1306, 127
    %v1380 = vpop.permute.xlu0 %1379
    %1381 = vrot.lane.b32.xlu0 %v1307, 127
    %v1382 = vpop.permute.xlu0 %1381
    %1383 = vrot.lane.b32.xlu0 %v1308, 127
    %v1384 = vpop.permute.xlu0 %1383
    %1385 = vrot.lane.b32.xlu0 %v1309, 127
    %v1386 = vpop.permute.xlu0 %1385
    %1387 = vrot.lane.b32.xlu0 %v1310, 127
    %v1388 = vpop.permute.xlu0 %1387
    %1389 = vrot.lane.b32.xlu0 %v1311, 127
    %v1390 = vpop.permute.xlu0 %1389
    %1391 = vrot.lane.b32.xlu0 %v1312, 127
    %v1392 = vpop.permute.xlu0 %1391
    %1393 = vrot.lane.b32.xlu0 %v1313, 127
    %v1394 = vpop.permute.xlu0 %1393
    %1395 = vrot.lane.b32.xlu0 %v1314, 127
    %v1396 = vpop.permute.xlu0 %1395
    %1397 = vrot.lane.b32.xlu0 %v1315, 127
    %v1398 = vpop.permute.xlu0 %1397
    %1399 = vrot.lane.b32.xlu0 %v1316, 127
    %v1400 = vpop.permute.xlu0 %1399
    %1401 = vrot.lane.b32.xlu0 %v1317, 127
    %v1402 = vpop.permute.xlu0 %1401
    %1403 = vrot.lane.b32.xlu0 %v1318, 127
    %v1404 = vpop.permute.xlu0 %1403
    %1405 = vrot.lane.b32.xlu0 %v1319, 127
    %v1406 = vpop.permute.xlu0 %1405
    %1407 = vrot.lane.b32.xlu0 %v1320, 127
    %v1408 = vpop.permute.xlu0 %1407
    %1409 = vrot.lane.b32.xlu0 %v1321, 127
    %v1410 = vpop.permute.xlu0 %1409
    %1411 = vrot.lane.b32.xlu0 %v1322, 127
    %v1412 = vpop.permute.xlu0 %1411
    %1413 = vrot.lane.b32.xlu0 %v1323, 127
    %v1414 = vpop.permute.xlu0 %1413
    %1415 = vrot.lane.b32.xlu0 %v1324, 127
    %v1416 = vpop.permute.xlu0 %1415
    %1417 = vrot.lane.b32.xlu0 %v1325, 127
    %v1418 = vpop.permute.xlu0 %1417
    %1419 = vrot.lane.b32.xlu0 %v1326, 127
    %v1420 = vpop.permute.xlu0 %1419
    %1421 = vrot.lane.b32.xlu0 %v1327, 127
    %v1422 = vpop.permute.xlu0 %1421
    %1423 = vrot.lane.b32.xlu0 %v1328, 127
    %v1424 = vpop.permute.xlu0 %1423
    %v1457 = vadd.f32 %v1035, %v1362
    %v1458 = vadd.f32 %v1036, %v1364
    %v1459 = vadd.f32 %v1037, %v1366
    %v1460 = vadd.f32 %v1038, %v1368
    %v1461 = vadd.f32 %v1039, %v1370
    %v1462 = vadd.f32 %v1040, %v1372
    %v1463 = vadd.f32 %v1041, %v1374
    %v1464 = vadd.f32 %v1042, %v1376
    %v1465 = vadd.f32 %v1043, %v1378
    %v1466 = vadd.f32 %v1044, %v1380
    %v1467 = vadd.f32 %v1045, %v1382
    %v1468 = vadd.f32 %v1046, %v1384
    %v1469 = vadd.f32 %v1047, %v1386
    %v1470 = vadd.f32 %v1048, %v1388
    %v1471 = vadd.f32 %v1049, %v1390
    %v1472 = vadd.f32 %v1050, %v1392
    %v1473 = vadd.f32 %v1051, %v1394
    %v1474 = vadd.f32 %v1052, %v1396
    %v1475 = vadd.f32 %v1053, %v1398
    %v1476 = vadd.f32 %v1054, %v1400
    %v1477 = vadd.f32 %v1055, %v1402
    %v1478 = vadd.f32 %v1056, %v1404
    %v1479 = vadd.f32 %v1057, %v1406
    %v1480 = vadd.f32 %v1058, %v1408
    %v1481 = vadd.f32 %v1059, %v1410
    %v1482 = vadd.f32 %v1060, %v1412
    %v1483 = vadd.f32 %v1061, %v1414
    %v1484 = vadd.f32 %v1062, %v1416
    %v1485 = vadd.f32 %v1063, %v1418
    %v1486 = vadd.f32 %v1064, %v1420
    %v1487 = vadd.f32 %v1065, %v1422
    %v1488 = vadd.f32 %v1066, %v1424
    %s1489 = sld [smem:[#allocation3 + $0x1]]
    %v1490 = vstv %s1489
    %v1491 = vmul.f32 %v1490, %v1068
    %v1492 = vmul.f32 %v1490, %v1069
    %v1493 = vmul.f32 %v1490, %v1070
    %v1494 = vmul.f32 %v1490, %v1071
    %v1495 = vmul.f32 %v1490, %v1072
    %v1496 = vmul.f32 %v1490, %v1073
    %v1497 = vmul.f32 %v1490, %v1074
    %v1498 = vmul.f32 %v1490, %v1075
    %v1499 = vmul.f32 %v1490, %v1076
    %v1500 = vmul.f32 %v1490, %v1077
    %v1501 = vmul.f32 %v1490, %v1078
    %v1502 = vmul.f32 %v1490, %v1079
    %v1503 = vmul.f32 %v1490, %v1080
    %v1504 = vmul.f32 %v1490, %v1081
    %v1505 = vmul.f32 %v1490, %v1082
    %v1506 = vmul.f32 %v1490, %v1083
    %v1507 = vmul.f32 %v1490, %v1084
    %v1508 = vmul.f32 %v1490, %v1085
    %v1509 = vmul.f32 %v1490, %v1086
    %v1510 = vmul.f32 %v1490, %v1087
    %v1511 = vmul.f32 %v1490, %v1088
    %v1512 = vmul.f32 %v1490, %v1089
    %v1513 = vmul.f32 %v1490, %v1090
    %v1514 = vmul.f32 %v1490, %v1091
    %v1515 = vmul.f32 %v1490, %v1092
    %v1516 = vmul.f32 %v1490, %v1093
    %v1517 = vmul.f32 %v1490, %v1094
    %v1518 = vmul.f32 %v1490, %v1095
    %v1519 = vmul.f32 %v1490, %v1096
    %v1520 = vmul.f32 %v1490, %v1097
    %v1521 = vmul.f32 %v1490, %v1098
    %v1522 = vmul.f32 %v1490, %v1099
    %1555 = vrot.lane.b32.xlu0 %v1491, 127
    %v1556 = vpop.permute.xlu0 %1555
    %1557 = vrot.lane.b32.xlu0 %v1492, 127
    %v1558 = vpop.permute.xlu0 %1557
    %1559 = vrot.lane.b32.xlu0 %v1493, 127
    %v1560 = vpop.permute.xlu0 %1559
    %1561 = vrot.lane.b32.xlu0 %v1494, 127
    %v1562 = vpop.permute.xlu0 %1561
    %1563 = vrot.lane.b32.xlu0 %v1495, 127
    %v1564 = vpop.permute.xlu0 %1563
    %1565 = vrot.lane.b32.xlu0 %v1496, 127
    %v1566 = vpop.permute.xlu0 %1565
    %1567 = vrot.lane.b32.xlu0 %v1497, 127
    %v1568 = vpop.permute.xlu0 %1567
    %1569 = vrot.lane.b32.xlu0 %v1498, 127
    %v1570 = vpop.permute.xlu0 %1569
    %1571 = vrot.lane.b32.xlu0 %v1499, 127
    %v1572 = vpop.permute.xlu0 %1571
    %1573 = vrot.lane.b32.xlu0 %v1500, 127
    %v1574 = vpop.permute.xlu0 %1573
    %1575 = vrot.lane.b32.xlu0 %v1501, 127
    %v1576 = vpop.permute.xlu0 %1575
    %1577 = vrot.lane.b32.xlu0 %v1502, 127
    %v1578 = vpop.permute.xlu0 %1577
    %1579 = vrot.lane.b32.xlu0 %v1503, 127
    %v1580 = vpop.permute.xlu0 %1579
    %1581 = vrot.lane.b32.xlu0 %v1504, 127
    %v1582 = vpop.permute.xlu0 %1581
    %1583 = vrot.lane.b32.xlu0 %v1505, 127
    %v1584 = vpop.permute.xlu0 %1583
    %1585 = vrot.lane.b32.xlu0 %v1506, 127
    %v1586 = vpop.permute.xlu0 %1585
    %1587 = vrot.lane.b32.xlu0 %v1507, 127
    %v1588 = vpop.permute.xlu0 %1587
    %1589 = vrot.lane.b32.xlu0 %v1508, 127
    %v1590 = vpop.permute.xlu0 %1589
    %1591 = vrot.lane.b32.xlu0 %v1509, 127
    %v1592 = vpop.permute.xlu0 %1591
    %1593 = vrot.lane.b32.xlu0 %v1510, 127
    %v1594 = vpop.permute.xlu0 %1593
    %1595 = vrot.lane.b32.xlu0 %v1511, 127
    %v1596 = vpop.permute.xlu0 %1595
    %1597 = vrot.lane.b32.xlu0 %v1512, 127
    %v1598 = vpop.permute.xlu0 %1597
    %1599 = vrot.lane.b32.xlu0 %v1513, 127
    %v1600 = vpop.permute.xlu0 %1599
    %1601 = vrot.lane.b32.xlu0 %v1514, 127
    %v1602 = vpop.permute.xlu0 %1601
    %1603 = vrot.lane.b32.xlu0 %v1515, 127
    %v1604 = vpop.permute.xlu0 %1603
    %1605 = vrot.lane.b32.xlu0 %v1516, 127
    %v1606 = vpop.permute.xlu0 %1605
    %1607 = vrot.lane.b32.xlu0 %v1517, 127
    %v1608 = vpop.permute.xlu0 %1607
    %1609 = vrot.lane.b32.xlu0 %v1518, 127
    %v1610 = vpop.permute.xlu0 %1609
    %1611 = vrot.lane.b32.xlu0 %v1519, 127
    %v1612 = vpop.permute.xlu0 %1611
    %1613 = vrot.lane.b32.xlu0 %v1520, 127
    %v1614 = vpop.permute.xlu0 %1613
    %1615 = vrot.lane.b32.xlu0 %v1521, 127
    %v1616 = vpop.permute.xlu0 %1615
    %1617 = vrot.lane.b32.xlu0 %v1522, 127
    %v1618 = vpop.permute.xlu0 %1617
    %v1651 = vadd.f32 %v1133, %v1556
    %v1652 = vadd.f32 %v1134, %v1558
    %v1653 = vadd.f32 %v1135, %v1560
    %v1654 = vadd.f32 %v1136, %v1562
    %v1655 = vadd.f32 %v1137, %v1564
    %v1656 = vadd.f32 %v1138, %v1566
    %v1657 = vadd.f32 %v1139, %v1568
    %v1658 = vadd.f32 %v1140, %v1570
    %v1659 = vadd.f32 %v1141, %v1572
    %v1660 = vadd.f32 %v1142, %v1574
    %v1661 = vadd.f32 %v1143, %v1576
    %v1662 = vadd.f32 %v1144, %v1578
    %v1663 = vadd.f32 %v1145, %v1580
    %v1664 = vadd.f32 %v1146, %v1582
    %v1665 = vadd.f32 %v1147, %v1584
    %v1666 = vadd.f32 %v1148, %v1586
    %v1667 = vadd.f32 %v1149, %v1588
    %v1668 = vadd.f32 %v1150, %v1590
    %v1669 = vadd.f32 %v1151, %v1592
    %v1670 = vadd.f32 %v1152, %v1594
    %v1671 = vadd.f32 %v1153, %v1596
    %v1672 = vadd.f32 %v1154, %v1598
    %v1673 = vadd.f32 %v1155, %v1600
    %v1674 = vadd.f32 %v1156, %v1602
    %v1675 = vadd.f32 %v1157, %v1604
    %v1676 = vadd.f32 %v1158, %v1606
    %v1677 = vadd.f32 %v1159, %v1608
    %v1678 = vadd.f32 %v1160, %v1610
    %v1679 = vadd.f32 %v1161, %v1612
    %v1680 = vadd.f32 %v1162, %v1614
    %v1681 = vadd.f32 %v1163, %v1616
    %v1682 = vadd.f32 %v1164, %v1618
    %s1683 = sld [smem:[#allocation3 + $0xb]]
    %v1684 = vstv %s1683
    %v1685 = vmul.f32 %v1684, %v1166
    %v1686 = vmul.f32 %v1684, %v1167
    %v1687 = vmul.f32 %v1684, %v1168
    %v1688 = vmul.f32 %v1684, %v1169
    %v1689 = vmul.f32 %v1684, %v1170
    %v1690 = vmul.f32 %v1684, %v1171
    %v1691 = vmul.f32 %v1684, %v1172
    %v1692 = vmul.f32 %v1684, %v1173
    %v1693 = vmul.f32 %v1684, %v1174
    %v1694 = vmul.f32 %v1684, %v1175
    %v1695 = vmul.f32 %v1684, %v1176
    %v1696 = vmul.f32 %v1684, %v1177
    %v1697 = vmul.f32 %v1684, %v1178
    %v1698 = vmul.f32 %v1684, %v1179
    %v1699 = vmul.f32 %v1684, %v1180
    %v1700 = vmul.f32 %v1684, %v1181
    %v1701 = vmul.f32 %v1684, %v1182
    %v1702 = vmul.f32 %v1684, %v1183
    %v1703 = vmul.f32 %v1684, %v1184
    %v1704 = vmul.f32 %v1684, %v1185
    %v1705 = vmul.f32 %v1684, %v1186
    %v1706 = vmul.f32 %v1684, %v1187
    %v1707 = vmul.f32 %v1684, %v1188
    %v1708 = vmul.f32 %v1684, %v1189
    %v1709 = vmul.f32 %v1684, %v1190
    %v1710 = vmul.f32 %v1684, %v1191
    %v1711 = vmul.f32 %v1684, %v1192
    %v1712 = vmul.f32 %v1684, %v1193
    %v1713 = vmul.f32 %v1684, %v1194
    %v1714 = vmul.f32 %v1684, %v1195
    %v1715 = vmul.f32 %v1684, %v1196
    %v1716 = vmul.f32 %v1684, %v1197
    %1749 = vrot.lane.b32.xlu0 %v1685, 127
    %v1750 = vpop.permute.xlu0 %1749
    %1751 = vrot.lane.b32.xlu0 %v1686, 127
    %v1752 = vpop.permute.xlu0 %1751
    %1753 = vrot.lane.b32.xlu0 %v1687, 127
    %v1754 = vpop.permute.xlu0 %1753
    %1755 = vrot.lane.b32.xlu0 %v1688, 127
    %v1756 = vpop.permute.xlu0 %1755
    %1757 = vrot.lane.b32.xlu0 %v1689, 127
    %v1758 = vpop.permute.xlu0 %1757
    %1759 = vrot.lane.b32.xlu0 %v1690, 127
    %v1760 = vpop.permute.xlu0 %1759
    %1761 = vrot.lane.b32.xlu0 %v1691, 127
    %v1762 = vpop.permute.xlu0 %1761
    %1763 = vrot.lane.b32.xlu0 %v1692, 127
    %v1764 = vpop.permute.xlu0 %1763
    %1765 = vrot.lane.b32.xlu0 %v1693, 127
    %v1766 = vpop.permute.xlu0 %1765
    %1767 = vrot.lane.b32.xlu0 %v1694, 127
    %v1768 = vpop.permute.xlu0 %1767
    %1769 = vrot.lane.b32.xlu0 %v1695, 127
    %v1770 = vpop.permute.xlu0 %1769
    %1771 = vrot.lane.b32.xlu0 %v1696, 127
    %v1772 = vpop.permute.xlu0 %1771
    %1773 = vrot.lane.b32.xlu0 %v1697, 127
    %v1774 = vpop.permute.xlu0 %1773
    %1775 = vrot.lane.b32.xlu0 %v1698, 127
    %v1776 = vpop.permute.xlu0 %1775
    %1777 = vrot.lane.b32.xlu0 %v1699, 127
    %v1778 = vpop.permute.xlu0 %1777
    %1779 = vrot.lane.b32.xlu0 %v1700, 127
    %v1780 = vpop.permute.xlu0 %1779
    %1781 = vrot.lane.b32.xlu0 %v1701, 127
    %v1782 = vpop.permute.xlu0 %1781
    %1783 = vrot.lane.b32.xlu0 %v1702, 127
    %v1784 = vpop.permute.xlu0 %1783
    %1785 = vrot.lane.b32.xlu0 %v1703, 127
    %v1786 = vpop.permute.xlu0 %1785
    %1787 = vrot.lane.b32.xlu0 %v1704, 127
    %v1788 = vpop.permute.xlu0 %1787
    %1789 = vrot.lane.b32.xlu0 %v1705, 127
    %v1790 = vpop.permute.xlu0 %1789
    %1791 = vrot.lane.b32.xlu0 %v1706, 127
    %v1792 = vpop.permute.xlu0 %1791
    %1793 = vrot.lane.b32.xlu0 %v1707, 127
    %v1794 = vpop.permute.xlu0 %1793
    %1795 = vrot.lane.b32.xlu0 %v1708, 127
    %v1796 = vpop.permute.xlu0 %1795
    %1797 = vrot.lane.b32.xlu0 %v1709, 127
    %v1798 = vpop.permute.xlu0 %1797
    %1799 = vrot.lane.b32.xlu0 %v1710, 127
    %v1800 = vpop.permute.xlu0 %1799
    %1801 = vrot.lane.b32.xlu0 %v1711, 127
    %v1802 = vpop.permute.xlu0 %1801
    %1803 = vrot.lane.b32.xlu0 %v1712, 127
    %v1804 = vpop.permute.xlu0 %1803
    %1805 = vrot.lane.b32.xlu0 %v1713, 127
    %v1806 = vpop.permute.xlu0 %1805
    %1807 = vrot.lane.b32.xlu0 %v1714, 127
    %v1808 = vpop.permute.xlu0 %1807
    %1809 = vrot.lane.b32.xlu0 %v1715, 127
    %v1810 = vpop.permute.xlu0 %1809
    %1811 = vrot.lane.b32.xlu0 %v1716, 127
    %v1812 = vpop.permute.xlu0 %1811
    %v1845 = vadd.f32 %v1231, %v1750
    %v1846 = vadd.f32 %v1232, %v1752
    %v1847 = vadd.f32 %v1233, %v1754
    %v1848 = vadd.f32 %v1234, %v1756
    %v1849 = vadd.f32 %v1235, %v1758
    %v1850 = vadd.f32 %v1236, %v1760
    %v1851 = vadd.f32 %v1237, %v1762
    %v1852 = vadd.f32 %v1238, %v1764
    %v1853 = vadd.f32 %v1239, %v1766
    %v1854 = vadd.f32 %v1240, %v1768
    %v1855 = vadd.f32 %v1241, %v1770
    %v1856 = vadd.f32 %v1242, %v1772
    %v1857 = vadd.f32 %v1243, %v1774
    %v1858 = vadd.f32 %v1244, %v1776
    %v1859 = vadd.f32 %v1245, %v1778
    %v1860 = vadd.f32 %v1246, %v1780
    %v1861 = vadd.f32 %v1247, %v1782
    %v1862 = vadd.f32 %v1248, %v1784
    %v1863 = vadd.f32 %v1249, %v1786
    %v1864 = vadd.f32 %v1250, %v1788
    %v1865 = vadd.f32 %v1251, %v1790
    %v1866 = vadd.f32 %v1252, %v1792
    %v1867 = vadd.f32 %v1253, %v1794
    %v1868 = vadd.f32 %v1254, %v1796
    %v1869 = vadd.f32 %v1255, %v1798
    %v1870 = vadd.f32 %v1256, %v1800
    %v1871 = vadd.f32 %v1257, %v1802
    %v1872 = vadd.f32 %v1258, %v1804
    %v1873 = vadd.f32 %v1259, %v1806
    %v1874 = vadd.f32 %v1260, %v1808
    %v1875 = vadd.f32 %v1261, %v1810
    %v1876 = vadd.f32 %v1262, %v1812
    %s1877 = sld [smem:[#allocation3 + $0x15]]
    %v1878 = vstv %s1877
    %v1879 = vmul.f32 %v1878, %v1068
    %v1880 = vmul.f32 %v1878, %v1069
    %v1881 = vmul.f32 %v1878, %v1070
    %v1882 = vmul.f32 %v1878, %v1071
    %v1883 = vmul.f32 %v1878, %v1072
    %v1884 = vmul.f32 %v1878, %v1073
    %v1885 = vmul.f32 %v1878, %v1074
    %v1886 = vmul.f32 %v1878, %v1075
    %v1887 = vmul.f32 %v1878, %v1076
    %v1888 = vmul.f32 %v1878, %v1077
    %v1889 = vmul.f32 %v1878, %v1078
    %v1890 = vmul.f32 %v1878, %v1079
    %v1891 = vmul.f32 %v1878, %v1080
    %v1892 = vmul.f32 %v1878, %v1081
    %v1893 = vmul.f32 %v1878, %v1082
    %v1894 = vmul.f32 %v1878, %v1083
    %v1895 = vmul.f32 %v1878, %v1084
    %v1896 = vmul.f32 %v1878, %v1085
    %v1897 = vmul.f32 %v1878, %v1086
    %v1898 = vmul.f32 %v1878, %v1087
    %v1899 = vmul.f32 %v1878, %v1088
    %v1900 = vmul.f32 %v1878, %v1089
    %v1901 = vmul.f32 %v1878, %v1090
    %v1902 = vmul.f32 %v1878, %v1091
    %v1903 = vmul.f32 %v1878, %v1092
    %v1904 = vmul.f32 %v1878, %v1093
    %v1905 = vmul.f32 %v1878, %v1094
    %v1906 = vmul.f32 %v1878, %v1095
    %v1907 = vmul.f32 %v1878, %v1096
    %v1908 = vmul.f32 %v1878, %v1097
    %v1909 = vmul.f32 %v1878, %v1098
    %v1910 = vmul.f32 %v1878, %v1099
    %1943 = vrot.lane.b32.xlu0 %v1879, 127
    %v1944 = vpop.permute.xlu0 %1943
    %1945 = vrot.lane.b32.xlu0 %v1880, 127
    %v1946 = vpop.permute.xlu0 %1945
    %1947 = vrot.lane.b32.xlu0 %v1881, 127
    %v1948 = vpop.permute.xlu0 %1947
    %1949 = vrot.lane.b32.xlu0 %v1882, 127
    %v1950 = vpop.permute.xlu0 %1949
    %1951 = vrot.lane.b32.xlu0 %v1883, 127
    %v1952 = vpop.permute.xlu0 %1951
    %1953 = vrot.lane.b32.xlu0 %v1884, 127
    %v1954 = vpop.permute.xlu0 %1953
    %1955 = vrot.lane.b32.xlu0 %v1885, 127
    %v1956 = vpop.permute.xlu0 %1955
    %1957 = vrot.lane.b32.xlu0 %v1886, 127
    %v1958 = vpop.permute.xlu0 %1957
    %1959 = vrot.lane.b32.xlu0 %v1887, 127
    %v1960 = vpop.permute.xlu0 %1959
    %1961 = vrot.lane.b32.xlu0 %v1888, 127
    %v1962 = vpop.permute.xlu0 %1961
    %1963 = vrot.lane.b32.xlu0 %v1889, 127
    %v1964 = vpop.permute.xlu0 %1963
    %1965 = vrot.lane.b32.xlu0 %v1890, 127
    %v1966 = vpop.permute.xlu0 %1965
    %1967 = vrot.lane.b32.xlu0 %v1891, 127
    %v1968 = vpop.permute.xlu0 %1967
    %1969 = vrot.lane.b32.xlu0 %v1892, 127
    %v1970 = vpop.permute.xlu0 %1969
    %1971 = vrot.lane.b32.xlu0 %v1893, 127
    %v1972 = vpop.permute.xlu0 %1971
    %1973 = vrot.lane.b32.xlu0 %v1894, 127
    %v1974 = vpop.permute.xlu0 %1973
    %1975 = vrot.lane.b32.xlu0 %v1895, 127
    %v1976 = vpop.permute.xlu0 %1975
    %1977 = vrot.lane.b32.xlu0 %v1896, 127
    %v1978 = vpop.permute.xlu0 %1977
    %1979 = vrot.lane.b32.xlu0 %v1897, 127
    %v1980 = vpop.permute.xlu0 %1979
    %1981 = vrot.lane.b32.xlu0 %v1898, 127
    %v1982 = vpop.permute.xlu0 %1981
    %1983 = vrot.lane.b32.xlu0 %v1899, 127
    %v1984 = vpop.permute.xlu0 %1983
    %1985 = vrot.lane.b32.xlu0 %v1900, 127
    %v1986 = vpop.permute.xlu0 %1985
    %1987 = vrot.lane.b32.xlu0 %v1901, 127
    %v1988 = vpop.permute.xlu0 %1987
    %1989 = vrot.lane.b32.xlu0 %v1902, 127
    %v1990 = vpop.permute.xlu0 %1989
    %1991 = vrot.lane.b32.xlu0 %v1903, 127
    %v1992 = vpop.permute.xlu0 %1991
    %1993 = vrot.lane.b32.xlu0 %v1904, 127
    %v1994 = vpop.permute.xlu0 %1993
    %1995 = vrot.lane.b32.xlu0 %v1905, 127
    %v1996 = vpop.permute.xlu0 %1995
    %1997 = vrot.lane.b32.xlu0 %v1906, 127
    %v1998 = vpop.permute.xlu0 %1997
    %1999 = vrot.lane.b32.xlu0 %v1907, 127
    %v2000 = vpop.permute.xlu0 %1999
    %2001 = vrot.lane.b32.xlu0 %v1908, 127
    %v2002 = vpop.permute.xlu0 %2001
    %2003 = vrot.lane.b32.xlu0 %v1909, 127
    %v2004 = vpop.permute.xlu0 %2003
    %2005 = vrot.lane.b32.xlu0 %v1910, 127
    %v2006 = vpop.permute.xlu0 %2005
    %v2039 = vadd.f32 %v1457, %v1944
    %v2040 = vadd.f32 %v1458, %v1946
    %v2041 = vadd.f32 %v1459, %v1948
    %v2042 = vadd.f32 %v1460, %v1950
    %v2043 = vadd.f32 %v1461, %v1952
    %v2044 = vadd.f32 %v1462, %v1954
    %v2045 = vadd.f32 %v1463, %v1956
    %v2046 = vadd.f32 %v1464, %v1958
    %v2047 = vadd.f32 %v1465, %v1960
    %v2048 = vadd.f32 %v1466, %v1962
    %v2049 = vadd.f32 %v1467, %v1964
    %v2050 = vadd.f32 %v1468, %v1966
    %v2051 = vadd.f32 %v1469, %v1968
    %v2052 = vadd.f32 %v1470, %v1970
    %v2053 = vadd.f32 %v1471, %v1972
    %v2054 = vadd.f32 %v1472, %v1974
    %v2055 = vadd.f32 %v1473, %v1976
    %v2056 = vadd.f32 %v1474, %v1978
    %v2057 = vadd.f32 %v1475, %v1980
    %v2058 = vadd.f32 %v1476, %v1982
    %v2059 = vadd.f32 %v1477, %v1984
    %v2060 = vadd.f32 %v1478, %v1986
    %v2061 = vadd.f32 %v1479, %v1988
    %v2062 = vadd.f32 %v1480, %v1990
    %v2063 = vadd.f32 %v1481, %v1992
    %v2064 = vadd.f32 %v1482, %v1994
    %v2065 = vadd.f32 %v1483, %v1996
    %v2066 = vadd.f32 %v1484, %v1998
    %v2067 = vadd.f32 %v1485, %v2000
    %v2068 = vadd.f32 %v1486, %v2002
    %v2069 = vadd.f32 %v1487, %v2004
    %v2070 = vadd.f32 %v1488, %v2006
    %s2071 = sld [smem:[#allocation3 + $0x2]]
    %v2072 = vstv %s2071
    %v2073 = vmul.f32 %v2072, %v1068
    %v2074 = vmul.f32 %v2072, %v1069
    %v2075 = vmul.f32 %v2072, %v1070
    %v2076 = vmul.f32 %v2072, %v1071
    %v2077 = vmul.f32 %v2072, %v1072
    %v2078 = vmul.f32 %v2072, %v1073
    %v2079 = vmul.f32 %v2072, %v1074
    %v2080 = vmul.f32 %v2072, %v1075
    %v2081 = vmul.f32 %v2072, %v1076
    %v2082 = vmul.f32 %v2072, %v1077
    %v2083 = vmul.f32 %v2072, %v1078
    %v2084 = vmul.f32 %v2072, %v1079
    %v2085 = vmul.f32 %v2072, %v1080
    %v2086 = vmul.f32 %v2072, %v1081
    %v2087 = vmul.f32 %v2072, %v1082
    %v2088 = vmul.f32 %v2072, %v1083
    %v2089 = vmul.f32 %v2072, %v1084
    %v2090 = vmul.f32 %v2072, %v1085
    %v2091 = vmul.f32 %v2072, %v1086
    %v2092 = vmul.f32 %v2072, %v1087
    %v2093 = vmul.f32 %v2072, %v1088
    %v2094 = vmul.f32 %v2072, %v1089
    %v2095 = vmul.f32 %v2072, %v1090
    %v2096 = vmul.f32 %v2072, %v1091
    %v2097 = vmul.f32 %v2072, %v1092
    %v2098 = vmul.f32 %v2072, %v1093
    %v2099 = vmul.f32 %v2072, %v1094
    %v2100 = vmul.f32 %v2072, %v1095
    %v2101 = vmul.f32 %v2072, %v1096
    %v2102 = vmul.f32 %v2072, %v1097
    %v2103 = vmul.f32 %v2072, %v1098
    %v2104 = vmul.f32 %v2072, %v1099
    %2137 = vrot.lane.b32.xlu0 %v2073, 126
    %v2138 = vpop.permute.xlu0 %2137
    %2139 = vrot.lane.b32.xlu0 %v2074, 126
    %v2140 = vpop.permute.xlu0 %2139
    %2141 = vrot.lane.b32.xlu0 %v2075, 126
    %v2142 = vpop.permute.xlu0 %2141
    %2143 = vrot.lane.b32.xlu0 %v2076, 126
    %v2144 = vpop.permute.xlu0 %2143
    %2145 = vrot.lane.b32.xlu0 %v2077, 126
    %v2146 = vpop.permute.xlu0 %2145
    %2147 = vrot.lane.b32.xlu0 %v2078, 126
    %v2148 = vpop.permute.xlu0 %2147
    %2149 = vrot.lane.b32.xlu0 %v2079, 126
    %v2150 = vpop.permute.xlu0 %2149
    %2151 = vrot.lane.b32.xlu0 %v2080, 126
    %v2152 = vpop.permute.xlu0 %2151
    %2153 = vrot.lane.b32.xlu0 %v2081, 126
    %v2154 = vpop.permute.xlu0 %2153
    %2155 = vrot.lane.b32.xlu0 %v2082, 126
    %v2156 = vpop.permute.xlu0 %2155
    %2157 = vrot.lane.b32.xlu0 %v2083, 126
    %v2158 = vpop.permute.xlu0 %2157
    %2159 = vrot.lane.b32.xlu0 %v2084, 126
    %v2160 = vpop.permute.xlu0 %2159
    %2161 = vrot.lane.b32.xlu0 %v2085, 126
    %v2162 = vpop.permute.xlu0 %2161
    %2163 = vrot.lane.b32.xlu0 %v2086, 126
    %v2164 = vpop.permute.xlu0 %2163
    %2165 = vrot.lane.b32.xlu0 %v2087, 126
    %v2166 = vpop.permute.xlu0 %2165
    %2167 = vrot.lane.b32.xlu0 %v2088, 126
    %v2168 = vpop.permute.xlu0 %2167
    %2169 = vrot.lane.b32.xlu0 %v2089, 126
    %v2170 = vpop.permute.xlu0 %2169
    %2171 = vrot.lane.b32.xlu0 %v2090, 126
    %v2172 = vpop.permute.xlu0 %2171
    %2173 = vrot.lane.b32.xlu0 %v2091, 126
    %v2174 = vpop.permute.xlu0 %2173
    %2175 = vrot.lane.b32.xlu0 %v2092, 126
    %v2176 = vpop.permute.xlu0 %2175
    %2177 = vrot.lane.b32.xlu0 %v2093, 126
    %v2178 = vpop.permute.xlu0 %2177
    %2179 = vrot.lane.b32.xlu0 %v2094, 126
    %v2180 = vpop.permute.xlu0 %2179
    %2181 = vrot.lane.b32.xlu0 %v2095, 126
    %v2182 = vpop.permute.xlu0 %2181
    %2183 = vrot.lane.b32.xlu0 %v2096, 126
    %v2184 = vpop.permute.xlu0 %2183
    %2185 = vrot.lane.b32.xlu0 %v2097, 126
    %v2186 = vpop.permute.xlu0 %2185
    %2187 = vrot.lane.b32.xlu0 %v2098, 126
    %v2188 = vpop.permute.xlu0 %2187
    %2189 = vrot.lane.b32.xlu0 %v2099, 126
    %v2190 = vpop.permute.xlu0 %2189
    %2191 = vrot.lane.b32.xlu0 %v2100, 126
    %v2192 = vpop.permute.xlu0 %2191
    %2193 = vrot.lane.b32.xlu0 %v2101, 126
    %v2194 = vpop.permute.xlu0 %2193
    %2195 = vrot.lane.b32.xlu0 %v2102, 126
    %v2196 = vpop.permute.xlu0 %2195
    %2197 = vrot.lane.b32.xlu0 %v2103, 126
    %v2198 = vpop.permute.xlu0 %2197
    %2199 = vrot.lane.b32.xlu0 %v2104, 126
    %v2200 = vpop.permute.xlu0 %2199
    %v2233 = vadd.f32 %v1651, %v2138
    %v2234 = vadd.f32 %v1652, %v2140
    %v2235 = vadd.f32 %v1653, %v2142
    %v2236 = vadd.f32 %v1654, %v2144
    %v2237 = vadd.f32 %v1655, %v2146
    %v2238 = vadd.f32 %v1656, %v2148
    %v2239 = vadd.f32 %v1657, %v2150
    %v2240 = vadd.f32 %v1658, %v2152
    %v2241 = vadd.f32 %v1659, %v2154
    %v2242 = vadd.f32 %v1660, %v2156
    %v2243 = vadd.f32 %v1661, %v2158
    %v2244 = vadd.f32 %v1662, %v2160
    %v2245 = vadd.f32 %v1663, %v2162
    %v2246 = vadd.f32 %v1664, %v2164
    %v2247 = vadd.f32 %v1665, %v2166
    %v2248 = vadd.f32 %v1666, %v2168
    %v2249 = vadd.f32 %v1667, %v2170
    %v2250 = vadd.f32 %v1668, %v2172
    %v2251 = vadd.f32 %v1669, %v2174
    %v2252 = vadd.f32 %v1670, %v2176
    %v2253 = vadd.f32 %v1671, %v2178
    %v2254 = vadd.f32 %v1672, %v2180
    %v2255 = vadd.f32 %v1673, %v2182
    %v2256 = vadd.f32 %v1674, %v2184
    %v2257 = vadd.f32 %v1675, %v2186
    %v2258 = vadd.f32 %v1676, %v2188
    %v2259 = vadd.f32 %v1677, %v2190
    %v2260 = vadd.f32 %v1678, %v2192
    %v2261 = vadd.f32 %v1679, %v2194
    %v2262 = vadd.f32 %v1680, %v2196
    %v2263 = vadd.f32 %v1681, %v2198
    %v2264 = vadd.f32 %v1682, %v2200
    %s2265 = sld [smem:[#allocation3 + $0xc]]
    %v2266 = vstv %s2265
    %v2267 = vmul.f32 %v2266, %v1166
    %v2268 = vmul.f32 %v2266, %v1167
    %v2269 = vmul.f32 %v2266, %v1168
    %v2270 = vmul.f32 %v2266, %v1169
    %v2271 = vmul.f32 %v2266, %v1170
    %v2272 = vmul.f32 %v2266, %v1171
    %v2273 = vmul.f32 %v2266, %v1172
    %v2274 = vmul.f32 %v2266, %v1173
    %v2275 = vmul.f32 %v2266, %v1174
    %v2276 = vmul.f32 %v2266, %v1175
    %v2277 = vmul.f32 %v2266, %v1176
    %v2278 = vmul.f32 %v2266, %v1177
    %v2279 = vmul.f32 %v2266, %v1178
    %v2280 = vmul.f32 %v2266, %v1179
    %v2281 = vmul.f32 %v2266, %v1180
    %v2282 = vmul.f32 %v2266, %v1181
    %v2283 = vmul.f32 %v2266, %v1182
    %v2284 = vmul.f32 %v2266, %v1183
    %v2285 = vmul.f32 %v2266, %v1184
    %v2286 = vmul.f32 %v2266, %v1185
    %v2287 = vmul.f32 %v2266, %v1186
    %v2288 = vmul.f32 %v2266, %v1187
    %v2289 = vmul.f32 %v2266, %v1188
    %v2290 = vmul.f32 %v2266, %v1189
    %v2291 = vmul.f32 %v2266, %v1190
    %v2292 = vmul.f32 %v2266, %v1191
    %v2293 = vmul.f32 %v2266, %v1192
    %v2294 = vmul.f32 %v2266, %v1193
    %v2295 = vmul.f32 %v2266, %v1194
    %v2296 = vmul.f32 %v2266, %v1195
    %v2297 = vmul.f32 %v2266, %v1196
    %v2298 = vmul.f32 %v2266, %v1197
    %2331 = vrot.lane.b32.xlu0 %v2267, 126
    %v2332 = vpop.permute.xlu0 %2331
    %2333 = vrot.lane.b32.xlu0 %v2268, 126
    %v2334 = vpop.permute.xlu0 %2333
    %2335 = vrot.lane.b32.xlu0 %v2269, 126
    %v2336 = vpop.permute.xlu0 %2335
    %2337 = vrot.lane.b32.xlu0 %v2270, 126
    %v2338 = vpop.permute.xlu0 %2337
    %2339 = vrot.lane.b32.xlu0 %v2271, 126
    %v2340 = vpop.permute.xlu0 %2339
    %2341 = vrot.lane.b32.xlu0 %v2272, 126
    %v2342 = vpop.permute.xlu0 %2341
    %2343 = vrot.lane.b32.xlu0 %v2273, 126
    %v2344 = vpop.permute.xlu0 %2343
    %2345 = vrot.lane.b32.xlu0 %v2274, 126
    %v2346 = vpop.permute.xlu0 %2345
    %2347 = vrot.lane.b32.xlu0 %v2275, 126
    %v2348 = vpop.permute.xlu0 %2347
    %2349 = vrot.lane.b32.xlu0 %v2276, 126
    %v2350 = vpop.permute.xlu0 %2349
    %2351 = vrot.lane.b32.xlu0 %v2277, 126
    %v2352 = vpop.permute.xlu0 %2351
    %2353 = vrot.lane.b32.xlu0 %v2278, 126
    %v2354 = vpop.permute.xlu0 %2353
    %2355 = vrot.lane.b32.xlu0 %v2279, 126
    %v2356 = vpop.permute.xlu0 %2355
    %2357 = vrot.lane.b32.xlu0 %v2280, 126
    %v2358 = vpop.permute.xlu0 %2357
    %2359 = vrot.lane.b32.xlu0 %v2281, 126
    %v2360 = vpop.permute.xlu0 %2359
    %2361 = vrot.lane.b32.xlu0 %v2282, 126
    %v2362 = vpop.permute.xlu0 %2361
    %2363 = vrot.lane.b32.xlu0 %v2283, 126
    %v2364 = vpop.permute.xlu0 %2363
    %2365 = vrot.lane.b32.xlu0 %v2284, 126
    %v2366 = vpop.permute.xlu0 %2365
    %2367 = vrot.lane.b32.xlu0 %v2285, 126
    %v2368 = vpop.permute.xlu0 %2367
    %2369 = vrot.lane.b32.xlu0 %v2286, 126
    %v2370 = vpop.permute.xlu0 %2369
    %2371 = vrot.lane.b32.xlu0 %v2287, 126
    %v2372 = vpop.permute.xlu0 %2371
    %2373 = vrot.lane.b32.xlu0 %v2288, 126
    %v2374 = vpop.permute.xlu0 %2373
    %2375 = vrot.lane.b32.xlu0 %v2289, 126
    %v2376 = vpop.permute.xlu0 %2375
    %2377 = vrot.lane.b32.xlu0 %v2290, 126
    %v2378 = vpop.permute.xlu0 %2377
    %2379 = vrot.lane.b32.xlu0 %v2291, 126
    %v2380 = vpop.permute.xlu0 %2379
    %2381 = vrot.lane.b32.xlu0 %v2292, 126
    %v2382 = vpop.permute.xlu0 %2381
    %2383 = vrot.lane.b32.xlu0 %v2293, 126
    %v2384 = vpop.permute.xlu0 %2383
    %2385 = vrot.lane.b32.xlu0 %v2294, 126
    %v2386 = vpop.permute.xlu0 %2385
    %2387 = vrot.lane.b32.xlu0 %v2295, 126
    %v2388 = vpop.permute.xlu0 %2387
    %2389 = vrot.lane.b32.xlu0 %v2296, 126
    %v2390 = vpop.permute.xlu0 %2389
    %2391 = vrot.lane.b32.xlu0 %v2297, 126
    %v2392 = vpop.permute.xlu0 %2391
    %2393 = vrot.lane.b32.xlu0 %v2298, 126
    %v2394 = vpop.permute.xlu0 %2393
    %v2427 = vadd.f32 %v1845, %v2332
    %v2428 = vadd.f32 %v1846, %v2334
    %v2429 = vadd.f32 %v1847, %v2336
    %v2430 = vadd.f32 %v1848, %v2338
    %v2431 = vadd.f32 %v1849, %v2340
    %v2432 = vadd.f32 %v1850, %v2342
    %v2433 = vadd.f32 %v1851, %v2344
    %v2434 = vadd.f32 %v1852, %v2346
    %v2435 = vadd.f32 %v1853, %v2348
    %v2436 = vadd.f32 %v1854, %v2350
    %v2437 = vadd.f32 %v1855, %v2352
    %v2438 = vadd.f32 %v1856, %v2354
    %v2439 = vadd.f32 %v1857, %v2356
    %v2440 = vadd.f32 %v1858, %v2358
    %v2441 = vadd.f32 %v1859, %v2360
    %v2442 = vadd.f32 %v1860, %v2362
    %v2443 = vadd.f32 %v1861, %v2364
    %v2444 = vadd.f32 %v1862, %v2366
    %v2445 = vadd.f32 %v1863, %v2368
    %v2446 = vadd.f32 %v1864, %v2370
    %v2447 = vadd.f32 %v1865, %v2372
    %v2448 = vadd.f32 %v1866, %v2374
    %v2449 = vadd.f32 %v1867, %v2376
    %v2450 = vadd.f32 %v1868, %v2378
    %v2451 = vadd.f32 %v1869, %v2380
    %v2452 = vadd.f32 %v1870, %v2382
    %v2453 = vadd.f32 %v1871, %v2384
    %v2454 = vadd.f32 %v1872, %v2386
    %v2455 = vadd.f32 %v1873, %v2388
    %v2456 = vadd.f32 %v1874, %v2390
    %v2457 = vadd.f32 %v1875, %v2392
    %v2458 = vadd.f32 %v1876, %v2394
    %s2459 = sld [smem:[#allocation3 + $0x16]]
    %s2460 = scalar_lea.vmem [#allocation2], 48
    %v2461 = vld [vmem:[%s2460] sm:$0xff]
    %v2462 = vld [vmem:[%s2460 + $0x8] sm:$0xff]
    %v2463 = vld [vmem:[%s2460 + $0x18] sm:$0xff]
    %v2464 = vld [vmem:[%s2460 + $0x20] sm:$0xff]
    %v2465 = vld [vmem:[%s2460 + $0x30] sm:$0xff]
    %v2466 = vld [vmem:[%s2460 + $0x38] sm:$0xff]
    %v2467 = vld [vmem:[%s2460 + $0x48] sm:$0xff]
    %v2468 = vld [vmem:[%s2460 + $0x50] sm:$0xff]
    %v2469 = vld [vmem:[%s2460 + $0x60] sm:$0xff]
    %v2470 = vld [vmem:[%s2460 + $0x68] sm:$0xff]
    %v2471 = vld [vmem:[%s2460 + $0x78] sm:$0xff]
    %v2472 = vld [vmem:[%s2460 + $0x80] sm:$0xff]
    %v2473 = vld [vmem:[%s2460 + $0x90] sm:$0xff]
    %v2474 = vld [vmem:[%s2460 + $0x98] sm:$0xff]
    %v2475 = vld [vmem:[%s2460 + $0xa8] sm:$0xff]
    %v2476 = vld [vmem:[%s2460 + $0xb0] sm:$0xff]
    %v2477 = vld [vmem:[%s2460 + $0xf0] sm:$0xff]
    %v2478 = vld [vmem:[%s2460 + $0xf8] sm:$0xff]
    %v2479 = vld [vmem:[%s2460 + $0x108] sm:$0xff]
    %v2480 = vld [vmem:[%s2460 + $0x110] sm:$0xff]
    %v2481 = vld [vmem:[%s2460 + $0x120] sm:$0xff]
    %v2482 = vld [vmem:[%s2460 + $0x128] sm:$0xff]
    %v2483 = vld [vmem:[%s2460 + $0x138] sm:$0xff]
    %v2484 = vld [vmem:[%s2460 + $0x140] sm:$0xff]
    %v2485 = vld [vmem:[%s2460 + $0x150] sm:$0xff]
    %v2486 = vld [vmem:[%s2460 + $0x158] sm:$0xff]
    %v2487 = vld [vmem:[%s2460 + $0x168] sm:$0xff]
    %v2488 = vld [vmem:[%s2460 + $0x170] sm:$0xff]
    %v2489 = vld [vmem:[%s2460 + $0x180] sm:$0xff]
    %v2490 = vld [vmem:[%s2460 + $0x188] sm:$0xff]
    %v2491 = vld [vmem:[%s2460 + $0x198] sm:$0xff]
    %v2492 = vld [vmem:[%s2460 + $0x1a0] sm:$0xff]
    %v2493 = vstv %s2459
    %v2494 = vmul.f32 %v2493, %v2461
    %v2495 = vmul.f32 %v2493, %v2462
    %v2496 = vmul.f32 %v2493, %v2463
    %v2497 = vmul.f32 %v2493, %v2464
    %v2498 = vmul.f32 %v2493, %v2465
    %v2499 = vmul.f32 %v2493, %v2466
    %v2500 = vmul.f32 %v2493, %v2467
    %v2501 = vmul.f32 %v2493, %v2468
    %v2502 = vmul.f32 %v2493, %v2469
    %v2503 = vmul.f32 %v2493, %v2470
    %v2504 = vmul.f32 %v2493, %v2471
    %v2505 = vmul.f32 %v2493, %v2472
    %v2506 = vmul.f32 %v2493, %v2473
    %v2507 = vmul.f32 %v2493, %v2474
    %v2508 = vmul.f32 %v2493, %v2475
    %v2509 = vmul.f32 %v2493, %v2476
    %v2510 = vmul.f32 %v2493, %v2477
    %v2511 = vmul.f32 %v2493, %v2478
    %v2512 = vmul.f32 %v2493, %v2479
    %v2513 = vmul.f32 %v2493, %v2480
    %v2514 = vmul.f32 %v2493, %v2481
    %v2515 = vmul.f32 %v2493, %v2482
    %v2516 = vmul.f32 %v2493, %v2483
    %v2517 = vmul.f32 %v2493, %v2484
    %v2518 = vmul.f32 %v2493, %v2485
    %v2519 = vmul.f32 %v2493, %v2486
    %v2520 = vmul.f32 %v2493, %v2487
    %v2521 = vmul.f32 %v2493, %v2488
    %v2522 = vmul.f32 %v2493, %v2489
    %v2523 = vmul.f32 %v2493, %v2490
    %v2524 = vmul.f32 %v2493, %v2491
    %v2525 = vmul.f32 %v2493, %v2492
    %2558 = vrot.lane.b32.xlu0 %v2494, 127
    %v2559 = vpop.permute.xlu0 %2558
    %2560 = vrot.lane.b32.xlu0 %v2495, 127
    %v2561 = vpop.permute.xlu0 %2560
    %2562 = vrot.lane.b32.xlu0 %v2496, 127
    %v2563 = vpop.permute.xlu0 %2562
    %2564 = vrot.lane.b32.xlu0 %v2497, 127
    %v2565 = vpop.permute.xlu0 %2564
    %2566 = vrot.lane.b32.xlu0 %v2498, 127
    %v2567 = vpop.permute.xlu0 %2566
    %2568 = vrot.lane.b32.xlu0 %v2499, 127
    %v2569 = vpop.permute.xlu0 %2568
    %2570 = vrot.lane.b32.xlu0 %v2500, 127
    %v2571 = vpop.permute.xlu0 %2570
    %2572 = vrot.lane.b32.xlu0 %v2501, 127
    %v2573 = vpop.permute.xlu0 %2572
    %2574 = vrot.lane.b32.xlu0 %v2502, 127
    %v2575 = vpop.permute.xlu0 %2574
    %2576 = vrot.lane.b32.xlu0 %v2503, 127
    %v2577 = vpop.permute.xlu0 %2576
    %2578 = vrot.lane.b32.xlu0 %v2504, 127
    %v2579 = vpop.permute.xlu0 %2578
    %2580 = vrot.lane.b32.xlu0 %v2505, 127
    %v2581 = vpop.permute.xlu0 %2580
    %2582 = vrot.lane.b32.xlu0 %v2506, 127
    %v2583 = vpop.permute.xlu0 %2582
    %2584 = vrot.lane.b32.xlu0 %v2507, 127
    %v2585 = vpop.permute.xlu0 %2584
    %2586 = vrot.lane.b32.xlu0 %v2508, 127
    %v2587 = vpop.permute.xlu0 %2586
    %2588 = vrot.lane.b32.xlu0 %v2509, 127
    %v2589 = vpop.permute.xlu0 %2588
    %2590 = vrot.lane.b32.xlu0 %v2510, 127
    %v2591 = vpop.permute.xlu0 %2590
    %2592 = vrot.lane.b32.xlu0 %v2511, 127
    %v2593 = vpop.permute.xlu0 %2592
    %2594 = vrot.lane.b32.xlu0 %v2512, 127
    %v2595 = vpop.permute.xlu0 %2594
    %2596 = vrot.lane.b32.xlu0 %v2513, 127
    %v2597 = vpop.permute.xlu0 %2596
    %2598 = vrot.lane.b32.xlu0 %v2514, 127
    %v2599 = vpop.permute.xlu0 %2598
    %2600 = vrot.lane.b32.xlu0 %v2515, 127
    %v2601 = vpop.permute.xlu0 %2600
    %2602 = vrot.lane.b32.xlu0 %v2516, 127
    %v2603 = vpop.permute.xlu0 %2602
    %2604 = vrot.lane.b32.xlu0 %v2517, 127
    %v2605 = vpop.permute.xlu0 %2604
    %2606 = vrot.lane.b32.xlu0 %v2518, 127
    %v2607 = vpop.permute.xlu0 %2606
    %2608 = vrot.lane.b32.xlu0 %v2519, 127
    %v2609 = vpop.permute.xlu0 %2608
    %2610 = vrot.lane.b32.xlu0 %v2520, 127
    %v2611 = vpop.permute.xlu0 %2610
    %2612 = vrot.lane.b32.xlu0 %v2521, 127
    %v2613 = vpop.permute.xlu0 %2612
    %2614 = vrot.lane.b32.xlu0 %v2522, 127
    %v2615 = vpop.permute.xlu0 %2614
    %2616 = vrot.lane.b32.xlu0 %v2523, 127
    %v2617 = vpop.permute.xlu0 %2616
    %2618 = vrot.lane.b32.xlu0 %v2524, 127
    %v2619 = vpop.permute.xlu0 %2618
    %2620 = vrot.lane.b32.xlu0 %v2525, 127
    %v2621 = vpop.permute.xlu0 %2620
    %v2654 = vadd.f32 %v2039, %v2559
    %v2655 = vadd.f32 %v2040, %v2561
    %v2656 = vadd.f32 %v2041, %v2563
    %v2657 = vadd.f32 %v2042, %v2565
    %v2658 = vadd.f32 %v2043, %v2567
    %v2659 = vadd.f32 %v2044, %v2569
    %v2660 = vadd.f32 %v2045, %v2571
    %v2661 = vadd.f32 %v2046, %v2573
    %v2662 = vadd.f32 %v2047, %v2575
    %v2663 = vadd.f32 %v2048, %v2577
    %v2664 = vadd.f32 %v2049, %v2579
    %v2665 = vadd.f32 %v2050, %v2581
    %v2666 = vadd.f32 %v2051, %v2583
    %v2667 = vadd.f32 %v2052, %v2585
    %v2668 = vadd.f32 %v2053, %v2587
    %v2669 = vadd.f32 %v2054, %v2589
    %v2670 = vadd.f32 %v2055, %v2591
    %v2671 = vadd.f32 %v2056, %v2593
    %v2672 = vadd.f32 %v2057, %v2595
    %v2673 = vadd.f32 %v2058, %v2597
    %v2674 = vadd.f32 %v2059, %v2599
    %v2675 = vadd.f32 %v2060, %v2601
    %v2676 = vadd.f32 %v2061, %v2603
    %v2677 = vadd.f32 %v2062, %v2605
    %v2678 = vadd.f32 %v2063, %v2607
    %v2679 = vadd.f32 %v2064, %v2609
    %v2680 = vadd.f32 %v2065, %v2611
    %v2681 = vadd.f32 %v2066, %v2613
    %v2682 = vadd.f32 %v2067, %v2615
    %v2683 = vadd.f32 %v2068, %v2617
    %v2684 = vadd.f32 %v2069, %v2619
    %v2685 = vadd.f32 %v2070, %v2621
    %s2686 = sld [smem:[#allocation3 + $0x3]]
    %v2687 = vld [vmem:[%s246 + $0x1] sm:$0xff]
    %v2688 = vld [vmem:[%s246 + $0x9] sm:$0xff]
    %v2689 = vld [vmem:[%s246 + $0x19] sm:$0xff]
    %v2690 = vld [vmem:[%s246 + $0x21] sm:$0xff]
    %v2691 = vld [vmem:[%s246 + $0x31] sm:$0xff]
    %v2692 = vld [vmem:[%s246 + $0x39] sm:$0xff]
    %v2693 = vld [vmem:[%s246 + $0x49] sm:$0xff]
    %v2694 = vld [vmem:[%s246 + $0x51] sm:$0xff]
    %v2695 = vld [vmem:[%s246 + $0x61] sm:$0xff]
    %v2696 = vld [vmem:[%s246 + $0x69] sm:$0xff]
    %v2697 = vld [vmem:[%s246 + $0x79] sm:$0xff]
    %v2698 = vld [vmem:[%s246 + $0x81] sm:$0xff]
    %v2699 = vld [vmem:[%s246 + $0x91] sm:$0xff]
    %v2700 = vld [vmem:[%s246 + $0x99] sm:$0xff]
    %v2701 = vld [vmem:[%s246 + $0xa9] sm:$0xff]
    %v2702 = vld [vmem:[%s246 + $0xb1] sm:$0xff]
    %v2703 = vld [vmem:[%s246 + $0xf1] sm:$0xff]
    %v2704 = vld [vmem:[%s246 + $0xf9] sm:$0xff]
    %v2705 = vld [vmem:[%s246 + $0x109] sm:$0xff]
    %v2706 = vld [vmem:[%s246 + $0x111] sm:$0xff]
    %v2707 = vld [vmem:[%s246 + $0x121] sm:$0xff]
    %v2708 = vld [vmem:[%s246 + $0x129] sm:$0xff]
    %v2709 = vld [vmem:[%s246 + $0x139] sm:$0xff]
    %v2710 = vld [vmem:[%s246 + $0x141] sm:$0xff]
    %v2711 = vld [vmem:[%s246 + $0x151] sm:$0xff]
    %v2712 = vld [vmem:[%s246 + $0x159] sm:$0xff]
    %v2713 = vld [vmem:[%s246 + $0x169] sm:$0xff]
    %v2714 = vld [vmem:[%s246 + $0x171] sm:$0xff]
    %v2715 = vld [vmem:[%s246 + $0x181] sm:$0xff]
    %v2716 = vld [vmem:[%s246 + $0x189] sm:$0xff]
    %v2717 = vld [vmem:[%s246 + $0x199] sm:$0xff]
    %v2718 = vld [vmem:[%s246 + $0x1a1] sm:$0xff]
    %v2719 = vstv %s2686
    %v2720 = vmul.f32 %v2719, %v2687
    %v2721 = vmul.f32 %v2719, %v2688
    %v2722 = vmul.f32 %v2719, %v2689
    %v2723 = vmul.f32 %v2719, %v2690
    %v2724 = vmul.f32 %v2719, %v2691
    %v2725 = vmul.f32 %v2719, %v2692
    %v2726 = vmul.f32 %v2719, %v2693
    %v2727 = vmul.f32 %v2719, %v2694
    %v2728 = vmul.f32 %v2719, %v2695
    %v2729 = vmul.f32 %v2719, %v2696
    %v2730 = vmul.f32 %v2719, %v2697
    %v2731 = vmul.f32 %v2719, %v2698
    %v2732 = vmul.f32 %v2719, %v2699
    %v2733 = vmul.f32 %v2719, %v2700
    %v2734 = vmul.f32 %v2719, %v2701
    %v2735 = vmul.f32 %v2719, %v2702
    %v2736 = vmul.f32 %v2719, %v2703
    %v2737 = vmul.f32 %v2719, %v2704
    %v2738 = vmul.f32 %v2719, %v2705
    %v2739 = vmul.f32 %v2719, %v2706
    %v2740 = vmul.f32 %v2719, %v2707
    %v2741 = vmul.f32 %v2719, %v2708
    %v2742 = vmul.f32 %v2719, %v2709
    %v2743 = vmul.f32 %v2719, %v2710
    %v2744 = vmul.f32 %v2719, %v2711
    %v2745 = vmul.f32 %v2719, %v2712
    %v2746 = vmul.f32 %v2719, %v2713
    %v2747 = vmul.f32 %v2719, %v2714
    %v2748 = vmul.f32 %v2719, %v2715
    %v2749 = vmul.f32 %v2719, %v2716
    %v2750 = vmul.f32 %v2719, %v2717
    %v2751 = vmul.f32 %v2719, %v2718
    %v2752 = vadd.f32 %v2233, %v2720
    %v2753 = vadd.f32 %v2234, %v2721
    %v2754 = vadd.f32 %v2235, %v2722
    %v2755 = vadd.f32 %v2236, %v2723
    %v2756 = vadd.f32 %v2237, %v2724
    %v2757 = vadd.f32 %v2238, %v2725
    %v2758 = vadd.f32 %v2239, %v2726
    %v2759 = vadd.f32 %v2240, %v2727
    %v2760 = vadd.f32 %v2241, %v2728
    %v2761 = vadd.f32 %v2242, %v2729
    %v2762 = vadd.f32 %v2243, %v2730
    %v2763 = vadd.f32 %v2244, %v2731
    %v2764 = vadd.f32 %v2245, %v2732
    %v2765 = vadd.f32 %v2246, %v2733
    %v2766 = vadd.f32 %v2247, %v2734
    %v2767 = vadd.f32 %v2248, %v2735
    %v2768 = vadd.f32 %v2249, %v2736
    %v2769 = vadd.f32 %v2250, %v2737
    %v2770 = vadd.f32 %v2251, %v2738
    %v2771 = vadd.f32 %v2252, %v2739
    %v2772 = vadd.f32 %v2253, %v2740
    %v2773 = vadd.f32 %v2254, %v2741
    %v2774 = vadd.f32 %v2255, %v2742
    %v2775 = vadd.f32 %v2256, %v2743
    %v2776 = vadd.f32 %v2257, %v2744
    %v2777 = vadd.f32 %v2258, %v2745
    %v2778 = vadd.f32 %v2259, %v2746
    %v2779 = vadd.f32 %v2260, %v2747
    %v2780 = vadd.f32 %v2261, %v2748
    %v2781 = vadd.f32 %v2262, %v2749
    %v2782 = vadd.f32 %v2263, %v2750
    %v2783 = vadd.f32 %v2264, %v2751
    %s2784 = sld [smem:[#allocation3 + $0xd]]
    %v2785 = vstv %s2784
    %v2786 = vmul.f32 %v2785, %v2687
    %v2787 = vmul.f32 %v2785, %v2688
    %v2788 = vmul.f32 %v2785, %v2689
    %v2789 = vmul.f32 %v2785, %v2690
    %v2790 = vmul.f32 %v2785, %v2691
    %v2791 = vmul.f32 %v2785, %v2692
    %v2792 = vmul.f32 %v2785, %v2693
    %v2793 = vmul.f32 %v2785, %v2694
    %v2794 = vmul.f32 %v2785, %v2695
    %v2795 = vmul.f32 %v2785, %v2696
    %v2796 = vmul.f32 %v2785, %v2697
    %v2797 = vmul.f32 %v2785, %v2698
    %v2798 = vmul.f32 %v2785, %v2699
    %v2799 = vmul.f32 %v2785, %v2700
    %v2800 = vmul.f32 %v2785, %v2701
    %v2801 = vmul.f32 %v2785, %v2702
    %v2802 = vmul.f32 %v2785, %v2703
    %v2803 = vmul.f32 %v2785, %v2704
    %v2804 = vmul.f32 %v2785, %v2705
    %v2805 = vmul.f32 %v2785, %v2706
    %v2806 = vmul.f32 %v2785, %v2707
    %v2807 = vmul.f32 %v2785, %v2708
    %v2808 = vmul.f32 %v2785, %v2709
    %v2809 = vmul.f32 %v2785, %v2710
    %v2810 = vmul.f32 %v2785, %v2711
    %v2811 = vmul.f32 %v2785, %v2712
    %v2812 = vmul.f32 %v2785, %v2713
    %v2813 = vmul.f32 %v2785, %v2714
    %v2814 = vmul.f32 %v2785, %v2715
    %v2815 = vmul.f32 %v2785, %v2716
    %v2816 = vmul.f32 %v2785, %v2717
    %v2817 = vmul.f32 %v2785, %v2718
    %v2818 = vadd.f32 %v2427, %v2786
    %v2819 = vadd.f32 %v2428, %v2787
    %v2820 = vadd.f32 %v2429, %v2788
    %v2821 = vadd.f32 %v2430, %v2789
    %v2822 = vadd.f32 %v2431, %v2790
    %v2823 = vadd.f32 %v2432, %v2791
    %v2824 = vadd.f32 %v2433, %v2792
    %v2825 = vadd.f32 %v2434, %v2793
    %v2826 = vadd.f32 %v2435, %v2794
    %v2827 = vadd.f32 %v2436, %v2795
    %v2828 = vadd.f32 %v2437, %v2796
    %v2829 = vadd.f32 %v2438, %v2797
    %v2830 = vadd.f32 %v2439, %v2798
    %v2831 = vadd.f32 %v2440, %v2799
    %v2832 = vadd.f32 %v2441, %v2800
    %v2833 = vadd.f32 %v2442, %v2801
    %v2834 = vadd.f32 %v2443, %v2802
    %v2835 = vadd.f32 %v2444, %v2803
    %v2836 = vadd.f32 %v2445, %v2804
    %v2837 = vadd.f32 %v2446, %v2805
    %v2838 = vadd.f32 %v2447, %v2806
    %v2839 = vadd.f32 %v2448, %v2807
    %v2840 = vadd.f32 %v2449, %v2808
    %v2841 = vadd.f32 %v2450, %v2809
    %v2842 = vadd.f32 %v2451, %v2810
    %v2843 = vadd.f32 %v2452, %v2811
    %v2844 = vadd.f32 %v2453, %v2812
    %v2845 = vadd.f32 %v2454, %v2813
    %v2846 = vadd.f32 %v2455, %v2814
    %v2847 = vadd.f32 %v2456, %v2815
    %v2848 = vadd.f32 %v2457, %v2816
    %v2849 = vadd.f32 %v2458, %v2817
    %s2850 = sld [smem:[#allocation3 + $0x17]]
    %v2851 = vstv %s2850
    %v2852 = vmul.f32 %v2851, %v1166
    %v2853 = vmul.f32 %v2851, %v1167
    %v2854 = vmul.f32 %v2851, %v1168
    %v2855 = vmul.f32 %v2851, %v1169
    %v2856 = vmul.f32 %v2851, %v1170
    %v2857 = vmul.f32 %v2851, %v1171
    %v2858 = vmul.f32 %v2851, %v1172
    %v2859 = vmul.f32 %v2851, %v1173
    %v2860 = vmul.f32 %v2851, %v1174
    %v2861 = vmul.f32 %v2851, %v1175
    %v2862 = vmul.f32 %v2851, %v1176
    %v2863 = vmul.f32 %v2851, %v1177
    %v2864 = vmul.f32 %v2851, %v1178
    %v2865 = vmul.f32 %v2851, %v1179
    %v2866 = vmul.f32 %v2851, %v1180
    %v2867 = vmul.f32 %v2851, %v1181
    %v2868 = vmul.f32 %v2851, %v1182
    %v2869 = vmul.f32 %v2851, %v1183
    %v2870 = vmul.f32 %v2851, %v1184
    %v2871 = vmul.f32 %v2851, %v1185
    %v2872 = vmul.f32 %v2851, %v1186
    %v2873 = vmul.f32 %v2851, %v1187
    %v2874 = vmul.f32 %v2851, %v1188
    %v2875 = vmul.f32 %v2851, %v1189
    %v2876 = vmul.f32 %v2851, %v1190
    %v2877 = vmul.f32 %v2851, %v1191
    %v2878 = vmul.f32 %v2851, %v1192
    %v2879 = vmul.f32 %v2851, %v1193
    %v2880 = vmul.f32 %v2851, %v1194
    %v2881 = vmul.f32 %v2851, %v1195
    %v2882 = vmul.f32 %v2851, %v1196
    %v2883 = vmul.f32 %v2851, %v1197
    %2916 = vrot.lane.b32.xlu0 %v2852, 127
    %v2917 = vpop.permute.xlu0 %2916
    %2918 = vrot.lane.b32.xlu0 %v2853, 127
    %v2919 = vpop.permute.xlu0 %2918
    %2920 = vrot.lane.b32.xlu0 %v2854, 127
    %v2921 = vpop.permute.xlu0 %2920
    %2922 = vrot.lane.b32.xlu0 %v2855, 127
    %v2923 = vpop.permute.xlu0 %2922
    %2924 = vrot.lane.b32.xlu0 %v2856, 127
    %v2925 = vpop.permute.xlu0 %2924
    %2926 = vrot.lane.b32.xlu0 %v2857, 127
    %v2927 = vpop.permute.xlu0 %2926
    %2928 = vrot.lane.b32.xlu0 %v2858, 127
    %v2929 = vpop.permute.xlu0 %2928
    %2930 = vrot.lane.b32.xlu0 %v2859, 127
    %v2931 = vpop.permute.xlu0 %2930
    %2932 = vrot.lane.b32.xlu0 %v2860, 127
    %v2933 = vpop.permute.xlu0 %2932
    %2934 = vrot.lane.b32.xlu0 %v2861, 127
    %v2935 = vpop.permute.xlu0 %2934
    %2936 = vrot.lane.b32.xlu0 %v2862, 127
    %v2937 = vpop.permute.xlu0 %2936
    %2938 = vrot.lane.b32.xlu0 %v2863, 127
    %v2939 = vpop.permute.xlu0 %2938
    %2940 = vrot.lane.b32.xlu0 %v2864, 127
    %v2941 = vpop.permute.xlu0 %2940
    %2942 = vrot.lane.b32.xlu0 %v2865, 127
    %v2943 = vpop.permute.xlu0 %2942
    %2944 = vrot.lane.b32.xlu0 %v2866, 127
    %v2945 = vpop.permute.xlu0 %2944
    %2946 = vrot.lane.b32.xlu0 %v2867, 127
    %v2947 = vpop.permute.xlu0 %2946
    %2948 = vrot.lane.b32.xlu0 %v2868, 127
    %v2949 = vpop.permute.xlu0 %2948
    %2950 = vrot.lane.b32.xlu0 %v2869, 127
    %v2951 = vpop.permute.xlu0 %2950
    %2952 = vrot.lane.b32.xlu0 %v2870, 127
    %v2953 = vpop.permute.xlu0 %2952
    %2954 = vrot.lane.b32.xlu0 %v2871, 127
    %v2955 = vpop.permute.xlu0 %2954
    %2956 = vrot.lane.b32.xlu0 %v2872, 127
    %v2957 = vpop.permute.xlu0 %2956
    %2958 = vrot.lane.b32.xlu0 %v2873, 127
    %v2959 = vpop.permute.xlu0 %2958
    %2960 = vrot.lane.b32.xlu0 %v2874, 127
    %v2961 = vpop.permute.xlu0 %2960
    %2962 = vrot.lane.b32.xlu0 %v2875, 127
    %v2963 = vpop.permute.xlu0 %2962
    %2964 = vrot.lane.b32.xlu0 %v2876, 127
    %v2965 = vpop.permute.xlu0 %2964
    %2966 = vrot.lane.b32.xlu0 %v2877, 127
    %v2967 = vpop.permute.xlu0 %2966
    %2968 = vrot.lane.b32.xlu0 %v2878, 127
    %v2969 = vpop.permute.xlu0 %2968
    %2970 = vrot.lane.b32.xlu0 %v2879, 127
    %v2971 = vpop.permute.xlu0 %2970
    %2972 = vrot.lane.b32.xlu0 %v2880, 127
    %v2973 = vpop.permute.xlu0 %2972
    %2974 = vrot.lane.b32.xlu0 %v2881, 127
    %v2975 = vpop.permute.xlu0 %2974
    %2976 = vrot.lane.b32.xlu0 %v2882, 127
    %v2977 = vpop.permute.xlu0 %2976
    %2978 = vrot.lane.b32.xlu0 %v2883, 127
    %v2979 = vpop.permute.xlu0 %2978
    %v3012 = vadd.f32 %v2654, %v2917
    %v3013 = vadd.f32 %v2655, %v2919
    %v3014 = vadd.f32 %v2656, %v2921
    %v3015 = vadd.f32 %v2657, %v2923
    %v3016 = vadd.f32 %v2658, %v2925
    %v3017 = vadd.f32 %v2659, %v2927
    %v3018 = vadd.f32 %v2660, %v2929
    %v3019 = vadd.f32 %v2661, %v2931
    %v3020 = vadd.f32 %v2662, %v2933
    %v3021 = vadd.f32 %v2663, %v2935
    %v3022 = vadd.f32 %v2664, %v2937
    %v3023 = vadd.f32 %v2665, %v2939
    %v3024 = vadd.f32 %v2666, %v2941
    %v3025 = vadd.f32 %v2667, %v2943
    %v3026 = vadd.f32 %v2668, %v2945
    %v3027 = vadd.f32 %v2669, %v2947
    %v3028 = vadd.f32 %v2670, %v2949
    %v3029 = vadd.f32 %v2671, %v2951
    %v3030 = vadd.f32 %v2672, %v2953
    %v3031 = vadd.f32 %v2673, %v2955
    %v3032 = vadd.f32 %v2674, %v2957
    %v3033 = vadd.f32 %v2675, %v2959
    %v3034 = vadd.f32 %v2676, %v2961
    %v3035 = vadd.f32 %v2677, %v2963
    %v3036 = vadd.f32 %v2678, %v2965
    %v3037 = vadd.f32 %v2679, %v2967
    %v3038 = vadd.f32 %v2680, %v2969
    %v3039 = vadd.f32 %v2681, %v2971
    %v3040 = vadd.f32 %v2682, %v2973
    %v3041 = vadd.f32 %v2683, %v2975
    %v3042 = vadd.f32 %v2684, %v2977
    %v3043 = vadd.f32 %v2685, %v2979
    %s3044 = sld [smem:[#allocation3 + $0x5]]
    %v3045 = vstv %s3044
    %v3046 = vmul.f32 %v3045, %v2687
    %v3047 = vmul.f32 %v3045, %v2688
    %v3048 = vmul.f32 %v3045, %v2689
    %v3049 = vmul.f32 %v3045, %v2690
    %v3050 = vmul.f32 %v3045, %v2691
    %v3051 = vmul.f32 %v3045, %v2692
    %v3052 = vmul.f32 %v3045, %v2693
    %v3053 = vmul.f32 %v3045, %v2694
    %v3054 = vmul.f32 %v3045, %v2695
    %v3055 = vmul.f32 %v3045, %v2696
    %v3056 = vmul.f32 %v3045, %v2697
    %v3057 = vmul.f32 %v3045, %v2698
    %v3058 = vmul.f32 %v3045, %v2699
    %v3059 = vmul.f32 %v3045, %v2700
    %v3060 = vmul.f32 %v3045, %v2701
    %v3061 = vmul.f32 %v3045, %v2702
    %v3062 = vmul.f32 %v3045, %v2703
    %v3063 = vmul.f32 %v3045, %v2704
    %v3064 = vmul.f32 %v3045, %v2705
    %v3065 = vmul.f32 %v3045, %v2706
    %v3066 = vmul.f32 %v3045, %v2707
    %v3067 = vmul.f32 %v3045, %v2708
    %v3068 = vmul.f32 %v3045, %v2709
    %v3069 = vmul.f32 %v3045, %v2710
    %v3070 = vmul.f32 %v3045, %v2711
    %v3071 = vmul.f32 %v3045, %v2712
    %v3072 = vmul.f32 %v3045, %v2713
    %v3073 = vmul.f32 %v3045, %v2714
    %v3074 = vmul.f32 %v3045, %v2715
    %v3075 = vmul.f32 %v3045, %v2716
    %v3076 = vmul.f32 %v3045, %v2717
    %v3077 = vmul.f32 %v3045, %v2718
    %3110 = vrot.lane.b32.xlu0 %v3046, 126
    %v3111 = vpop.permute.xlu0 %3110
    %3112 = vrot.lane.b32.xlu0 %v3047, 126
    %v3113 = vpop.permute.xlu0 %3112
    %3114 = vrot.lane.b32.xlu0 %v3048, 126
    %v3115 = vpop.permute.xlu0 %3114
    %3116 = vrot.lane.b32.xlu0 %v3049, 126
    %v3117 = vpop.permute.xlu0 %3116
    %3118 = vrot.lane.b32.xlu0 %v3050, 126
    %v3119 = vpop.permute.xlu0 %3118
    %3120 = vrot.lane.b32.xlu0 %v3051, 126
    %v3121 = vpop.permute.xlu0 %3120
    %3122 = vrot.lane.b32.xlu0 %v3052, 126
    %v3123 = vpop.permute.xlu0 %3122
    %3124 = vrot.lane.b32.xlu0 %v3053, 126
    %v3125 = vpop.permute.xlu0 %3124
    %3126 = vrot.lane.b32.xlu0 %v3054, 126
    %v3127 = vpop.permute.xlu0 %3126
    %3128 = vrot.lane.b32.xlu0 %v3055, 126
    %v3129 = vpop.permute.xlu0 %3128
    %3130 = vrot.lane.b32.xlu0 %v3056, 126
    %v3131 = vpop.permute.xlu0 %3130
    %3132 = vrot.lane.b32.xlu0 %v3057, 126
    %v3133 = vpop.permute.xlu0 %3132
    %3134 = vrot.lane.b32.xlu0 %v3058, 126
    %v3135 = vpop.permute.xlu0 %3134
    %3136 = vrot.lane.b32.xlu0 %v3059, 126
    %v3137 = vpop.permute.xlu0 %3136
    %3138 = vrot.lane.b32.xlu0 %v3060, 126
    %v3139 = vpop.permute.xlu0 %3138
    %3140 = vrot.lane.b32.xlu0 %v3061, 126
    %v3141 = vpop.permute.xlu0 %3140
    %3142 = vrot.lane.b32.xlu0 %v3062, 126
    %v3143 = vpop.permute.xlu0 %3142
    %3144 = vrot.lane.b32.xlu0 %v3063, 126
    %v3145 = vpop.permute.xlu0 %3144
    %3146 = vrot.lane.b32.xlu0 %v3064, 126
    %v3147 = vpop.permute.xlu0 %3146
    %3148 = vrot.lane.b32.xlu0 %v3065, 126
    %v3149 = vpop.permute.xlu0 %3148
    %3150 = vrot.lane.b32.xlu0 %v3066, 126
    %v3151 = vpop.permute.xlu0 %3150
    %3152 = vrot.lane.b32.xlu0 %v3067, 126
    %v3153 = vpop.permute.xlu0 %3152
    %3154 = vrot.lane.b32.xlu0 %v3068, 126
    %v3155 = vpop.permute.xlu0 %3154
    %3156 = vrot.lane.b32.xlu0 %v3069, 126
    %v3157 = vpop.permute.xlu0 %3156
    %3158 = vrot.lane.b32.xlu0 %v3070, 126
    %v3159 = vpop.permute.xlu0 %3158
    %3160 = vrot.lane.b32.xlu0 %v3071, 126
    %v3161 = vpop.permute.xlu0 %3160
    %3162 = vrot.lane.b32.xlu0 %v3072, 126
    %v3163 = vpop.permute.xlu0 %3162
    %3164 = vrot.lane.b32.xlu0 %v3073, 126
    %v3165 = vpop.permute.xlu0 %3164
    %3166 = vrot.lane.b32.xlu0 %v3074, 126
    %v3167 = vpop.permute.xlu0 %3166
    %3168 = vrot.lane.b32.xlu0 %v3075, 126
    %v3169 = vpop.permute.xlu0 %3168
    %3170 = vrot.lane.b32.xlu0 %v3076, 126
    %v3171 = vpop.permute.xlu0 %3170
    %3172 = vrot.lane.b32.xlu0 %v3077, 126
    %v3173 = vpop.permute.xlu0 %3172
    %v3206 = vadd.f32 %v2752, %v3111
    %v3207 = vadd.f32 %v2753, %v3113
    %v3208 = vadd.f32 %v2754, %v3115
    %v3209 = vadd.f32 %v2755, %v3117
    %v3210 = vadd.f32 %v2756, %v3119
    %v3211 = vadd.f32 %v2757, %v3121
    %v3212 = vadd.f32 %v2758, %v3123
    %v3213 = vadd.f32 %v2759, %v3125
    %v3214 = vadd.f32 %v2760, %v3127
    %v3215 = vadd.f32 %v2761, %v3129
    %v3216 = vadd.f32 %v2762, %v3131
    %v3217 = vadd.f32 %v2763, %v3133
    %v3218 = vadd.f32 %v2764, %v3135
    %v3219 = vadd.f32 %v2765, %v3137
    %v3220 = vadd.f32 %v2766, %v3139
    %v3221 = vadd.f32 %v2767, %v3141
    %v3222 = vadd.f32 %v2768, %v3143
    %v3223 = vadd.f32 %v2769, %v3145
    %v3224 = vadd.f32 %v2770, %v3147
    %v3225 = vadd.f32 %v2771, %v3149
    %v3226 = vadd.f32 %v2772, %v3151
    %v3227 = vadd.f32 %v2773, %v3153
    %v3228 = vadd.f32 %v2774, %v3155
    %v3229 = vadd.f32 %v2775, %v3157
    %v3230 = vadd.f32 %v2776, %v3159
    %v3231 = vadd.f32 %v2777, %v3161
    %v3232 = vadd.f32 %v2778, %v3163
    %v3233 = vadd.f32 %v2779, %v3165
    %v3234 = vadd.f32 %v2780, %v3167
    %v3235 = vadd.f32 %v2781, %v3169
    %v3236 = vadd.f32 %v2782, %v3171
    %v3237 = vadd.f32 %v2783, %v3173
    %s3238 = sld [smem:[#allocation3 + $0xf]]
    %v3239 = vstv %s3238
    %v3240 = vmul.f32 %v3239, %v2687
    %v3241 = vmul.f32 %v3239, %v2688
    %v3242 = vmul.f32 %v3239, %v2689
    %v3243 = vmul.f32 %v3239, %v2690
    %v3244 = vmul.f32 %v3239, %v2691
    %v3245 = vmul.f32 %v3239, %v2692
    %v3246 = vmul.f32 %v3239, %v2693
    %v3247 = vmul.f32 %v3239, %v2694
    %v3248 = vmul.f32 %v3239, %v2695
    %v3249 = vmul.f32 %v3239, %v2696
    %v3250 = vmul.f32 %v3239, %v2697
    %v3251 = vmul.f32 %v3239, %v2698
    %v3252 = vmul.f32 %v3239, %v2699
    %v3253 = vmul.f32 %v3239, %v2700
    %v3254 = vmul.f32 %v3239, %v2701
    %v3255 = vmul.f32 %v3239, %v2702
    %v3256 = vmul.f32 %v3239, %v2703
    %v3257 = vmul.f32 %v3239, %v2704
    %v3258 = vmul.f32 %v3239, %v2705
    %v3259 = vmul.f32 %v3239, %v2706
    %v3260 = vmul.f32 %v3239, %v2707
    %v3261 = vmul.f32 %v3239, %v2708
    %v3262 = vmul.f32 %v3239, %v2709
    %v3263 = vmul.f32 %v3239, %v2710
    %v3264 = vmul.f32 %v3239, %v2711
    %v3265 = vmul.f32 %v3239, %v2712
    %v3266 = vmul.f32 %v3239, %v2713
    %v3267 = vmul.f32 %v3239, %v2714
    %v3268 = vmul.f32 %v3239, %v2715
    %v3269 = vmul.f32 %v3239, %v2716
    %v3270 = vmul.f32 %v3239, %v2717
    %v3271 = vmul.f32 %v3239, %v2718
    %3304 = vrot.lane.b32.xlu0 %v3240, 126
    %v3305 = vpop.permute.xlu0 %3304
    %3306 = vrot.lane.b32.xlu0 %v3241, 126
    %v3307 = vpop.permute.xlu0 %3306
    %3308 = vrot.lane.b32.xlu0 %v3242, 126
    %v3309 = vpop.permute.xlu0 %3308
    %3310 = vrot.lane.b32.xlu0 %v3243, 126
    %v3311 = vpop.permute.xlu0 %3310
    %3312 = vrot.lane.b32.xlu0 %v3244, 126
    %v3313 = vpop.permute.xlu0 %3312
    %3314 = vrot.lane.b32.xlu0 %v3245, 126
    %v3315 = vpop.permute.xlu0 %3314
    %3316 = vrot.lane.b32.xlu0 %v3246, 126
    %v3317 = vpop.permute.xlu0 %3316
    %3318 = vrot.lane.b32.xlu0 %v3247, 126
    %v3319 = vpop.permute.xlu0 %3318
    %3320 = vrot.lane.b32.xlu0 %v3248, 126
    %v3321 = vpop.permute.xlu0 %3320
    %3322 = vrot.lane.b32.xlu0 %v3249, 126
    %v3323 = vpop.permute.xlu0 %3322
    %3324 = vrot.lane.b32.xlu0 %v3250, 126
    %v3325 = vpop.permute.xlu0 %3324
    %3326 = vrot.lane.b32.xlu0 %v3251, 126
    %v3327 = vpop.permute.xlu0 %3326
    %3328 = vrot.lane.b32.xlu0 %v3252, 126
    %v3329 = vpop.permute.xlu0 %3328
    %3330 = vrot.lane.b32.xlu0 %v3253, 126
    %v3331 = vpop.permute.xlu0 %3330
    %3332 = vrot.lane.b32.xlu0 %v3254, 126
    %v3333 = vpop.permute.xlu0 %3332
    %3334 = vrot.lane.b32.xlu0 %v3255, 126
    %v3335 = vpop.permute.xlu0 %3334
    %3336 = vrot.lane.b32.xlu0 %v3256, 126
    %v3337 = vpop.permute.xlu0 %3336
    %3338 = vrot.lane.b32.xlu0 %v3257, 126
    %v3339 = vpop.permute.xlu0 %3338
    %3340 = vrot.lane.b32.xlu0 %v3258, 126
    %v3341 = vpop.permute.xlu0 %3340
    %3342 = vrot.lane.b32.xlu0 %v3259, 126
    %v3343 = vpop.permute.xlu0 %3342
    %3344 = vrot.lane.b32.xlu0 %v3260, 126
    %v3345 = vpop.permute.xlu0 %3344
    %3346 = vrot.lane.b32.xlu0 %v3261, 126
    %v3347 = vpop.permute.xlu0 %3346
    %3348 = vrot.lane.b32.xlu0 %v3262, 126
    %v3349 = vpop.permute.xlu0 %3348
    %3350 = vrot.lane.b32.xlu0 %v3263, 126
    %v3351 = vpop.permute.xlu0 %3350
    %3352 = vrot.lane.b32.xlu0 %v3264, 126
    %v3353 = vpop.permute.xlu0 %3352
    %3354 = vrot.lane.b32.xlu0 %v3265, 126
    %v3355 = vpop.permute.xlu0 %3354
    %3356 = vrot.lane.b32.xlu0 %v3266, 126
    %v3357 = vpop.permute.xlu0 %3356
    %3358 = vrot.lane.b32.xlu0 %v3267, 126
    %v3359 = vpop.permute.xlu0 %3358
    %3360 = vrot.lane.b32.xlu0 %v3268, 126
    %v3361 = vpop.permute.xlu0 %3360
    %3362 = vrot.lane.b32.xlu0 %v3269, 126
    %v3363 = vpop.permute.xlu0 %3362
    %3364 = vrot.lane.b32.xlu0 %v3270, 126
    %v3365 = vpop.permute.xlu0 %3364
    %3366 = vrot.lane.b32.xlu0 %v3271, 126
    %v3367 = vpop.permute.xlu0 %3366
    %v3400 = vadd.f32 %v2818, %v3305
    %v3401 = vadd.f32 %v2819, %v3307
    %v3402 = vadd.f32 %v2820, %v3309
    %v3403 = vadd.f32 %v2821, %v3311
    %v3404 = vadd.f32 %v2822, %v3313
    %v3405 = vadd.f32 %v2823, %v3315
    %v3406 = vadd.f32 %v2824, %v3317
    %v3407 = vadd.f32 %v2825, %v3319
    %v3408 = vadd.f32 %v2826, %v3321
    %v3409 = vadd.f32 %v2827, %v3323
    %v3410 = vadd.f32 %v2828, %v3325
    %v3411 = vadd.f32 %v2829, %v3327
    %v3412 = vadd.f32 %v2830, %v3329
    %v3413 = vadd.f32 %v2831, %v3331
    %v3414 = vadd.f32 %v2832, %v3333
    %v3415 = vadd.f32 %v2833, %v3335
    %v3416 = vadd.f32 %v2834, %v3337
    %v3417 = vadd.f32 %v2835, %v3339
    %v3418 = vadd.f32 %v2836, %v3341
    %v3419 = vadd.f32 %v2837, %v3343
    %v3420 = vadd.f32 %v2838, %v3345
    %v3421 = vadd.f32 %v2839, %v3347
    %v3422 = vadd.f32 %v2840, %v3349
    %v3423 = vadd.f32 %v2841, %v3351
    %v3424 = vadd.f32 %v2842, %v3353
    %v3425 = vadd.f32 %v2843, %v3355
    %v3426 = vadd.f32 %v2844, %v3357
    %v3427 = vadd.f32 %v2845, %v3359
    %v3428 = vadd.f32 %v2846, %v3361
    %v3429 = vadd.f32 %v2847, %v3363
    %v3430 = vadd.f32 %v2848, %v3365
    %v3431 = vadd.f32 %v2849, %v3367
    %s3432 = sld [smem:[#allocation3 + $0x19]]
    %v3433 = vld [vmem:[%s2460 + $0x1] sm:$0xff]
    %v3434 = vld [vmem:[%s2460 + $0x9] sm:$0xff]
    %v3435 = vld [vmem:[%s2460 + $0x19] sm:$0xff]
    %v3436 = vld [vmem:[%s2460 + $0x21] sm:$0xff]
    %v3437 = vld [vmem:[%s2460 + $0x31] sm:$0xff]
    %v3438 = vld [vmem:[%s2460 + $0x39] sm:$0xff]
    %v3439 = vld [vmem:[%s2460 + $0x49] sm:$0xff]
    %v3440 = vld [vmem:[%s2460 + $0x51] sm:$0xff]
    %v3441 = vld [vmem:[%s2460 + $0x61] sm:$0xff]
    %v3442 = vld [vmem:[%s2460 + $0x69] sm:$0xff]
    %v3443 = vld [vmem:[%s2460 + $0x79] sm:$0xff]
    %v3444 = vld [vmem:[%s2460 + $0x81] sm:$0xff]
    %v3445 = vld [vmem:[%s2460 + $0x91] sm:$0xff]
    %v3446 = vld [vmem:[%s2460 + $0x99] sm:$0xff]
    %v3447 = vld [vmem:[%s2460 + $0xa9] sm:$0xff]
    %v3448 = vld [vmem:[%s2460 + $0xb1] sm:$0xff]
    %v3449 = vld [vmem:[%s2460 + $0xf1] sm:$0xff]
    %v3450 = vld [vmem:[%s2460 + $0xf9] sm:$0xff]
    %v3451 = vld [vmem:[%s2460 + $0x109] sm:$0xff]
    %v3452 = vld [vmem:[%s2460 + $0x111] sm:$0xff]
    %v3453 = vld [vmem:[%s2460 + $0x121] sm:$0xff]
    %v3454 = vld [vmem:[%s2460 + $0x129] sm:$0xff]
    %v3455 = vld [vmem:[%s2460 + $0x139] sm:$0xff]
    %v3456 = vld [vmem:[%s2460 + $0x141] sm:$0xff]
    %v3457 = vld [vmem:[%s2460 + $0x151] sm:$0xff]
    %v3458 = vld [vmem:[%s2460 + $0x159] sm:$0xff]
    %v3459 = vld [vmem:[%s2460 + $0x169] sm:$0xff]
    %v3460 = vld [vmem:[%s2460 + $0x171] sm:$0xff]
    %v3461 = vld [vmem:[%s2460 + $0x181] sm:$0xff]
    %v3462 = vld [vmem:[%s2460 + $0x189] sm:$0xff]
    %v3463 = vld [vmem:[%s2460 + $0x199] sm:$0xff]
    %v3464 = vld [vmem:[%s2460 + $0x1a1] sm:$0xff]
    %v3465 = vstv %s3432
    %v3466 = vmul.f32 %v3465, %v3433
    %v3467 = vmul.f32 %v3465, %v3434
    %v3468 = vmul.f32 %v3465, %v3435
    %v3469 = vmul.f32 %v3465, %v3436
    %v3470 = vmul.f32 %v3465, %v3437
    %v3471 = vmul.f32 %v3465, %v3438
    %v3472 = vmul.f32 %v3465, %v3439
    %v3473 = vmul.f32 %v3465, %v3440
    %v3474 = vmul.f32 %v3465, %v3441
    %v3475 = vmul.f32 %v3465, %v3442
    %v3476 = vmul.f32 %v3465, %v3443
    %v3477 = vmul.f32 %v3465, %v3444
    %v3478 = vmul.f32 %v3465, %v3445
    %v3479 = vmul.f32 %v3465, %v3446
    %v3480 = vmul.f32 %v3465, %v3447
    %v3481 = vmul.f32 %v3465, %v3448
    %v3482 = vmul.f32 %v3465, %v3449
    %v3483 = vmul.f32 %v3465, %v3450
    %v3484 = vmul.f32 %v3465, %v3451
    %v3485 = vmul.f32 %v3465, %v3452
    %v3486 = vmul.f32 %v3465, %v3453
    %v3487 = vmul.f32 %v3465, %v3454
    %v3488 = vmul.f32 %v3465, %v3455
    %v3489 = vmul.f32 %v3465, %v3456
    %v3490 = vmul.f32 %v3465, %v3457
    %v3491 = vmul.f32 %v3465, %v3458
    %v3492 = vmul.f32 %v3465, %v3459
    %v3493 = vmul.f32 %v3465, %v3460
    %v3494 = vmul.f32 %v3465, %v3461
    %v3495 = vmul.f32 %v3465, %v3462
    %v3496 = vmul.f32 %v3465, %v3463
    %v3497 = vmul.f32 %v3465, %v3464
    %3530 = vrot.lane.b32.xlu0 %v3466, 127
    %v3531 = vpop.permute.xlu0 %3530
    %3532 = vrot.lane.b32.xlu0 %v3467, 127
    %v3533 = vpop.permute.xlu0 %3532
    %3534 = vrot.lane.b32.xlu0 %v3468, 127
    %v3535 = vpop.permute.xlu0 %3534
    %3536 = vrot.lane.b32.xlu0 %v3469, 127
    %v3537 = vpop.permute.xlu0 %3536
    %3538 = vrot.lane.b32.xlu0 %v3470, 127
    %v3539 = vpop.permute.xlu0 %3538
    %3540 = vrot.lane.b32.xlu0 %v3471, 127
    %v3541 = vpop.permute.xlu0 %3540
    %3542 = vrot.lane.b32.xlu0 %v3472, 127
    %v3543 = vpop.permute.xlu0 %3542
    %3544 = vrot.lane.b32.xlu0 %v3473, 127
    %v3545 = vpop.permute.xlu0 %3544
    %3546 = vrot.lane.b32.xlu0 %v3474, 127
    %v3547 = vpop.permute.xlu0 %3546
    %3548 = vrot.lane.b32.xlu0 %v3475, 127
    %v3549 = vpop.permute.xlu0 %3548
    %3550 = vrot.lane.b32.xlu0 %v3476, 127
    %v3551 = vpop.permute.xlu0 %3550
    %3552 = vrot.lane.b32.xlu0 %v3477, 127
    %v3553 = vpop.permute.xlu0 %3552
    %3554 = vrot.lane.b32.xlu0 %v3478, 127
    %v3555 = vpop.permute.xlu0 %3554
    %3556 = vrot.lane.b32.xlu0 %v3479, 127
    %v3557 = vpop.permute.xlu0 %3556
    %3558 = vrot.lane.b32.xlu0 %v3480, 127
    %v3559 = vpop.permute.xlu0 %3558
    %3560 = vrot.lane.b32.xlu0 %v3481, 127
    %v3561 = vpop.permute.xlu0 %3560
    %3562 = vrot.lane.b32.xlu0 %v3482, 127
    %v3563 = vpop.permute.xlu0 %3562
    %3564 = vrot.lane.b32.xlu0 %v3483, 127
    %v3565 = vpop.permute.xlu0 %3564
    %3566 = vrot.lane.b32.xlu0 %v3484, 127
    %v3567 = vpop.permute.xlu0 %3566
    %3568 = vrot.lane.b32.xlu0 %v3485, 127
    %v3569 = vpop.permute.xlu0 %3568
    %3570 = vrot.lane.b32.xlu0 %v3486, 127
    %v3571 = vpop.permute.xlu0 %3570
    %3572 = vrot.lane.b32.xlu0 %v3487, 127
    %v3573 = vpop.permute.xlu0 %3572
    %3574 = vrot.lane.b32.xlu0 %v3488, 127
    %v3575 = vpop.permute.xlu0 %3574
    %3576 = vrot.lane.b32.xlu0 %v3489, 127
    %v3577 = vpop.permute.xlu0 %3576
    %3578 = vrot.lane.b32.xlu0 %v3490, 127
    %v3579 = vpop.permute.xlu0 %3578
    %3580 = vrot.lane.b32.xlu0 %v3491, 127
    %v3581 = vpop.permute.xlu0 %3580
    %3582 = vrot.lane.b32.xlu0 %v3492, 127
    %v3583 = vpop.permute.xlu0 %3582
    %3584 = vrot.lane.b32.xlu0 %v3493, 127
    %v3585 = vpop.permute.xlu0 %3584
    %3586 = vrot.lane.b32.xlu0 %v3494, 127
    %v3587 = vpop.permute.xlu0 %3586
    %3588 = vrot.lane.b32.xlu0 %v3495, 127
    %v3589 = vpop.permute.xlu0 %3588
    %3590 = vrot.lane.b32.xlu0 %v3496, 127
    %v3591 = vpop.permute.xlu0 %3590
    %3592 = vrot.lane.b32.xlu0 %v3497, 127
    %v3593 = vpop.permute.xlu0 %3592
    %v3626 = vadd.f32 %v3012, %v3531
    %v3627 = vadd.f32 %v3013, %v3533
    %v3628 = vadd.f32 %v3014, %v3535
    %v3629 = vadd.f32 %v3015, %v3537
    %v3630 = vadd.f32 %v3016, %v3539
    %v3631 = vadd.f32 %v3017, %v3541
    %v3632 = vadd.f32 %v3018, %v3543
    %v3633 = vadd.f32 %v3019, %v3545
    %v3634 = vadd.f32 %v3020, %v3547
    %v3635 = vadd.f32 %v3021, %v3549
    %v3636 = vadd.f32 %v3022, %v3551
    %v3637 = vadd.f32 %v3023, %v3553
    %v3638 = vadd.f32 %v3024, %v3555
    %v3639 = vadd.f32 %v3025, %v3557
    %v3640 = vadd.f32 %v3026, %v3559
    %v3641 = vadd.f32 %v3027, %v3561
    %v3642 = vadd.f32 %v3028, %v3563
    %v3643 = vadd.f32 %v3029, %v3565
    %v3644 = vadd.f32 %v3030, %v3567
    %v3645 = vadd.f32 %v3031, %v3569
    %v3646 = vadd.f32 %v3032, %v3571
    %v3647 = vadd.f32 %v3033, %v3573
    %v3648 = vadd.f32 %v3034, %v3575
    %v3649 = vadd.f32 %v3035, %v3577
    %v3650 = vadd.f32 %v3036, %v3579
    %v3651 = vadd.f32 %v3037, %v3581
    %v3652 = vadd.f32 %v3038, %v3583
    %v3653 = vadd.f32 %v3039, %v3585
    %v3654 = vadd.f32 %v3040, %v3587
    %v3655 = vadd.f32 %v3041, %v3589
    %v3656 = vadd.f32 %v3042, %v3591
    %v3657 = vadd.f32 %v3043, %v3593
    %s3658 = sld [smem:[#allocation3 + $0x6]]
    %v3659 = vld [vmem:[%s246 + $0x2] sm:$0xff]
    %v3660 = vld [vmem:[%s246 + $0xa] sm:$0xff]
    %v3661 = vld [vmem:[%s246 + $0x1a] sm:$0xff]
    %v3662 = vld [vmem:[%s246 + $0x22] sm:$0xff]
    %v3663 = vld [vmem:[%s246 + $0x32] sm:$0xff]
    %v3664 = vld [vmem:[%s246 + $0x3a] sm:$0xff]
    %v3665 = vld [vmem:[%s246 + $0x4a] sm:$0xff]
    %v3666 = vld [vmem:[%s246 + $0x52] sm:$0xff]
    %v3667 = vld [vmem:[%s246 + $0x62] sm:$0xff]
    %v3668 = vld [vmem:[%s246 + $0x6a] sm:$0xff]
    %v3669 = vld [vmem:[%s246 + $0x7a] sm:$0xff]
    %v3670 = vld [vmem:[%s246 + $0x82] sm:$0xff]
    %v3671 = vld [vmem:[%s246 + $0x92] sm:$0xff]
    %v3672 = vld [vmem:[%s246 + $0x9a] sm:$0xff]
    %v3673 = vld [vmem:[%s246 + $0xaa] sm:$0xff]
    %v3674 = vld [vmem:[%s246 + $0xb2] sm:$0xff]
    %v3675 = vld [vmem:[%s246 + $0xf2] sm:$0xff]
    %v3676 = vld [vmem:[%s246 + $0xfa] sm:$0xff]
    %v3677 = vld [vmem:[%s246 + $0x10a] sm:$0xff]
    %v3678 = vld [vmem:[%s246 + $0x112] sm:$0xff]
    %v3679 = vld [vmem:[%s246 + $0x122] sm:$0xff]
    %v3680 = vld [vmem:[%s246 + $0x12a] sm:$0xff]
    %v3681 = vld [vmem:[%s246 + $0x13a] sm:$0xff]
    %v3682 = vld [vmem:[%s246 + $0x142] sm:$0xff]
    %v3683 = vld [vmem:[%s246 + $0x152] sm:$0xff]
    %v3684 = vld [vmem:[%s246 + $0x15a] sm:$0xff]
    %v3685 = vld [vmem:[%s246 + $0x16a] sm:$0xff]
    %v3686 = vld [vmem:[%s246 + $0x172] sm:$0xff]
    %v3687 = vld [vmem:[%s246 + $0x182] sm:$0xff]
    %v3688 = vld [vmem:[%s246 + $0x18a] sm:$0xff]
    %v3689 = vld [vmem:[%s246 + $0x19a] sm:$0xff]
    %v3690 = vld [vmem:[%s246 + $0x1a2] sm:$0xff]
    %v3691 = vstv %s3658
    %v3692 = vmul.f32 %v3691, %v3659
    %v3693 = vmul.f32 %v3691, %v3660
    %v3694 = vmul.f32 %v3691, %v3661
    %v3695 = vmul.f32 %v3691, %v3662
    %v3696 = vmul.f32 %v3691, %v3663
    %v3697 = vmul.f32 %v3691, %v3664
    %v3698 = vmul.f32 %v3691, %v3665
    %v3699 = vmul.f32 %v3691, %v3666
    %v3700 = vmul.f32 %v3691, %v3667
    %v3701 = vmul.f32 %v3691, %v3668
    %v3702 = vmul.f32 %v3691, %v3669
    %v3703 = vmul.f32 %v3691, %v3670
    %v3704 = vmul.f32 %v3691, %v3671
    %v3705 = vmul.f32 %v3691, %v3672
    %v3706 = vmul.f32 %v3691, %v3673
    %v3707 = vmul.f32 %v3691, %v3674
    %v3708 = vmul.f32 %v3691, %v3675
    %v3709 = vmul.f32 %v3691, %v3676
    %v3710 = vmul.f32 %v3691, %v3677
    %v3711 = vmul.f32 %v3691, %v3678
    %v3712 = vmul.f32 %v3691, %v3679
    %v3713 = vmul.f32 %v3691, %v3680
    %v3714 = vmul.f32 %v3691, %v3681
    %v3715 = vmul.f32 %v3691, %v3682
    %v3716 = vmul.f32 %v3691, %v3683
    %v3717 = vmul.f32 %v3691, %v3684
    %v3718 = vmul.f32 %v3691, %v3685
    %v3719 = vmul.f32 %v3691, %v3686
    %v3720 = vmul.f32 %v3691, %v3687
    %v3721 = vmul.f32 %v3691, %v3688
    %v3722 = vmul.f32 %v3691, %v3689
    %v3723 = vmul.f32 %v3691, %v3690
    %v3724 = vadd.f32 %v3206, %v3692
    %v3725 = vadd.f32 %v3207, %v3693
    %v3726 = vadd.f32 %v3208, %v3694
    %v3727 = vadd.f32 %v3209, %v3695
    %v3728 = vadd.f32 %v3210, %v3696
    %v3729 = vadd.f32 %v3211, %v3697
    %v3730 = vadd.f32 %v3212, %v3698
    %v3731 = vadd.f32 %v3213, %v3699
    %v3732 = vadd.f32 %v3214, %v3700
    %v3733 = vadd.f32 %v3215, %v3701
    %v3734 = vadd.f32 %v3216, %v3702
    %v3735 = vadd.f32 %v3217, %v3703
    %v3736 = vadd.f32 %v3218, %v3704
    %v3737 = vadd.f32 %v3219, %v3705
    %v3738 = vadd.f32 %v3220, %v3706
    %v3739 = vadd.f32 %v3221, %v3707
    %v3740 = vadd.f32 %v3222, %v3708
    %v3741 = vadd.f32 %v3223, %v3709
    %v3742 = vadd.f32 %v3224, %v3710
    %v3743 = vadd.f32 %v3225, %v3711
    %v3744 = vadd.f32 %v3226, %v3712
    %v3745 = vadd.f32 %v3227, %v3713
    %v3746 = vadd.f32 %v3228, %v3714
    %v3747 = vadd.f32 %v3229, %v3715
    %v3748 = vadd.f32 %v3230, %v3716
    %v3749 = vadd.f32 %v3231, %v3717
    %v3750 = vadd.f32 %v3232, %v3718
    %v3751 = vadd.f32 %v3233, %v3719
    %v3752 = vadd.f32 %v3234, %v3720
    %v3753 = vadd.f32 %v3235, %v3721
    %v3754 = vadd.f32 %v3236, %v3722
    %v3755 = vadd.f32 %v3237, %v3723
    %s3756 = sld [smem:[#allocation3 + $0x10]]
    %v3757 = vstv %s3756
    %v3758 = vmul.f32 %v3757, %v3433
    %v3759 = vmul.f32 %v3757, %v3434
    %v3760 = vmul.f32 %v3757, %v3435
    %v3761 = vmul.f32 %v3757, %v3436
    %v3762 = vmul.f32 %v3757, %v3437
    %v3763 = vmul.f32 %v3757, %v3438
    %v3764 = vmul.f32 %v3757, %v3439
    %v3765 = vmul.f32 %v3757, %v3440
    %v3766 = vmul.f32 %v3757, %v3441
    %v3767 = vmul.f32 %v3757, %v3442
    %v3768 = vmul.f32 %v3757, %v3443
    %v3769 = vmul.f32 %v3757, %v3444
    %v3770 = vmul.f32 %v3757, %v3445
    %v3771 = vmul.f32 %v3757, %v3446
    %v3772 = vmul.f32 %v3757, %v3447
    %v3773 = vmul.f32 %v3757, %v3448
    %v3774 = vmul.f32 %v3757, %v3449
    %v3775 = vmul.f32 %v3757, %v3450
    %v3776 = vmul.f32 %v3757, %v3451
    %v3777 = vmul.f32 %v3757, %v3452
    %v3778 = vmul.f32 %v3757, %v3453
    %v3779 = vmul.f32 %v3757, %v3454
    %v3780 = vmul.f32 %v3757, %v3455
    %v3781 = vmul.f32 %v3757, %v3456
    %v3782 = vmul.f32 %v3757, %v3457
    %v3783 = vmul.f32 %v3757, %v3458
    %v3784 = vmul.f32 %v3757, %v3459
    %v3785 = vmul.f32 %v3757, %v3460
    %v3786 = vmul.f32 %v3757, %v3461
    %v3787 = vmul.f32 %v3757, %v3462
    %v3788 = vmul.f32 %v3757, %v3463
    %v3789 = vmul.f32 %v3757, %v3464
    %v3790 = vadd.f32 %v3400, %v3758
    %v3791 = vadd.f32 %v3401, %v3759
    %v3792 = vadd.f32 %v3402, %v3760
    %v3793 = vadd.f32 %v3403, %v3761
    %v3794 = vadd.f32 %v3404, %v3762
    %v3795 = vadd.f32 %v3405, %v3763
    %v3796 = vadd.f32 %v3406, %v3764
    %v3797 = vadd.f32 %v3407, %v3765
    %v3798 = vadd.f32 %v3408, %v3766
    %v3799 = vadd.f32 %v3409, %v3767
    %v3800 = vadd.f32 %v3410, %v3768
    %v3801 = vadd.f32 %v3411, %v3769
    %v3802 = vadd.f32 %v3412, %v3770
    %v3803 = vadd.f32 %v3413, %v3771
    %v3804 = vadd.f32 %v3414, %v3772
    %v3805 = vadd.f32 %v3415, %v3773
    %v3806 = vadd.f32 %v3416, %v3774
    %v3807 = vadd.f32 %v3417, %v3775
    %v3808 = vadd.f32 %v3418, %v3776
    %v3809 = vadd.f32 %v3419, %v3777
    %v3810 = vadd.f32 %v3420, %v3778
    %v3811 = vadd.f32 %v3421, %v3779
    %v3812 = vadd.f32 %v3422, %v3780
    %v3813 = vadd.f32 %v3423, %v3781
    %v3814 = vadd.f32 %v3424, %v3782
    %v3815 = vadd.f32 %v3425, %v3783
    %v3816 = vadd.f32 %v3426, %v3784
    %v3817 = vadd.f32 %v3427, %v3785
    %v3818 = vadd.f32 %v3428, %v3786
    %v3819 = vadd.f32 %v3429, %v3787
    %v3820 = vadd.f32 %v3430, %v3788
    %v3821 = vadd.f32 %v3431, %v3789
    %s3822 = sld [smem:[#allocation3 + $0x1a]]
    %v3823 = vld [vmem:[#allocation2 + $0x2] sm:$0xff]
    %v3824 = vld [vmem:[#allocation2 + $0xa] sm:$0xff]
    %v3825 = vld [vmem:[#allocation2 + $0x1a] sm:$0xff]
    %v3826 = vld [vmem:[#allocation2 + $0x22] sm:$0xff]
    %v3827 = vld [vmem:[#allocation2 + $0x32] sm:$0xff]
    %v3828 = vld [vmem:[#allocation2 + $0x3a] sm:$0xff]
    %v3829 = vld [vmem:[#allocation2 + $0x4a] sm:$0xff]
    %v3830 = vld [vmem:[#allocation2 + $0x52] sm:$0xff]
    %v3831 = vld [vmem:[#allocation2 + $0x62] sm:$0xff]
    %v3832 = vld [vmem:[#allocation2 + $0x6a] sm:$0xff]
    %v3833 = vld [vmem:[#allocation2 + $0x7a] sm:$0xff]
    %v3834 = vld [vmem:[#allocation2 + $0x82] sm:$0xff]
    %v3835 = vld [vmem:[#allocation2 + $0x92] sm:$0xff]
    %v3836 = vld [vmem:[#allocation2 + $0x9a] sm:$0xff]
    %v3837 = vld [vmem:[#allocation2 + $0xaa] sm:$0xff]
    %v3838 = vld [vmem:[#allocation2 + $0xb2] sm:$0xff]
    %v3839 = vld [vmem:[#allocation2 + $0xf2] sm:$0xff]
    %v3840 = vld [vmem:[#allocation2 + $0xfa] sm:$0xff]
    %v3841 = vld [vmem:[#allocation2 + $0x10a] sm:$0xff]
    %v3842 = vld [vmem:[#allocation2 + $0x112] sm:$0xff]
    %v3843 = vld [vmem:[#allocation2 + $0x122] sm:$0xff]
    %v3844 = vld [vmem:[#allocation2 + $0x12a] sm:$0xff]
    %v3845 = vld [vmem:[#allocation2 + $0x13a] sm:$0xff]
    %v3846 = vld [vmem:[#allocation2 + $0x142] sm:$0xff]
    %v3847 = vld [vmem:[#allocation2 + $0x152] sm:$0xff]
    %v3848 = vld [vmem:[#allocation2 + $0x15a] sm:$0xff]
    %v3849 = vld [vmem:[#allocation2 + $0x16a] sm:$0xff]
    %v3850 = vld [vmem:[#allocation2 + $0x172] sm:$0xff]
    %v3851 = vld [vmem:[#allocation2 + $0x182] sm:$0xff]
    %v3852 = vld [vmem:[#allocation2 + $0x18a] sm:$0xff]
    %v3853 = vld [vmem:[#allocation2 + $0x19a] sm:$0xff]
    %v3854 = vld [vmem:[#allocation2 + $0x1a2] sm:$0xff]
    %v3855 = vstv %s3822
    %v3856 = vmul.f32 %v3855, %v3823
    %v3857 = vmul.f32 %v3855, %v3824
    %v3858 = vmul.f32 %v3855, %v3825
    %v3859 = vmul.f32 %v3855, %v3826
    %v3860 = vmul.f32 %v3855, %v3827
    %v3861 = vmul.f32 %v3855, %v3828
    %v3862 = vmul.f32 %v3855, %v3829
    %v3863 = vmul.f32 %v3855, %v3830
    %v3864 = vmul.f32 %v3855, %v3831
    %v3865 = vmul.f32 %v3855, %v3832
    %v3866 = vmul.f32 %v3855, %v3833
    %v3867 = vmul.f32 %v3855, %v3834
    %v3868 = vmul.f32 %v3855, %v3835
    %v3869 = vmul.f32 %v3855, %v3836
    %v3870 = vmul.f32 %v3855, %v3837
    %v3871 = vmul.f32 %v3855, %v3838
    %v3872 = vmul.f32 %v3855, %v3839
    %v3873 = vmul.f32 %v3855, %v3840
    %v3874 = vmul.f32 %v3855, %v3841
    %v3875 = vmul.f32 %v3855, %v3842
    %v3876 = vmul.f32 %v3855, %v3843
    %v3877 = vmul.f32 %v3855, %v3844
    %v3878 = vmul.f32 %v3855, %v3845
    %v3879 = vmul.f32 %v3855, %v3846
    %v3880 = vmul.f32 %v3855, %v3847
    %v3881 = vmul.f32 %v3855, %v3848
    %v3882 = vmul.f32 %v3855, %v3849
    %v3883 = vmul.f32 %v3855, %v3850
    %v3884 = vmul.f32 %v3855, %v3851
    %v3885 = vmul.f32 %v3855, %v3852
    %v3886 = vmul.f32 %v3855, %v3853
    %v3887 = vmul.f32 %v3855, %v3854
    %3920 = vrot.lane.b32.xlu0 %v3856, 127
    %v3921 = vpop.permute.xlu0 %3920
    %3922 = vrot.lane.b32.xlu0 %v3857, 127
    %v3923 = vpop.permute.xlu0 %3922
    %3924 = vrot.lane.b32.xlu0 %v3858, 127
    %v3925 = vpop.permute.xlu0 %3924
    %3926 = vrot.lane.b32.xlu0 %v3859, 127
    %v3927 = vpop.permute.xlu0 %3926
    %3928 = vrot.lane.b32.xlu0 %v3860, 127
    %v3929 = vpop.permute.xlu0 %3928
    %3930 = vrot.lane.b32.xlu0 %v3861, 127
    %v3931 = vpop.permute.xlu0 %3930
    %3932 = vrot.lane.b32.xlu0 %v3862, 127
    %v3933 = vpop.permute.xlu0 %3932
    %3934 = vrot.lane.b32.xlu0 %v3863, 127
    %v3935 = vpop.permute.xlu0 %3934
    %3936 = vrot.lane.b32.xlu0 %v3864, 127
    %v3937 = vpop.permute.xlu0 %3936
    %3938 = vrot.lane.b32.xlu0 %v3865, 127
    %v3939 = vpop.permute.xlu0 %3938
    %3940 = vrot.lane.b32.xlu0 %v3866, 127
    %v3941 = vpop.permute.xlu0 %3940
    %3942 = vrot.lane.b32.xlu0 %v3867, 127
    %v3943 = vpop.permute.xlu0 %3942
    %3944 = vrot.lane.b32.xlu0 %v3868, 127
    %v3945 = vpop.permute.xlu0 %3944
    %3946 = vrot.lane.b32.xlu0 %v3869, 127
    %v3947 = vpop.permute.xlu0 %3946
    %3948 = vrot.lane.b32.xlu0 %v3870, 127
    %v3949 = vpop.permute.xlu0 %3948
    %3950 = vrot.lane.b32.xlu0 %v3871, 127
    %v3951 = vpop.permute.xlu0 %3950
    %3952 = vrot.lane.b32.xlu0 %v3872, 127
    %v3953 = vpop.permute.xlu0 %3952
    %3954 = vrot.lane.b32.xlu0 %v3873, 127
    %v3955 = vpop.permute.xlu0 %3954
    %3956 = vrot.lane.b32.xlu0 %v3874, 127
    %v3957 = vpop.permute.xlu0 %3956
    %3958 = vrot.lane.b32.xlu0 %v3875, 127
    %v3959 = vpop.permute.xlu0 %3958
    %3960 = vrot.lane.b32.xlu0 %v3876, 127
    %v3961 = vpop.permute.xlu0 %3960
    %3962 = vrot.lane.b32.xlu0 %v3877, 127
    %v3963 = vpop.permute.xlu0 %3962
    %3964 = vrot.lane.b32.xlu0 %v3878, 127
    %v3965 = vpop.permute.xlu0 %3964
    %3966 = vrot.lane.b32.xlu0 %v3879, 127
    %v3967 = vpop.permute.xlu0 %3966
    %3968 = vrot.lane.b32.xlu0 %v3880, 127
    %v3969 = vpop.permute.xlu0 %3968
    %3970 = vrot.lane.b32.xlu0 %v3881, 127
    %v3971 = vpop.permute.xlu0 %3970
    %3972 = vrot.lane.b32.xlu0 %v3882, 127
    %v3973 = vpop.permute.xlu0 %3972
    %3974 = vrot.lane.b32.xlu0 %v3883, 127
    %v3975 = vpop.permute.xlu0 %3974
    %3976 = vrot.lane.b32.xlu0 %v3884, 127
    %v3977 = vpop.permute.xlu0 %3976
    %3978 = vrot.lane.b32.xlu0 %v3885, 127
    %v3979 = vpop.permute.xlu0 %3978
    %3980 = vrot.lane.b32.xlu0 %v3886, 127
    %v3981 = vpop.permute.xlu0 %3980
    %3982 = vrot.lane.b32.xlu0 %v3887, 127
    %v3983 = vpop.permute.xlu0 %3982
    %v4016 = vadd.f32 %v3626, %v3921
    %v4017 = vadd.f32 %v3627, %v3923
    %v4018 = vadd.f32 %v3628, %v3925
    %v4019 = vadd.f32 %v3629, %v3927
    %v4020 = vadd.f32 %v3630, %v3929
    %v4021 = vadd.f32 %v3631, %v3931
    %v4022 = vadd.f32 %v3632, %v3933
    %v4023 = vadd.f32 %v3633, %v3935
    %v4024 = vadd.f32 %v3634, %v3937
    %v4025 = vadd.f32 %v3635, %v3939
    %v4026 = vadd.f32 %v3636, %v3941
    %v4027 = vadd.f32 %v3637, %v3943
    %v4028 = vadd.f32 %v3638, %v3945
    %v4029 = vadd.f32 %v3639, %v3947
    %v4030 = vadd.f32 %v3640, %v3949
    %v4031 = vadd.f32 %v3641, %v3951
    %v4032 = vadd.f32 %v3642, %v3953
    %v4033 = vadd.f32 %v3643, %v3955
    %v4034 = vadd.f32 %v3644, %v3957
    %v4035 = vadd.f32 %v3645, %v3959
    %v4036 = vadd.f32 %v3646, %v3961
    %v4037 = vadd.f32 %v3647, %v3963
    %v4038 = vadd.f32 %v3648, %v3965
    %v4039 = vadd.f32 %v3649, %v3967
    %v4040 = vadd.f32 %v3650, %v3969
    %v4041 = vadd.f32 %v3651, %v3971
    %v4042 = vadd.f32 %v3652, %v3973
    %v4043 = vadd.f32 %v3653, %v3975
    %v4044 = vadd.f32 %v3654, %v3977
    %v4045 = vadd.f32 %v3655, %v3979
    %v4046 = vadd.f32 %v3656, %v3981
    %v4047 = vadd.f32 %v3657, %v3983
    %s4048 = sld [smem:[#allocation3 + $0x7]]
    %v4049 = vstv %s4048
    %v4050 = vmul.f32 %v4049, %v3659
    %v4051 = vmul.f32 %v4049, %v3660
    %v4052 = vmul.f32 %v4049, %v3661
    %v4053 = vmul.f32 %v4049, %v3662
    %v4054 = vmul.f32 %v4049, %v3663
    %v4055 = vmul.f32 %v4049, %v3664
    %v4056 = vmul.f32 %v4049, %v3665
    %v4057 = vmul.f32 %v4049, %v3666
    %v4058 = vmul.f32 %v4049, %v3667
    %v4059 = vmul.f32 %v4049, %v3668
    %v4060 = vmul.f32 %v4049, %v3669
    %v4061 = vmul.f32 %v4049, %v3670
    %v4062 = vmul.f32 %v4049, %v3671
    %v4063 = vmul.f32 %v4049, %v3672
    %v4064 = vmul.f32 %v4049, %v3673
    %v4065 = vmul.f32 %v4049, %v3674
    %v4066 = vmul.f32 %v4049, %v3675
    %v4067 = vmul.f32 %v4049, %v3676
    %v4068 = vmul.f32 %v4049, %v3677
    %v4069 = vmul.f32 %v4049, %v3678
    %v4070 = vmul.f32 %v4049, %v3679
    %v4071 = vmul.f32 %v4049, %v3680
    %v4072 = vmul.f32 %v4049, %v3681
    %v4073 = vmul.f32 %v4049, %v3682
    %v4074 = vmul.f32 %v4049, %v3683
    %v4075 = vmul.f32 %v4049, %v3684
    %v4076 = vmul.f32 %v4049, %v3685
    %v4077 = vmul.f32 %v4049, %v3686
    %v4078 = vmul.f32 %v4049, %v3687
    %v4079 = vmul.f32 %v4049, %v3688
    %v4080 = vmul.f32 %v4049, %v3689
    %v4081 = vmul.f32 %v4049, %v3690
    %4114 = vrot.lane.b32.xlu0 %v4050, 127
    %v4115 = vpop.permute.xlu0 %4114
    %4116 = vrot.lane.b32.xlu0 %v4051, 127
    %v4117 = vpop.permute.xlu0 %4116
    %4118 = vrot.lane.b32.xlu0 %v4052, 127
    %v4119 = vpop.permute.xlu0 %4118
    %4120 = vrot.lane.b32.xlu0 %v4053, 127
    %v4121 = vpop.permute.xlu0 %4120
    %4122 = vrot.lane.b32.xlu0 %v4054, 127
    %v4123 = vpop.permute.xlu0 %4122
    %4124 = vrot.lane.b32.xlu0 %v4055, 127
    %v4125 = vpop.permute.xlu0 %4124
    %4126 = vrot.lane.b32.xlu0 %v4056, 127
    %v4127 = vpop.permute.xlu0 %4126
    %4128 = vrot.lane.b32.xlu0 %v4057, 127
    %v4129 = vpop.permute.xlu0 %4128
    %4130 = vrot.lane.b32.xlu0 %v4058, 127
    %v4131 = vpop.permute.xlu0 %4130
    %4132 = vrot.lane.b32.xlu0 %v4059, 127
    %v4133 = vpop.permute.xlu0 %4132
    %4134 = vrot.lane.b32.xlu0 %v4060, 127
    %v4135 = vpop.permute.xlu0 %4134
    %4136 = vrot.lane.b32.xlu0 %v4061, 127
    %v4137 = vpop.permute.xlu0 %4136
    %4138 = vrot.lane.b32.xlu0 %v4062, 127
    %v4139 = vpop.permute.xlu0 %4138
    %4140 = vrot.lane.b32.xlu0 %v4063, 127
    %v4141 = vpop.permute.xlu0 %4140
    %4142 = vrot.lane.b32.xlu0 %v4064, 127
    %v4143 = vpop.permute.xlu0 %4142
    %4144 = vrot.lane.b32.xlu0 %v4065, 127
    %v4145 = vpop.permute.xlu0 %4144
    %4146 = vrot.lane.b32.xlu0 %v4066, 127
    %v4147 = vpop.permute.xlu0 %4146
    %4148 = vrot.lane.b32.xlu0 %v4067, 127
    %v4149 = vpop.permute.xlu0 %4148
    %4150 = vrot.lane.b32.xlu0 %v4068, 127
    %v4151 = vpop.permute.xlu0 %4150
    %4152 = vrot.lane.b32.xlu0 %v4069, 127
    %v4153 = vpop.permute.xlu0 %4152
    %4154 = vrot.lane.b32.xlu0 %v4070, 127
    %v4155 = vpop.permute.xlu0 %4154
    %4156 = vrot.lane.b32.xlu0 %v4071, 127
    %v4157 = vpop.permute.xlu0 %4156
    %4158 = vrot.lane.b32.xlu0 %v4072, 127
    %v4159 = vpop.permute.xlu0 %4158
    %4160 = vrot.lane.b32.xlu0 %v4073, 127
    %v4161 = vpop.permute.xlu0 %4160
    %4162 = vrot.lane.b32.xlu0 %v4074, 127
    %v4163 = vpop.permute.xlu0 %4162
    %4164 = vrot.lane.b32.xlu0 %v4075, 127
    %v4165 = vpop.permute.xlu0 %4164
    %4166 = vrot.lane.b32.xlu0 %v4076, 127
    %v4167 = vpop.permute.xlu0 %4166
    %4168 = vrot.lane.b32.xlu0 %v4077, 127
    %v4169 = vpop.permute.xlu0 %4168
    %4170 = vrot.lane.b32.xlu0 %v4078, 127
    %v4171 = vpop.permute.xlu0 %4170
    %4172 = vrot.lane.b32.xlu0 %v4079, 127
    %v4173 = vpop.permute.xlu0 %4172
    %4174 = vrot.lane.b32.xlu0 %v4080, 127
    %v4175 = vpop.permute.xlu0 %4174
    %4176 = vrot.lane.b32.xlu0 %v4081, 127
    %v4177 = vpop.permute.xlu0 %4176
    %v4210 = vadd.f32 %v3724, %v4115
    %v4211 = vadd.f32 %v3725, %v4117
    %v4212 = vadd.f32 %v3726, %v4119
    %v4213 = vadd.f32 %v3727, %v4121
    %v4214 = vadd.f32 %v3728, %v4123
    %v4215 = vadd.f32 %v3729, %v4125
    %v4216 = vadd.f32 %v3730, %v4127
    %v4217 = vadd.f32 %v3731, %v4129
    %v4218 = vadd.f32 %v3732, %v4131
    %v4219 = vadd.f32 %v3733, %v4133
    %v4220 = vadd.f32 %v3734, %v4135
    %v4221 = vadd.f32 %v3735, %v4137
    %v4222 = vadd.f32 %v3736, %v4139
    %v4223 = vadd.f32 %v3737, %v4141
    %v4224 = vadd.f32 %v3738, %v4143
    %v4225 = vadd.f32 %v3739, %v4145
    %v4226 = vadd.f32 %v3740, %v4147
    %v4227 = vadd.f32 %v3741, %v4149
    %v4228 = vadd.f32 %v3742, %v4151
    %v4229 = vadd.f32 %v3743, %v4153
    %v4230 = vadd.f32 %v3744, %v4155
    %v4231 = vadd.f32 %v3745, %v4157
    %v4232 = vadd.f32 %v3746, %v4159
    %v4233 = vadd.f32 %v3747, %v4161
    %v4234 = vadd.f32 %v3748, %v4163
    %v4235 = vadd.f32 %v3749, %v4165
    %v4236 = vadd.f32 %v3750, %v4167
    %v4237 = vadd.f32 %v3751, %v4169
    %v4238 = vadd.f32 %v3752, %v4171
    %v4239 = vadd.f32 %v3753, %v4173
    %v4240 = vadd.f32 %v3754, %v4175
    %v4241 = vadd.f32 %v3755, %v4177
    %s4242 = sld [smem:[#allocation3 + $0x11]]
    %v4243 = vstv %s4242
    %v4244 = vmul.f32 %v4243, %v3433
    %v4245 = vmul.f32 %v4243, %v3434
    %v4246 = vmul.f32 %v4243, %v3435
    %v4247 = vmul.f32 %v4243, %v3436
    %v4248 = vmul.f32 %v4243, %v3437
    %v4249 = vmul.f32 %v4243, %v3438
    %v4250 = vmul.f32 %v4243, %v3439
    %v4251 = vmul.f32 %v4243, %v3440
    %v4252 = vmul.f32 %v4243, %v3441
    %v4253 = vmul.f32 %v4243, %v3442
    %v4254 = vmul.f32 %v4243, %v3443
    %v4255 = vmul.f32 %v4243, %v3444
    %v4256 = vmul.f32 %v4243, %v3445
    %v4257 = vmul.f32 %v4243, %v3446
    %v4258 = vmul.f32 %v4243, %v3447
    %v4259 = vmul.f32 %v4243, %v3448
    %v4260 = vmul.f32 %v4243, %v3449
    %v4261 = vmul.f32 %v4243, %v3450
    %v4262 = vmul.f32 %v4243, %v3451
    %v4263 = vmul.f32 %v4243, %v3452
    %v4264 = vmul.f32 %v4243, %v3453
    %v4265 = vmul.f32 %v4243, %v3454
    %v4266 = vmul.f32 %v4243, %v3455
    %v4267 = vmul.f32 %v4243, %v3456
    %v4268 = vmul.f32 %v4243, %v3457
    %v4269 = vmul.f32 %v4243, %v3458
    %v4270 = vmul.f32 %v4243, %v3459
    %v4271 = vmul.f32 %v4243, %v3460
    %v4272 = vmul.f32 %v4243, %v3461
    %v4273 = vmul.f32 %v4243, %v3462
    %v4274 = vmul.f32 %v4243, %v3463
    %v4275 = vmul.f32 %v4243, %v3464
    %4308 = vrot.lane.b32.xlu0 %v4244, 127
    %v4309 = vpop.permute.xlu0 %4308
    %4310 = vrot.lane.b32.xlu0 %v4245, 127
    %v4311 = vpop.permute.xlu0 %4310
    %4312 = vrot.lane.b32.xlu0 %v4246, 127
    %v4313 = vpop.permute.xlu0 %4312
    %4314 = vrot.lane.b32.xlu0 %v4247, 127
    %v4315 = vpop.permute.xlu0 %4314
    %4316 = vrot.lane.b32.xlu0 %v4248, 127
    %v4317 = vpop.permute.xlu0 %4316
    %4318 = vrot.lane.b32.xlu0 %v4249, 127
    %v4319 = vpop.permute.xlu0 %4318
    %4320 = vrot.lane.b32.xlu0 %v4250, 127
    %v4321 = vpop.permute.xlu0 %4320
    %4322 = vrot.lane.b32.xlu0 %v4251, 127
    %v4323 = vpop.permute.xlu0 %4322
    %4324 = vrot.lane.b32.xlu0 %v4252, 127
    %v4325 = vpop.permute.xlu0 %4324
    %4326 = vrot.lane.b32.xlu0 %v4253, 127
    %v4327 = vpop.permute.xlu0 %4326
    %4328 = vrot.lane.b32.xlu0 %v4254, 127
    %v4329 = vpop.permute.xlu0 %4328
    %4330 = vrot.lane.b32.xlu0 %v4255, 127
    %v4331 = vpop.permute.xlu0 %4330
    %4332 = vrot.lane.b32.xlu0 %v4256, 127
    %v4333 = vpop.permute.xlu0 %4332
    %4334 = vrot.lane.b32.xlu0 %v4257, 127
    %v4335 = vpop.permute.xlu0 %4334
    %4336 = vrot.lane.b32.xlu0 %v4258, 127
    %v4337 = vpop.permute.xlu0 %4336
    %4338 = vrot.lane.b32.xlu0 %v4259, 127
    %v4339 = vpop.permute.xlu0 %4338
    %4340 = vrot.lane.b32.xlu0 %v4260, 127
    %v4341 = vpop.permute.xlu0 %4340
    %4342 = vrot.lane.b32.xlu0 %v4261, 127
    %v4343 = vpop.permute.xlu0 %4342
    %4344 = vrot.lane.b32.xlu0 %v4262, 127
    %v4345 = vpop.permute.xlu0 %4344
    %4346 = vrot.lane.b32.xlu0 %v4263, 127
    %v4347 = vpop.permute.xlu0 %4346
    %4348 = vrot.lane.b32.xlu0 %v4264, 127
    %v4349 = vpop.permute.xlu0 %4348
    %4350 = vrot.lane.b32.xlu0 %v4265, 127
    %v4351 = vpop.permute.xlu0 %4350
    %4352 = vrot.lane.b32.xlu0 %v4266, 127
    %v4353 = vpop.permute.xlu0 %4352
    %4354 = vrot.lane.b32.xlu0 %v4267, 127
    %v4355 = vpop.permute.xlu0 %4354
    %4356 = vrot.lane.b32.xlu0 %v4268, 127
    %v4357 = vpop.permute.xlu0 %4356
    %4358 = vrot.lane.b32.xlu0 %v4269, 127
    %v4359 = vpop.permute.xlu0 %4358
    %4360 = vrot.lane.b32.xlu0 %v4270, 127
    %v4361 = vpop.permute.xlu0 %4360
    %4362 = vrot.lane.b32.xlu0 %v4271, 127
    %v4363 = vpop.permute.xlu0 %4362
    %4364 = vrot.lane.b32.xlu0 %v4272, 127
    %v4365 = vpop.permute.xlu0 %4364
    %4366 = vrot.lane.b32.xlu0 %v4273, 127
    %v4367 = vpop.permute.xlu0 %4366
    %4368 = vrot.lane.b32.xlu0 %v4274, 127
    %v4369 = vpop.permute.xlu0 %4368
    %4370 = vrot.lane.b32.xlu0 %v4275, 127
    %v4371 = vpop.permute.xlu0 %4370
    %v4404 = vadd.f32 %v3790, %v4309
    %v4405 = vadd.f32 %v3791, %v4311
    %v4406 = vadd.f32 %v3792, %v4313
    %v4407 = vadd.f32 %v3793, %v4315
    %v4408 = vadd.f32 %v3794, %v4317
    %v4409 = vadd.f32 %v3795, %v4319
    %v4410 = vadd.f32 %v3796, %v4321
    %v4411 = vadd.f32 %v3797, %v4323
    %v4412 = vadd.f32 %v3798, %v4325
    %v4413 = vadd.f32 %v3799, %v4327
    %v4414 = vadd.f32 %v3800, %v4329
    %v4415 = vadd.f32 %v3801, %v4331
    %v4416 = vadd.f32 %v3802, %v4333
    %v4417 = vadd.f32 %v3803, %v4335
    %v4418 = vadd.f32 %v3804, %v4337
    %v4419 = vadd.f32 %v3805, %v4339
    %v4420 = vadd.f32 %v3806, %v4341
    %v4421 = vadd.f32 %v3807, %v4343
    %v4422 = vadd.f32 %v3808, %v4345
    %v4423 = vadd.f32 %v3809, %v4347
    %v4424 = vadd.f32 %v3810, %v4349
    %v4425 = vadd.f32 %v3811, %v4351
    %v4426 = vadd.f32 %v3812, %v4353
    %v4427 = vadd.f32 %v3813, %v4355
    %v4428 = vadd.f32 %v3814, %v4357
    %v4429 = vadd.f32 %v3815, %v4359
    %v4430 = vadd.f32 %v3816, %v4361
    %v4431 = vadd.f32 %v3817, %v4363
    %v4432 = vadd.f32 %v3818, %v4365
    %v4433 = vadd.f32 %v3819, %v4367
    %v4434 = vadd.f32 %v3820, %v4369
    %v4435 = vadd.f32 %v3821, %v4371
    %s4436 = sld [smem:[#allocation3 + $0x1b]]
    %v4437 = vstv %s4436
    %v4438 = vmul.f32 %v4437, %v3659
    %v4439 = vmul.f32 %v4437, %v3660
    %v4440 = vmul.f32 %v4437, %v3661
    %v4441 = vmul.f32 %v4437, %v3662
    %v4442 = vmul.f32 %v4437, %v3663
    %v4443 = vmul.f32 %v4437, %v3664
    %v4444 = vmul.f32 %v4437, %v3665
    %v4445 = vmul.f32 %v4437, %v3666
    %v4446 = vmul.f32 %v4437, %v3667
    %v4447 = vmul.f32 %v4437, %v3668
    %v4448 = vmul.f32 %v4437, %v3669
    %v4449 = vmul.f32 %v4437, %v3670
    %v4450 = vmul.f32 %v4437, %v3671
    %v4451 = vmul.f32 %v4437, %v3672
    %v4452 = vmul.f32 %v4437, %v3673
    %v4453 = vmul.f32 %v4437, %v3674
    %v4454 = vmul.f32 %v4437, %v3675
    %v4455 = vmul.f32 %v4437, %v3676
    %v4456 = vmul.f32 %v4437, %v3677
    %v4457 = vmul.f32 %v4437, %v3678
    %v4458 = vmul.f32 %v4437, %v3679
    %v4459 = vmul.f32 %v4437, %v3680
    %v4460 = vmul.f32 %v4437, %v3681
    %v4461 = vmul.f32 %v4437, %v3682
    %v4462 = vmul.f32 %v4437, %v3683
    %v4463 = vmul.f32 %v4437, %v3684
    %v4464 = vmul.f32 %v4437, %v3685
    %v4465 = vmul.f32 %v4437, %v3686
    %v4466 = vmul.f32 %v4437, %v3687
    %v4467 = vmul.f32 %v4437, %v3688
    %v4468 = vmul.f32 %v4437, %v3689
    %v4469 = vmul.f32 %v4437, %v3690
    %4502 = vrot.lane.b32.xlu0 %v4438, 127
    %v4503 = vpop.permute.xlu0 %4502
    %4504 = vrot.lane.b32.xlu0 %v4439, 127
    %v4505 = vpop.permute.xlu0 %4504
    %4506 = vrot.lane.b32.xlu0 %v4440, 127
    %v4507 = vpop.permute.xlu0 %4506
    %4508 = vrot.lane.b32.xlu0 %v4441, 127
    %v4509 = vpop.permute.xlu0 %4508
    %4510 = vrot.lane.b32.xlu0 %v4442, 127
    %v4511 = vpop.permute.xlu0 %4510
    %4512 = vrot.lane.b32.xlu0 %v4443, 127
    %v4513 = vpop.permute.xlu0 %4512
    %4514 = vrot.lane.b32.xlu0 %v4444, 127
    %v4515 = vpop.permute.xlu0 %4514
    %4516 = vrot.lane.b32.xlu0 %v4445, 127
    %v4517 = vpop.permute.xlu0 %4516
    %4518 = vrot.lane.b32.xlu0 %v4446, 127
    %v4519 = vpop.permute.xlu0 %4518
    %4520 = vrot.lane.b32.xlu0 %v4447, 127
    %v4521 = vpop.permute.xlu0 %4520
    %4522 = vrot.lane.b32.xlu0 %v4448, 127
    %v4523 = vpop.permute.xlu0 %4522
    %4524 = vrot.lane.b32.xlu0 %v4449, 127
    %v4525 = vpop.permute.xlu0 %4524
    %4526 = vrot.lane.b32.xlu0 %v4450, 127
    %v4527 = vpop.permute.xlu0 %4526
    %4528 = vrot.lane.b32.xlu0 %v4451, 127
    %v4529 = vpop.permute.xlu0 %4528
    %4530 = vrot.lane.b32.xlu0 %v4452, 127
    %v4531 = vpop.permute.xlu0 %4530
    %4532 = vrot.lane.b32.xlu0 %v4453, 127
    %v4533 = vpop.permute.xlu0 %4532
    %4534 = vrot.lane.b32.xlu0 %v4454, 127
    %v4535 = vpop.permute.xlu0 %4534
    %4536 = vrot.lane.b32.xlu0 %v4455, 127
    %v4537 = vpop.permute.xlu0 %4536
    %4538 = vrot.lane.b32.xlu0 %v4456, 127
    %v4539 = vpop.permute.xlu0 %4538
    %4540 = vrot.lane.b32.xlu0 %v4457, 127
    %v4541 = vpop.permute.xlu0 %4540
    %4542 = vrot.lane.b32.xlu0 %v4458, 127
    %v4543 = vpop.permute.xlu0 %4542
    %4544 = vrot.lane.b32.xlu0 %v4459, 127
    %v4545 = vpop.permute.xlu0 %4544
    %4546 = vrot.lane.b32.xlu0 %v4460, 127
    %v4547 = vpop.permute.xlu0 %4546
    %4548 = vrot.lane.b32.xlu0 %v4461, 127
    %v4549 = vpop.permute.xlu0 %4548
    %4550 = vrot.lane.b32.xlu0 %v4462, 127
    %v4551 = vpop.permute.xlu0 %4550
    %4552 = vrot.lane.b32.xlu0 %v4463, 127
    %v4553 = vpop.permute.xlu0 %4552
    %4554 = vrot.lane.b32.xlu0 %v4464, 127
    %v4555 = vpop.permute.xlu0 %4554
    %4556 = vrot.lane.b32.xlu0 %v4465, 127
    %v4557 = vpop.permute.xlu0 %4556
    %4558 = vrot.lane.b32.xlu0 %v4466, 127
    %v4559 = vpop.permute.xlu0 %4558
    %4560 = vrot.lane.b32.xlu0 %v4467, 127
    %v4561 = vpop.permute.xlu0 %4560
    %4562 = vrot.lane.b32.xlu0 %v4468, 127
    %v4563 = vpop.permute.xlu0 %4562
    %4564 = vrot.lane.b32.xlu0 %v4469, 127
    %v4565 = vpop.permute.xlu0 %4564
    %v4598 = vadd.f32 %v4016, %v4503
    %v4599 = vadd.f32 %v4017, %v4505
    %v4600 = vadd.f32 %v4018, %v4507
    %v4601 = vadd.f32 %v4019, %v4509
    %v4602 = vadd.f32 %v4020, %v4511
    %v4603 = vadd.f32 %v4021, %v4513
    %v4604 = vadd.f32 %v4022, %v4515
    %v4605 = vadd.f32 %v4023, %v4517
    %v4606 = vadd.f32 %v4024, %v4519
    %v4607 = vadd.f32 %v4025, %v4521
    %v4608 = vadd.f32 %v4026, %v4523
    %v4609 = vadd.f32 %v4027, %v4525
    %v4610 = vadd.f32 %v4028, %v4527
    %v4611 = vadd.f32 %v4029, %v4529
    %v4612 = vadd.f32 %v4030, %v4531
    %v4613 = vadd.f32 %v4031, %v4533
    %v4614 = vadd.f32 %v4032, %v4535
    %v4615 = vadd.f32 %v4033, %v4537
    %v4616 = vadd.f32 %v4034, %v4539
    %v4617 = vadd.f32 %v4035, %v4541
    %v4618 = vadd.f32 %v4036, %v4543
    %v4619 = vadd.f32 %v4037, %v4545
    %v4620 = vadd.f32 %v4038, %v4547
    %v4621 = vadd.f32 %v4039, %v4549
    %v4622 = vadd.f32 %v4040, %v4551
    %v4623 = vadd.f32 %v4041, %v4553
    %v4624 = vadd.f32 %v4042, %v4555
    %v4625 = vadd.f32 %v4043, %v4557
    %v4626 = vadd.f32 %v4044, %v4559
    %v4627 = vadd.f32 %v4045, %v4561
    %v4628 = vadd.f32 %v4046, %v4563
    %v4629 = vadd.f32 %v4047, %v4565
    %s4630 = sld [smem:[#allocation3 + $0x8]]
    %v4631 = vstv %s4630
    %v4632 = vmul.f32 %v4631, %v3659
    %v4633 = vmul.f32 %v4631, %v3660
    %v4634 = vmul.f32 %v4631, %v3661
    %v4635 = vmul.f32 %v4631, %v3662
    %v4636 = vmul.f32 %v4631, %v3663
    %v4637 = vmul.f32 %v4631, %v3664
    %v4638 = vmul.f32 %v4631, %v3665
    %v4639 = vmul.f32 %v4631, %v3666
    %v4640 = vmul.f32 %v4631, %v3667
    %v4641 = vmul.f32 %v4631, %v3668
    %v4642 = vmul.f32 %v4631, %v3669
    %v4643 = vmul.f32 %v4631, %v3670
    %v4644 = vmul.f32 %v4631, %v3671
    %v4645 = vmul.f32 %v4631, %v3672
    %v4646 = vmul.f32 %v4631, %v3673
    %v4647 = vmul.f32 %v4631, %v3674
    %v4648 = vmul.f32 %v4631, %v3675
    %v4649 = vmul.f32 %v4631, %v3676
    %v4650 = vmul.f32 %v4631, %v3677
    %v4651 = vmul.f32 %v4631, %v3678
    %v4652 = vmul.f32 %v4631, %v3679
    %v4653 = vmul.f32 %v4631, %v3680
    %v4654 = vmul.f32 %v4631, %v3681
    %v4655 = vmul.f32 %v4631, %v3682
    %v4656 = vmul.f32 %v4631, %v3683
    %v4657 = vmul.f32 %v4631, %v3684
    %v4658 = vmul.f32 %v4631, %v3685
    %v4659 = vmul.f32 %v4631, %v3686
    %v4660 = vmul.f32 %v4631, %v3687
    %v4661 = vmul.f32 %v4631, %v3688
    %v4662 = vmul.f32 %v4631, %v3689
    %v4663 = vmul.f32 %v4631, %v3690
    %4696 = vrot.lane.b32.xlu0 %v4632, 126
    %v4697 = vpop.permute.xlu0 %4696
    %4698 = vrot.lane.b32.xlu0 %v4633, 126
    %v4699 = vpop.permute.xlu0 %4698
    %4700 = vrot.lane.b32.xlu0 %v4634, 126
    %v4701 = vpop.permute.xlu0 %4700
    %4702 = vrot.lane.b32.xlu0 %v4635, 126
    %v4703 = vpop.permute.xlu0 %4702
    %4704 = vrot.lane.b32.xlu0 %v4636, 126
    %v4705 = vpop.permute.xlu0 %4704
    %4706 = vrot.lane.b32.xlu0 %v4637, 126
    %v4707 = vpop.permute.xlu0 %4706
    %4708 = vrot.lane.b32.xlu0 %v4638, 126
    %v4709 = vpop.permute.xlu0 %4708
    %4710 = vrot.lane.b32.xlu0 %v4639, 126
    %v4711 = vpop.permute.xlu0 %4710
    %4712 = vrot.lane.b32.xlu0 %v4640, 126
    %v4713 = vpop.permute.xlu0 %4712
    %4714 = vrot.lane.b32.xlu0 %v4641, 126
    %v4715 = vpop.permute.xlu0 %4714
    %4716 = vrot.lane.b32.xlu0 %v4642, 126
    %v4717 = vpop.permute.xlu0 %4716
    %4718 = vrot.lane.b32.xlu0 %v4643, 126
    %v4719 = vpop.permute.xlu0 %4718
    %4720 = vrot.lane.b32.xlu0 %v4644, 126
    %v4721 = vpop.permute.xlu0 %4720
    %4722 = vrot.lane.b32.xlu0 %v4645, 126
    %v4723 = vpop.permute.xlu0 %4722
    %4724 = vrot.lane.b32.xlu0 %v4646, 126
    %v4725 = vpop.permute.xlu0 %4724
    %4726 = vrot.lane.b32.xlu0 %v4647, 126
    %v4727 = vpop.permute.xlu0 %4726
    %4728 = vrot.lane.b32.xlu0 %v4648, 126
    %v4729 = vpop.permute.xlu0 %4728
    %4730 = vrot.lane.b32.xlu0 %v4649, 126
    %v4731 = vpop.permute.xlu0 %4730
    %4732 = vrot.lane.b32.xlu0 %v4650, 126
    %v4733 = vpop.permute.xlu0 %4732
    %4734 = vrot.lane.b32.xlu0 %v4651, 126
    %v4735 = vpop.permute.xlu0 %4734
    %4736 = vrot.lane.b32.xlu0 %v4652, 126
    %v4737 = vpop.permute.xlu0 %4736
    %4738 = vrot.lane.b32.xlu0 %v4653, 126
    %v4739 = vpop.permute.xlu0 %4738
    %4740 = vrot.lane.b32.xlu0 %v4654, 126
    %v4741 = vpop.permute.xlu0 %4740
    %4742 = vrot.lane.b32.xlu0 %v4655, 126
    %v4743 = vpop.permute.xlu0 %4742
    %4744 = vrot.lane.b32.xlu0 %v4656, 126
    %v4745 = vpop.permute.xlu0 %4744
    %4746 = vrot.lane.b32.xlu0 %v4657, 126
    %v4747 = vpop.permute.xlu0 %4746
    %4748 = vrot.lane.b32.xlu0 %v4658, 126
    %v4749 = vpop.permute.xlu0 %4748
    %4750 = vrot.lane.b32.xlu0 %v4659, 126
    %v4751 = vpop.permute.xlu0 %4750
    %4752 = vrot.lane.b32.xlu0 %v4660, 126
    %v4753 = vpop.permute.xlu0 %4752
    %4754 = vrot.lane.b32.xlu0 %v4661, 126
    %v4755 = vpop.permute.xlu0 %4754
    %4756 = vrot.lane.b32.xlu0 %v4662, 126
    %v4757 = vpop.permute.xlu0 %4756
    %4758 = vrot.lane.b32.xlu0 %v4663, 126
    %v4759 = vpop.permute.xlu0 %4758
    %v4792 = vadd.f32 %v4210, %v4697
    %v4793 = vadd.f32 %v4211, %v4699
    %v4794 = vadd.f32 %v4212, %v4701
    %v4795 = vadd.f32 %v4213, %v4703
    %v4796 = vadd.f32 %v4214, %v4705
    %v4797 = vadd.f32 %v4215, %v4707
    %v4798 = vadd.f32 %v4216, %v4709
    %v4799 = vadd.f32 %v4217, %v4711
    %v4800 = vadd.f32 %v4218, %v4713
    %v4801 = vadd.f32 %v4219, %v4715
    %v4802 = vadd.f32 %v4220, %v4717
    %v4803 = vadd.f32 %v4221, %v4719
    %v4804 = vadd.f32 %v4222, %v4721
    %v4805 = vadd.f32 %v4223, %v4723
    %v4806 = vadd.f32 %v4224, %v4725
    %v4807 = vadd.f32 %v4225, %v4727
    %v4808 = vadd.f32 %v4226, %v4729
    %v4809 = vadd.f32 %v4227, %v4731
    %v4810 = vadd.f32 %v4228, %v4733
    %v4811 = vadd.f32 %v4229, %v4735
    %v4812 = vadd.f32 %v4230, %v4737
    %v4813 = vadd.f32 %v4231, %v4739
    %v4814 = vadd.f32 %v4232, %v4741
    %v4815 = vadd.f32 %v4233, %v4743
    %v4816 = vadd.f32 %v4234, %v4745
    %v4817 = vadd.f32 %v4235, %v4747
    %v4818 = vadd.f32 %v4236, %v4749
    %v4819 = vadd.f32 %v4237, %v4751
    %v4820 = vadd.f32 %v4238, %v4753
    %v4821 = vadd.f32 %v4239, %v4755
    %v4822 = vadd.f32 %v4240, %v4757
    %v4823 = vadd.f32 %v4241, %v4759
    %s4824 = sld [smem:[#allocation3 + $0x12]]
    %v4825 = vstv %s4824
    %v4826 = vmul.f32 %v4825, %v3433
    %v4827 = vmul.f32 %v4825, %v3434
    %v4828 = vmul.f32 %v4825, %v3435
    %v4829 = vmul.f32 %v4825, %v3436
    %v4830 = vmul.f32 %v4825, %v3437
    %v4831 = vmul.f32 %v4825, %v3438
    %v4832 = vmul.f32 %v4825, %v3439
    %v4833 = vmul.f32 %v4825, %v3440
    %v4834 = vmul.f32 %v4825, %v3441
    %v4835 = vmul.f32 %v4825, %v3442
    %v4836 = vmul.f32 %v4825, %v3443
    %v4837 = vmul.f32 %v4825, %v3444
    %v4838 = vmul.f32 %v4825, %v3445
    %v4839 = vmul.f32 %v4825, %v3446
    %v4840 = vmul.f32 %v4825, %v3447
    %v4841 = vmul.f32 %v4825, %v3448
    %v4842 = vmul.f32 %v4825, %v3449
    %v4843 = vmul.f32 %v4825, %v3450
    %v4844 = vmul.f32 %v4825, %v3451
    %v4845 = vmul.f32 %v4825, %v3452
    %v4846 = vmul.f32 %v4825, %v3453
    %v4847 = vmul.f32 %v4825, %v3454
    %v4848 = vmul.f32 %v4825, %v3455
    %v4849 = vmul.f32 %v4825, %v3456
    %v4850 = vmul.f32 %v4825, %v3457
    %v4851 = vmul.f32 %v4825, %v3458
    %v4852 = vmul.f32 %v4825, %v3459
    %v4853 = vmul.f32 %v4825, %v3460
    %v4854 = vmul.f32 %v4825, %v3461
    %v4855 = vmul.f32 %v4825, %v3462
    %v4856 = vmul.f32 %v4825, %v3463
    %v4857 = vmul.f32 %v4825, %v3464
    %4890 = vrot.lane.b32.xlu0 %v4826, 126
    %v4891 = vpop.permute.xlu0 %4890
    %4892 = vrot.lane.b32.xlu0 %v4827, 126
    %v4893 = vpop.permute.xlu0 %4892
    %4894 = vrot.lane.b32.xlu0 %v4828, 126
    %v4895 = vpop.permute.xlu0 %4894
    %4896 = vrot.lane.b32.xlu0 %v4829, 126
    %v4897 = vpop.permute.xlu0 %4896
    %4898 = vrot.lane.b32.xlu0 %v4830, 126
    %v4899 = vpop.permute.xlu0 %4898
    %4900 = vrot.lane.b32.xlu0 %v4831, 126
    %v4901 = vpop.permute.xlu0 %4900
    %4902 = vrot.lane.b32.xlu0 %v4832, 126
    %v4903 = vpop.permute.xlu0 %4902
    %4904 = vrot.lane.b32.xlu0 %v4833, 126
    %v4905 = vpop.permute.xlu0 %4904
    %4906 = vrot.lane.b32.xlu0 %v4834, 126
    %v4907 = vpop.permute.xlu0 %4906
    %4908 = vrot.lane.b32.xlu0 %v4835, 126
    %v4909 = vpop.permute.xlu0 %4908
    %4910 = vrot.lane.b32.xlu0 %v4836, 126
    %v4911 = vpop.permute.xlu0 %4910
    %4912 = vrot.lane.b32.xlu0 %v4837, 126
    %v4913 = vpop.permute.xlu0 %4912
    %4914 = vrot.lane.b32.xlu0 %v4838, 126
    %v4915 = vpop.permute.xlu0 %4914
    %4916 = vrot.lane.b32.xlu0 %v4839, 126
    %v4917 = vpop.permute.xlu0 %4916
    %4918 = vrot.lane.b32.xlu0 %v4840, 126
    %v4919 = vpop.permute.xlu0 %4918
    %4920 = vrot.lane.b32.xlu0 %v4841, 126
    %v4921 = vpop.permute.xlu0 %4920
    %4922 = vrot.lane.b32.xlu0 %v4842, 126
    %v4923 = vpop.permute.xlu0 %4922
    %4924 = vrot.lane.b32.xlu0 %v4843, 126
    %v4925 = vpop.permute.xlu0 %4924
    %4926 = vrot.lane.b32.xlu0 %v4844, 126
    %v4927 = vpop.permute.xlu0 %4926
    %4928 = vrot.lane.b32.xlu0 %v4845, 126
    %v4929 = vpop.permute.xlu0 %4928
    %4930 = vrot.lane.b32.xlu0 %v4846, 126
    %v4931 = vpop.permute.xlu0 %4930
    %4932 = vrot.lane.b32.xlu0 %v4847, 126
    %v4933 = vpop.permute.xlu0 %4932
    %4934 = vrot.lane.b32.xlu0 %v4848, 126
    %v4935 = vpop.permute.xlu0 %4934
    %4936 = vrot.lane.b32.xlu0 %v4849, 126
    %v4937 = vpop.permute.xlu0 %4936
    %4938 = vrot.lane.b32.xlu0 %v4850, 126
    %v4939 = vpop.permute.xlu0 %4938
    %4940 = vrot.lane.b32.xlu0 %v4851, 126
    %v4941 = vpop.permute.xlu0 %4940
    %4942 = vrot.lane.b32.xlu0 %v4852, 126
    %v4943 = vpop.permute.xlu0 %4942
    %4944 = vrot.lane.b32.xlu0 %v4853, 126
    %v4945 = vpop.permute.xlu0 %4944
    %4946 = vrot.lane.b32.xlu0 %v4854, 126
    %v4947 = vpop.permute.xlu0 %4946
    %4948 = vrot.lane.b32.xlu0 %v4855, 126
    %v4949 = vpop.permute.xlu0 %4948
    %4950 = vrot.lane.b32.xlu0 %v4856, 126
    %v4951 = vpop.permute.xlu0 %4950
    %4952 = vrot.lane.b32.xlu0 %v4857, 126
    %v4953 = vpop.permute.xlu0 %4952
    %v4986 = vadd.f32 %v4404, %v4891
    %v4987 = vadd.f32 %v4405, %v4893
    %v4988 = vadd.f32 %v4406, %v4895
    %v4989 = vadd.f32 %v4407, %v4897
    %v4990 = vadd.f32 %v4408, %v4899
    %v4991 = vadd.f32 %v4409, %v4901
    %v4992 = vadd.f32 %v4410, %v4903
    %v4993 = vadd.f32 %v4411, %v4905
    %v4994 = vadd.f32 %v4412, %v4907
    %v4995 = vadd.f32 %v4413, %v4909
    %v4996 = vadd.f32 %v4414, %v4911
    %v4997 = vadd.f32 %v4415, %v4913
    %v4998 = vadd.f32 %v4416, %v4915
    %v4999 = vadd.f32 %v4417, %v4917
    %v5000 = vadd.f32 %v4418, %v4919
    %v5001 = vadd.f32 %v4419, %v4921
    %v5002 = vadd.f32 %v4420, %v4923
    %v5003 = vadd.f32 %v4421, %v4925
    %v5004 = vadd.f32 %v4422, %v4927
    %v5005 = vadd.f32 %v4423, %v4929
    %v5006 = vadd.f32 %v4424, %v4931
    %v5007 = vadd.f32 %v4425, %v4933
    %v5008 = vadd.f32 %v4426, %v4935
    %v5009 = vadd.f32 %v4427, %v4937
    %v5010 = vadd.f32 %v4428, %v4939
    %v5011 = vadd.f32 %v4429, %v4941
    %v5012 = vadd.f32 %v4430, %v4943
    %v5013 = vadd.f32 %v4431, %v4945
    %v5014 = vadd.f32 %v4432, %v4947
    %v5015 = vadd.f32 %v4433, %v4949
    %v5016 = vadd.f32 %v4434, %v4951
    %v5017 = vadd.f32 %v4435, %v4953
    %s5018 = sld [smem:[#allocation3 + $0x1c]]
    %v5019 = vld [vmem:[%s2460 + $0x2] sm:$0xff]
    %v5020 = vld [vmem:[%s2460 + $0xa] sm:$0xff]
    %v5021 = vld [vmem:[%s2460 + $0x1a] sm:$0xff]
    %v5022 = vld [vmem:[%s2460 + $0x22] sm:$0xff]
    %v5023 = vld [vmem:[%s2460 + $0x32] sm:$0xff]
    %v5024 = vld [vmem:[%s2460 + $0x3a] sm:$0xff]
    %v5025 = vld [vmem:[%s2460 + $0x4a] sm:$0xff]
    %v5026 = vld [vmem:[%s2460 + $0x52] sm:$0xff]
    %v5027 = vld [vmem:[%s2460 + $0x62] sm:$0xff]
    %v5028 = vld [vmem:[%s2460 + $0x6a] sm:$0xff]
    %v5029 = vld [vmem:[%s2460 + $0x7a] sm:$0xff]
    %v5030 = vld [vmem:[%s2460 + $0x82] sm:$0xff]
    %v5031 = vld [vmem:[%s2460 + $0x92] sm:$0xff]
    %v5032 = vld [vmem:[%s2460 + $0x9a] sm:$0xff]
    %v5033 = vld [vmem:[%s2460 + $0xaa] sm:$0xff]
    %v5034 = vld [vmem:[%s2460 + $0xb2] sm:$0xff]
    %v5035 = vld [vmem:[%s2460 + $0xf2] sm:$0xff]
    %v5036 = vld [vmem:[%s2460 + $0xfa] sm:$0xff]
    %v5037 = vld [vmem:[%s2460 + $0x10a] sm:$0xff]
    %v5038 = vld [vmem:[%s2460 + $0x112] sm:$0xff]
    %v5039 = vld [vmem:[%s2460 + $0x122] sm:$0xff]
    %v5040 = vld [vmem:[%s2460 + $0x12a] sm:$0xff]
    %v5041 = vld [vmem:[%s2460 + $0x13a] sm:$0xff]
    %v5042 = vld [vmem:[%s2460 + $0x142] sm:$0xff]
    %v5043 = vld [vmem:[%s2460 + $0x152] sm:$0xff]
    %v5044 = vld [vmem:[%s2460 + $0x15a] sm:$0xff]
    %v5045 = vld [vmem:[%s2460 + $0x16a] sm:$0xff]
    %v5046 = vld [vmem:[%s2460 + $0x172] sm:$0xff]
    %v5047 = vld [vmem:[%s2460 + $0x182] sm:$0xff]
    %v5048 = vld [vmem:[%s2460 + $0x18a] sm:$0xff]
    %v5049 = vld [vmem:[%s2460 + $0x19a] sm:$0xff]
    %v5050 = vld [vmem:[%s2460 + $0x1a2] sm:$0xff]
    %v5051 = vstv %s5018
    %v5052 = vmul.f32 %v5051, %v5019
    %v5053 = vmul.f32 %v5051, %v5020
    %v5054 = vmul.f32 %v5051, %v5021
    %v5055 = vmul.f32 %v5051, %v5022
    %v5056 = vmul.f32 %v5051, %v5023
    %v5057 = vmul.f32 %v5051, %v5024
    %v5058 = vmul.f32 %v5051, %v5025
    %v5059 = vmul.f32 %v5051, %v5026
    %v5060 = vmul.f32 %v5051, %v5027
    %v5061 = vmul.f32 %v5051, %v5028
    %v5062 = vmul.f32 %v5051, %v5029
    %v5063 = vmul.f32 %v5051, %v5030
    %v5064 = vmul.f32 %v5051, %v5031
    %v5065 = vmul.f32 %v5051, %v5032
    %v5066 = vmul.f32 %v5051, %v5033
    %v5067 = vmul.f32 %v5051, %v5034
    %v5068 = vmul.f32 %v5051, %v5035
    %v5069 = vmul.f32 %v5051, %v5036
    %v5070 = vmul.f32 %v5051, %v5037
    %v5071 = vmul.f32 %v5051, %v5038
    %v5072 = vmul.f32 %v5051, %v5039
    %v5073 = vmul.f32 %v5051, %v5040
    %v5074 = vmul.f32 %v5051, %v5041
    %v5075 = vmul.f32 %v5051, %v5042
    %v5076 = vmul.f32 %v5051, %v5043
    %v5077 = vmul.f32 %v5051, %v5044
    %v5078 = vmul.f32 %v5051, %v5045
    %v5079 = vmul.f32 %v5051, %v5046
    %v5080 = vmul.f32 %v5051, %v5047
    %v5081 = vmul.f32 %v5051, %v5048
    %v5082 = vmul.f32 %v5051, %v5049
    %v5083 = vmul.f32 %v5051, %v5050
    %5116 = vrot.lane.b32.xlu0 %v5052, 127
    %v5117 = vpop.permute.xlu0 %5116
    %5118 = vrot.lane.b32.xlu0 %v5053, 127
    %v5119 = vpop.permute.xlu0 %5118
    %5120 = vrot.lane.b32.xlu0 %v5054, 127
    %v5121 = vpop.permute.xlu0 %5120
    %5122 = vrot.lane.b32.xlu0 %v5055, 127
    %v5123 = vpop.permute.xlu0 %5122
    %5124 = vrot.lane.b32.xlu0 %v5056, 127
    %v5125 = vpop.permute.xlu0 %5124
    %5126 = vrot.lane.b32.xlu0 %v5057, 127
    %v5127 = vpop.permute.xlu0 %5126
    %5128 = vrot.lane.b32.xlu0 %v5058, 127
    %v5129 = vpop.permute.xlu0 %5128
    %5130 = vrot.lane.b32.xlu0 %v5059, 127
    %v5131 = vpop.permute.xlu0 %5130
    %5132 = vrot.lane.b32.xlu0 %v5060, 127
    %v5133 = vpop.permute.xlu0 %5132
    %5134 = vrot.lane.b32.xlu0 %v5061, 127
    %v5135 = vpop.permute.xlu0 %5134
    %5136 = vrot.lane.b32.xlu0 %v5062, 127
    %v5137 = vpop.permute.xlu0 %5136
    %5138 = vrot.lane.b32.xlu0 %v5063, 127
    %v5139 = vpop.permute.xlu0 %5138
    %5140 = vrot.lane.b32.xlu0 %v5064, 127
    %v5141 = vpop.permute.xlu0 %5140
    %5142 = vrot.lane.b32.xlu0 %v5065, 127
    %v5143 = vpop.permute.xlu0 %5142
    %5144 = vrot.lane.b32.xlu0 %v5066, 127
    %v5145 = vpop.permute.xlu0 %5144
    %5146 = vrot.lane.b32.xlu0 %v5067, 127
    %v5147 = vpop.permute.xlu0 %5146
    %5148 = vrot.lane.b32.xlu0 %v5068, 127
    %v5149 = vpop.permute.xlu0 %5148
    %5150 = vrot.lane.b32.xlu0 %v5069, 127
    %v5151 = vpop.permute.xlu0 %5150
    %5152 = vrot.lane.b32.xlu0 %v5070, 127
    %v5153 = vpop.permute.xlu0 %5152
    %5154 = vrot.lane.b32.xlu0 %v5071, 127
    %v5155 = vpop.permute.xlu0 %5154
    %5156 = vrot.lane.b32.xlu0 %v5072, 127
    %v5157 = vpop.permute.xlu0 %5156
    %5158 = vrot.lane.b32.xlu0 %v5073, 127
    %v5159 = vpop.permute.xlu0 %5158
    %5160 = vrot.lane.b32.xlu0 %v5074, 127
    %v5161 = vpop.permute.xlu0 %5160
    %5162 = vrot.lane.b32.xlu0 %v5075, 127
    %v5163 = vpop.permute.xlu0 %5162
    %5164 = vrot.lane.b32.xlu0 %v5076, 127
    %v5165 = vpop.permute.xlu0 %5164
    %5166 = vrot.lane.b32.xlu0 %v5077, 127
    %v5167 = vpop.permute.xlu0 %5166
    %5168 = vrot.lane.b32.xlu0 %v5078, 127
    %v5169 = vpop.permute.xlu0 %5168
    %5170 = vrot.lane.b32.xlu0 %v5079, 127
    %v5171 = vpop.permute.xlu0 %5170
    %5172 = vrot.lane.b32.xlu0 %v5080, 127
    %v5173 = vpop.permute.xlu0 %5172
    %5174 = vrot.lane.b32.xlu0 %v5081, 127
    %v5175 = vpop.permute.xlu0 %5174
    %5176 = vrot.lane.b32.xlu0 %v5082, 127
    %v5177 = vpop.permute.xlu0 %5176
    %5178 = vrot.lane.b32.xlu0 %v5083, 127
    %v5179 = vpop.permute.xlu0 %5178
    %v5212 = vadd.f32 %v4598, %v5117
    %v5213 = vadd.f32 %v4599, %v5119
    %v5214 = vadd.f32 %v4600, %v5121
    %v5215 = vadd.f32 %v4601, %v5123
    %v5216 = vadd.f32 %v4602, %v5125
    %v5217 = vadd.f32 %v4603, %v5127
    %v5218 = vadd.f32 %v4604, %v5129
    %v5219 = vadd.f32 %v4605, %v5131
    %v5220 = vadd.f32 %v4606, %v5133
    %v5221 = vadd.f32 %v4607, %v5135
    %v5222 = vadd.f32 %v4608, %v5137
    %v5223 = vadd.f32 %v4609, %v5139
    %v5224 = vadd.f32 %v4610, %v5141
    %v5225 = vadd.f32 %v4611, %v5143
    %v5226 = vadd.f32 %v4612, %v5145
    %v5227 = vadd.f32 %v4613, %v5147
    %v5228 = vadd.f32 %v4614, %v5149
    %v5229 = vadd.f32 %v4615, %v5151
    %v5230 = vadd.f32 %v4616, %v5153
    %v5231 = vadd.f32 %v4617, %v5155
    %v5232 = vadd.f32 %v4618, %v5157
    %v5233 = vadd.f32 %v4619, %v5159
    %v5234 = vadd.f32 %v4620, %v5161
    %v5235 = vadd.f32 %v4621, %v5163
    %v5236 = vadd.f32 %v4622, %v5165
    %v5237 = vadd.f32 %v4623, %v5167
    %v5238 = vadd.f32 %v4624, %v5169
    %v5239 = vadd.f32 %v4625, %v5171
    %v5240 = vadd.f32 %v4626, %v5173
    %v5241 = vadd.f32 %v4627, %v5175
    %v5242 = vadd.f32 %v4628, %v5177
    %v5243 = vadd.f32 %v4629, %v5179
    %v5244 = vmul.f32 %v833, %v4792
    %v5245 = vmul.f32 %v833, %v4793
    %v5246 = vmul.f32 %v834, %v4794
    %v5247 = vmul.f32 %v834, %v4795
    %v5248 = vmul.f32 %v835, %v4796
    %v5249 = vmul.f32 %v835, %v4797
    %v5250 = vmul.f32 %v836, %v4798
    %v5251 = vmul.f32 %v836, %v4799
    %v5252 = vmul.f32 %v837, %v4800
    %v5253 = vmul.f32 %v837, %v4801
    %v5254 = vmul.f32 %v838, %v4802
    %v5255 = vmul.f32 %v838, %v4803
    %v5256 = vmul.f32 %v839, %v4804
    %v5257 = vmul.f32 %v839, %v4805
    %v5258 = vmul.f32 %v840, %v4806
    %v5259 = vmul.f32 %v840, %v4807
    %v5260 = vmul.f32 %v841, %v4808
    %v5261 = vmul.f32 %v841, %v4809
    %v5262 = vmul.f32 %v842, %v4810
    %v5263 = vmul.f32 %v842, %v4811
    %v5264 = vmul.f32 %v843, %v4812
    %v5265 = vmul.f32 %v843, %v4813
    %v5266 = vmul.f32 %v844, %v4814
    %v5267 = vmul.f32 %v844, %v4815
    %v5268 = vmul.f32 %v845, %v4816
    %v5269 = vmul.f32 %v845, %v4817
    %v5270 = vmul.f32 %v846, %v4818
    %v5271 = vmul.f32 %v846, %v4819
    %v5272 = vmul.f32 %v847, %v4820
    %v5273 = vmul.f32 %v847, %v4821
    %v5274 = vmul.f32 %v848, %v4822
    %v5275 = vmul.f32 %v848, %v4823
    %s5276 = sld [smem:[#allocation3 + $0x9]]
    %v5277 = vstv %s5276
    %v5278 = vadd.f32 %v5244, %v5277
    %v5279 = vadd.f32 %v5245, %v5277
    %v5280 = vadd.f32 %v5246, %v5277
    %v5281 = vadd.f32 %v5247, %v5277
    %v5282 = vadd.f32 %v5248, %v5277
    %v5283 = vadd.f32 %v5249, %v5277
    %v5284 = vadd.f32 %v5250, %v5277
    %v5285 = vadd.f32 %v5251, %v5277
    %v5286 = vadd.f32 %v5252, %v5277
    %v5287 = vadd.f32 %v5253, %v5277
    %v5288 = vadd.f32 %v5254, %v5277
    %v5289 = vadd.f32 %v5255, %v5277
    %v5290 = vadd.f32 %v5256, %v5277
    %v5291 = vadd.f32 %v5257, %v5277
    %v5292 = vadd.f32 %v5258, %v5277
    %v5293 = vadd.f32 %v5259, %v5277
    %v5294 = vadd.f32 %v5260, %v5277
    %v5295 = vadd.f32 %v5261, %v5277
    %v5296 = vadd.f32 %v5262, %v5277
    %v5297 = vadd.f32 %v5263, %v5277
    %v5298 = vadd.f32 %v5264, %v5277
    %v5299 = vadd.f32 %v5265, %v5277
    %v5300 = vadd.f32 %v5266, %v5277
    %v5301 = vadd.f32 %v5267, %v5277
    %v5302 = vadd.f32 %v5268, %v5277
    %v5303 = vadd.f32 %v5269, %v5277
    %v5304 = vadd.f32 %v5270, %v5277
    %v5305 = vadd.f32 %v5271, %v5277
    %v5306 = vadd.f32 %v5272, %v5277
    %v5307 = vadd.f32 %v5273, %v5277
    %v5308 = vadd.f32 %v5274, %v5277
    %v5309 = vadd.f32 %v5275, %v5277
    %v5310 = vmul.f32 %v917, %v4986
    %v5311 = vmul.f32 %v918, %v4987
    %v5312 = vmul.f32 %v917, %v4988
    %v5313 = vmul.f32 %v918, %v4989
    %v5314 = vmul.f32 %v917, %v4990
    %v5315 = vmul.f32 %v918, %v4991
    %v5316 = vmul.f32 %v917, %v4992
    %v5317 = vmul.f32 %v918, %v4993
    %v5318 = vmul.f32 %v917, %v4994
    %v5319 = vmul.f32 %v918, %v4995
    %v5320 = vmul.f32 %v917, %v4996
    %v5321 = vmul.f32 %v918, %v4997
    %v5322 = vmul.f32 %v917, %v4998
    %v5323 = vmul.f32 %v918, %v4999
    %v5324 = vmul.f32 %v917, %v5000
    %v5325 = vmul.f32 %v918, %v5001
    %v5326 = vmul.f32 %v919, %v5002
    %v5327 = vmul.f32 %v920, %v5003
    %v5328 = vmul.f32 %v919, %v5004
    %v5329 = vmul.f32 %v920, %v5005
    %v5330 = vmul.f32 %v919, %v5006
    %v5331 = vmul.f32 %v920, %v5007
    %v5332 = vmul.f32 %v919, %v5008
    %v5333 = vmul.f32 %v920, %v5009
    %v5334 = vmul.f32 %v919, %v5010
    %v5335 = vmul.f32 %v920, %v5011
    %v5336 = vmul.f32 %v919, %v5012
    %v5337 = vmul.f32 %v920, %v5013
    %v5338 = vmul.f32 %v919, %v5014
    %v5339 = vmul.f32 %v920, %v5015
    %v5340 = vmul.f32 %v919, %v5016
    %v5341 = vmul.f32 %v920, %v5017
    %s5342 = sld [smem:[#allocation3 + $0x13]]
    %v5343 = vstv %s5342
    %v5344 = vadd.f32 %v5310, %v5343
    %v5345 = vadd.f32 %v5311, %v5343
    %v5346 = vadd.f32 %v5312, %v5343
    %v5347 = vadd.f32 %v5313, %v5343
    %v5348 = vadd.f32 %v5314, %v5343
    %v5349 = vadd.f32 %v5315, %v5343
    %v5350 = vadd.f32 %v5316, %v5343
    %v5351 = vadd.f32 %v5317, %v5343
    %v5352 = vadd.f32 %v5318, %v5343
    %v5353 = vadd.f32 %v5319, %v5343
    %v5354 = vadd.f32 %v5320, %v5343
    %v5355 = vadd.f32 %v5321, %v5343
    %v5356 = vadd.f32 %v5322, %v5343
    %v5357 = vadd.f32 %v5323, %v5343
    %v5358 = vadd.f32 %v5324, %v5343
    %v5359 = vadd.f32 %v5325, %v5343
    %v5360 = vadd.f32 %v5326, %v5343
    %v5361 = vadd.f32 %v5327, %v5343
    %v5362 = vadd.f32 %v5328, %v5343
    %v5363 = vadd.f32 %v5329, %v5343
    %v5364 = vadd.f32 %v5330, %v5343
    %v5365 = vadd.f32 %v5331, %v5343
    %v5366 = vadd.f32 %v5332, %v5343
    %v5367 = vadd.f32 %v5333, %v5343
    %v5368 = vadd.f32 %v5334, %v5343
    %v5369 = vadd.f32 %v5335, %v5343
    %v5370 = vadd.f32 %v5336, %v5343
    %v5371 = vadd.f32 %v5337, %v5343
    %v5372 = vadd.f32 %v5338, %v5343
    %v5373 = vadd.f32 %v5339, %v5343
    %v5374 = vadd.f32 %v5340, %v5343
    %v5375 = vadd.f32 %v5341, %v5343
    %v5376 = vmul.f32 %v963, %v5212
    %v5377 = vmul.f32 %v963, %v5213
    %v5378 = vmul.f32 %v963, %v5214
    %v5379 = vmul.f32 %v963, %v5215
    %v5380 = vmul.f32 %v963, %v5216
    %v5381 = vmul.f32 %v963, %v5217
    %v5382 = vmul.f32 %v963, %v5218
    %v5383 = vmul.f32 %v963, %v5219
    %v5384 = vmul.f32 %v963, %v5220
    %v5385 = vmul.f32 %v963, %v5221
    %v5386 = vmul.f32 %v963, %v5222
    %v5387 = vmul.f32 %v963, %v5223
    %v5388 = vmul.f32 %v963, %v5224
    %v5389 = vmul.f32 %v963, %v5225
    %v5390 = vmul.f32 %v963, %v5226
    %v5391 = vmul.f32 %v963, %v5227
    %v5392 = vmul.f32 %v964, %v5228
    %v5393 = vmul.f32 %v964, %v5229
    %v5394 = vmul.f32 %v964, %v5230
    %v5395 = vmul.f32 %v964, %v5231
    %v5396 = vmul.f32 %v964, %v5232
    %v5397 = vmul.f32 %v964, %v5233
    %v5398 = vmul.f32 %v964, %v5234
    %v5399 = vmul.f32 %v964, %v5235
    %v5400 = vmul.f32 %v964, %v5236
    %v5401 = vmul.f32 %v964, %v5237
    %v5402 = vmul.f32 %v964, %v5238
    %v5403 = vmul.f32 %v964, %v5239
    %v5404 = vmul.f32 %v964, %v5240
    %v5405 = vmul.f32 %v964, %v5241
    %v5406 = vmul.f32 %v964, %v5242
    %v5407 = vmul.f32 %v964, %v5243
    %s5408 = sld [smem:[#allocation3 + $0x1d]]
    %v5409 = vstv %s5408
    %v5410 = vadd.f32 %v5376, %v5409
    %v5411 = vadd.f32 %v5377, %v5409
    %v5412 = vadd.f32 %v5378, %v5409
    %v5413 = vadd.f32 %v5379, %v5409
    %v5414 = vadd.f32 %v5380, %v5409
    %v5415 = vadd.f32 %v5381, %v5409
    %v5416 = vadd.f32 %v5382, %v5409
    %v5417 = vadd.f32 %v5383, %v5409
    %v5418 = vadd.f32 %v5384, %v5409
    %v5419 = vadd.f32 %v5385, %v5409
    %v5420 = vadd.f32 %v5386, %v5409
    %v5421 = vadd.f32 %v5387, %v5409
    %v5422 = vadd.f32 %v5388, %v5409
    %v5423 = vadd.f32 %v5389, %v5409
    %v5424 = vadd.f32 %v5390, %v5409
    %v5425 = vadd.f32 %v5391, %v5409
    %v5426 = vadd.f32 %v5392, %v5409
    %v5427 = vadd.f32 %v5393, %v5409
    %v5428 = vadd.f32 %v5394, %v5409
    %v5429 = vadd.f32 %v5395, %v5409
    %v5430 = vadd.f32 %v5396, %v5409
    %v5431 = vadd.f32 %v5397, %v5409
    %v5432 = vadd.f32 %v5398, %v5409
    %v5433 = vadd.f32 %v5399, %v5409
    %v5434 = vadd.f32 %v5400, %v5409
    %v5435 = vadd.f32 %v5401, %v5409
    %v5436 = vadd.f32 %v5402, %v5409
    %v5437 = vadd.f32 %v5403, %v5409
    %v5438 = vadd.f32 %v5404, %v5409
    %v5439 = vadd.f32 %v5405, %v5409
    %v5440 = vadd.f32 %v5406, %v5409
    %v5441 = vadd.f32 %v5407, %v5409
    %v5442 = vlaneseq
    %v5443 = vand.u32 %v5442, 127
    %vm5444 = vcmp.eq.s32.totalorder %v5443, 0
    %s5445 = sld [smem:[#allocation3 + $0x1e]]
    %vm5446 = vcmp.eq.s32.totalorder %v5443, 1
    %s5447 = sld [smem:[#allocation3 + $0x1f]]
    %s5448 = sld [smem:[#allocation3 + $0x20]]
    %v5449 = vstv %s5447
    %v5450 = vstv %s5448
    %v5451 = vsel %vm5446, %v5449, %v5450
    %v5452 = vstv %s5445
    %v5453 = vsel %vm5444, %v5452, %v5451
    %s5454 = sld [smem:[#allocation3 + $0x21]]
    %v5455 = vstv %s5454
    %v5456 = vadd.f32 %v5455, 0.0
    %s5457 = sld [smem:[#allocation3 + $0x22]]
    %s5458 = sld [smem:[#allocation3 + $0x23]]
    %v5459 = vstv %s5458
    %v5460 = vadd.f32 %v5459, 0.0
    %v5461 = vmul.f32 %v5278, %v5453
    %v5462 = vmul.f32 %v5279, %v5453
    %v5463 = vmul.f32 %v5280, %v5453
    %v5464 = vmul.f32 %v5281, %v5453
    %v5465 = vmul.f32 %v5282, %v5453
    %v5466 = vmul.f32 %v5283, %v5453
    %v5467 = vmul.f32 %v5284, %v5453
    %v5468 = vmul.f32 %v5285, %v5453
    %v5469 = vmul.f32 %v5286, %v5453
    %v5470 = vmul.f32 %v5287, %v5453
    %v5471 = vmul.f32 %v5288, %v5453
    %v5472 = vmul.f32 %v5289, %v5453
    %v5473 = vmul.f32 %v5290, %v5453
    %v5474 = vmul.f32 %v5291, %v5453
    %v5475 = vmul.f32 %v5292, %v5453
    %v5476 = vmul.f32 %v5293, %v5453
    %v5477 = vmul.f32 %v5294, %v5453
    %v5478 = vmul.f32 %v5295, %v5453
    %v5479 = vmul.f32 %v5296, %v5453
    %v5480 = vmul.f32 %v5297, %v5453
    %v5481 = vmul.f32 %v5298, %v5453
    %v5482 = vmul.f32 %v5299, %v5453
    %v5483 = vmul.f32 %v5300, %v5453
    %v5484 = vmul.f32 %v5301, %v5453
    %v5485 = vmul.f32 %v5302, %v5453
    %v5486 = vmul.f32 %v5303, %v5453
    %v5487 = vmul.f32 %v5304, %v5453
    %v5488 = vmul.f32 %v5305, %v5453
    %v5489 = vmul.f32 %v5306, %v5453
    %v5490 = vmul.f32 %v5307, %v5453
    %v5491 = vmul.f32 %v5308, %v5453
    %v5492 = vmul.f32 %v5309, %v5453
    %v5493 = vsel %vm312, %v5461, 0.0
    %5494 = vadd.xlane.f32.xlu0 %v5493
    %v5495 = vpop.xlane.xlu0 %5494
    %v5496 = vsel %vm312, %v5462, 0.0
    %5497 = vadd.xlane.f32.xlu0 %v5496
    %v5498 = vpop.xlane.xlu0 %5497
    %v5499 = vsel %vm312, %v5463, 0.0
    %5500 = vadd.xlane.f32.xlu0 %v5499
    %v5501 = vpop.xlane.xlu0 %5500
    %v5502 = vsel %vm312, %v5464, 0.0
    %5503 = vadd.xlane.f32.xlu0 %v5502
    %v5504 = vpop.xlane.xlu0 %5503
    %v5505 = vsel %vm312, %v5465, 0.0
    %5506 = vadd.xlane.f32.xlu0 %v5505
    %v5507 = vpop.xlane.xlu0 %5506
    %v5508 = vsel %vm312, %v5466, 0.0
    %5509 = vadd.xlane.f32.xlu0 %v5508
    %v5510 = vpop.xlane.xlu0 %5509
    %v5511 = vsel %vm312, %v5467, 0.0
    %5512 = vadd.xlane.f32.xlu0 %v5511
    %v5513 = vpop.xlane.xlu0 %5512
    %v5514 = vsel %vm312, %v5468, 0.0
    %5515 = vadd.xlane.f32.xlu0 %v5514
    %v5516 = vpop.xlane.xlu0 %5515
    %v5517 = vsel %vm312, %v5469, 0.0
    %5518 = vadd.xlane.f32.xlu0 %v5517
    %v5519 = vpop.xlane.xlu0 %5518
    %v5520 = vsel %vm312, %v5470, 0.0
    %5521 = vadd.xlane.f32.xlu0 %v5520
    %v5522 = vpop.xlane.xlu0 %5521
    %v5523 = vsel %vm312, %v5471, 0.0
    %5524 = vadd.xlane.f32.xlu0 %v5523
    %v5525 = vpop.xlane.xlu0 %5524
    %v5526 = vsel %vm312, %v5472, 0.0
    %5527 = vadd.xlane.f32.xlu0 %v5526
    %v5528 = vpop.xlane.xlu0 %5527
    %v5529 = vsel %vm312, %v5473, 0.0
    %5530 = vadd.xlane.f32.xlu0 %v5529
    %v5531 = vpop.xlane.xlu0 %5530
    %v5532 = vsel %vm312, %v5474, 0.0
    %5533 = vadd.xlane.f32.xlu0 %v5532
    %v5534 = vpop.xlane.xlu0 %5533
    %v5535 = vsel %vm312, %v5475, 0.0
    %5536 = vadd.xlane.f32.xlu0 %v5535
    %v5537 = vpop.xlane.xlu0 %5536
    %v5538 = vsel %vm312, %v5476, 0.0
    %5539 = vadd.xlane.f32.xlu0 %v5538
    %v5540 = vpop.xlane.xlu0 %5539
    %v5541 = vsel %vm312, %v5477, 0.0
    %5542 = vadd.xlane.f32.xlu0 %v5541
    %v5543 = vpop.xlane.xlu0 %5542
    %v5544 = vsel %vm312, %v5478, 0.0
    %5545 = vadd.xlane.f32.xlu0 %v5544
    %v5546 = vpop.xlane.xlu0 %5545
    %v5547 = vsel %vm312, %v5479, 0.0
    %5548 = vadd.xlane.f32.xlu0 %v5547
    %v5549 = vpop.xlane.xlu0 %5548
    %v5550 = vsel %vm312, %v5480, 0.0
    %5551 = vadd.xlane.f32.xlu0 %v5550
    %v5552 = vpop.xlane.xlu0 %5551
    %v5553 = vsel %vm312, %v5481, 0.0
    %5554 = vadd.xlane.f32.xlu0 %v5553
    %v5555 = vpop.xlane.xlu0 %5554
    %v5556 = vsel %vm312, %v5482, 0.0
    %5557 = vadd.xlane.f32.xlu0 %v5556
    %v5558 = vpop.xlane.xlu0 %5557
    %v5559 = vsel %vm312, %v5483, 0.0
    %5560 = vadd.xlane.f32.xlu0 %v5559
    %v5561 = vpop.xlane.xlu0 %5560
    %v5562 = vsel %vm312, %v5484, 0.0
    %5563 = vadd.xlane.f32.xlu0 %v5562
    %v5564 = vpop.xlane.xlu0 %5563
    %v5565 = vsel %vm312, %v5485, 0.0
    %5566 = vadd.xlane.f32.xlu0 %v5565
    %v5567 = vpop.xlane.xlu0 %5566
    %v5568 = vsel %vm312, %v5486, 0.0
    %5569 = vadd.xlane.f32.xlu0 %v5568
    %v5570 = vpop.xlane.xlu0 %5569
    %v5571 = vsel %vm312, %v5487, 0.0
    %5572 = vadd.xlane.f32.xlu0 %v5571
    %v5573 = vpop.xlane.xlu0 %5572
    %v5574 = vsel %vm312, %v5488, 0.0
    %5575 = vadd.xlane.f32.xlu0 %v5574
    %v5576 = vpop.xlane.xlu0 %5575
    %v5577 = vsel %vm312, %v5489, 0.0
    %5578 = vadd.xlane.f32.xlu0 %v5577
    %v5579 = vpop.xlane.xlu0 %5578
    %v5580 = vsel %vm312, %v5490, 0.0
    %5581 = vadd.xlane.f32.xlu0 %v5580
    %v5582 = vpop.xlane.xlu0 %5581
    %v5583 = vsel %vm312, %v5491, 0.0
    %5584 = vadd.xlane.f32.xlu0 %v5583
    %v5585 = vpop.xlane.xlu0 %5584
    %v5586 = vsel %vm312, %v5492, 0.0
    %5587 = vadd.xlane.f32.xlu0 %v5586
    %v5588 = vpop.xlane.xlu0 %5587
    %v5589 = vadd.f32 %v5495, %v5456
    %v5590 = vadd.f32 %v5498, %v5456
    %v5591 = vadd.f32 %v5501, %v5456
    %v5592 = vadd.f32 %v5504, %v5456
    %v5593 = vadd.f32 %v5507, %v5456
    %v5594 = vadd.f32 %v5510, %v5456
    %v5595 = vadd.f32 %v5513, %v5456
    %v5596 = vadd.f32 %v5516, %v5456
    %v5597 = vadd.f32 %v5519, %v5456
    %v5598 = vadd.f32 %v5522, %v5456
    %v5599 = vadd.f32 %v5525, %v5456
    %v5600 = vadd.f32 %v5528, %v5456
    %v5601 = vadd.f32 %v5531, %v5456
    %v5602 = vadd.f32 %v5534, %v5456
    %v5603 = vadd.f32 %v5537, %v5456
    %v5604 = vadd.f32 %v5540, %v5456
    %v5605 = vadd.f32 %v5543, %v5456
    %v5606 = vadd.f32 %v5546, %v5456
    %v5607 = vadd.f32 %v5549, %v5456
    %v5608 = vadd.f32 %v5552, %v5456
    %v5609 = vadd.f32 %v5555, %v5456
    %v5610 = vadd.f32 %v5558, %v5456
    %v5611 = vadd.f32 %v5561, %v5456
    %v5612 = vadd.f32 %v5564, %v5456
    %v5613 = vadd.f32 %v5567, %v5456
    %v5614 = vadd.f32 %v5570, %v5456
    %v5615 = vadd.f32 %v5573, %v5456
    %v5616 = vadd.f32 %v5576, %v5456
    %v5617 = vadd.f32 %v5579, %v5456
    %v5618 = vadd.f32 %v5582, %v5456
    %v5619 = vadd.f32 %v5585, %v5456
    %v5620 = vadd.f32 %v5588, %v5456
    %v5621 = vmax.f32 %v5589, 0.0
    %v5622 = vmax.f32 %v5590, 0.0
    %v5623 = vmax.f32 %v5591, 0.0
    %v5624 = vmax.f32 %v5592, 0.0
    %v5625 = vmax.f32 %v5593, 0.0
    %v5626 = vmax.f32 %v5594, 0.0
    %v5627 = vmax.f32 %v5595, 0.0
    %v5628 = vmax.f32 %v5596, 0.0
    %v5629 = vmax.f32 %v5597, 0.0
    %v5630 = vmax.f32 %v5598, 0.0
    %v5631 = vmax.f32 %v5599, 0.0
    %v5632 = vmax.f32 %v5600, 0.0
    %v5633 = vmax.f32 %v5601, 0.0
    %v5634 = vmax.f32 %v5602, 0.0
    %v5635 = vmax.f32 %v5603, 0.0
    %v5636 = vmax.f32 %v5604, 0.0
    %v5637 = vmax.f32 %v5605, 0.0
    %v5638 = vmax.f32 %v5606, 0.0
    %v5639 = vmax.f32 %v5607, 0.0
    %v5640 = vmax.f32 %v5608, 0.0
    %v5641 = vmax.f32 %v5609, 0.0
    %v5642 = vmax.f32 %v5610, 0.0
    %v5643 = vmax.f32 %v5611, 0.0
    %v5644 = vmax.f32 %v5612, 0.0
    %v5645 = vmax.f32 %v5613, 0.0
    %v5646 = vmax.f32 %v5614, 0.0
    %v5647 = vmax.f32 %v5615, 0.0
    %v5648 = vmax.f32 %v5616, 0.0
    %v5649 = vmax.f32 %v5617, 0.0
    %v5650 = vmax.f32 %v5618, 0.0
    %v5651 = vmax.f32 %v5619, 0.0
    %v5652 = vmax.f32 %v5620, 0.0
    %v5653 = vstv %s5457
    %v5654 = vmul.f32 %v5621, %v5653
    %v5655 = vmul.f32 %v5622, %v5653
    %v5656 = vmul.f32 %v5623, %v5653
    %v5657 = vmul.f32 %v5624, %v5653
    %v5658 = vmul.f32 %v5625, %v5653
    %v5659 = vmul.f32 %v5626, %v5653
    %v5660 = vmul.f32 %v5627, %v5653
    %v5661 = vmul.f32 %v5628, %v5653
    %v5662 = vmul.f32 %v5629, %v5653
    %v5663 = vmul.f32 %v5630, %v5653
    %v5664 = vmul.f32 %v5631, %v5653
    %v5665 = vmul.f32 %v5632, %v5653
    %v5666 = vmul.f32 %v5633, %v5653
    %v5667 = vmul.f32 %v5634, %v5653
    %v5668 = vmul.f32 %v5635, %v5653
    %v5669 = vmul.f32 %v5636, %v5653
    %v5670 = vmul.f32 %v5637, %v5653
    %v5671 = vmul.f32 %v5638, %v5653
    %v5672 = vmul.f32 %v5639, %v5653
    %v5673 = vmul.f32 %v5640, %v5653
    %v5674 = vmul.f32 %v5641, %v5653
    %v5675 = vmul.f32 %v5642, %v5653
    %v5676 = vmul.f32 %v5643, %v5653
    %v5677 = vmul.f32 %v5644, %v5653
    %v5678 = vmul.f32 %v5645, %v5653
    %v5679 = vmul.f32 %v5646, %v5653
    %v5680 = vmul.f32 %v5647, %v5653
    %v5681 = vmul.f32 %v5648, %v5653
    %v5682 = vmul.f32 %v5649, %v5653
    %v5683 = vmul.f32 %v5650, %v5653
    %v5684 = vmul.f32 %v5651, %v5653
    %v5685 = vmul.f32 %v5652, %v5653
    %v5686 = vadd.f32 %v5654, %v5460
    %v5687 = vadd.f32 %v5655, %v5460
    %v5688 = vadd.f32 %v5656, %v5460
    %v5689 = vadd.f32 %v5657, %v5460
    %v5690 = vadd.f32 %v5658, %v5460
    %v5691 = vadd.f32 %v5659, %v5460
    %v5692 = vadd.f32 %v5660, %v5460
    %v5693 = vadd.f32 %v5661, %v5460
    %v5694 = vadd.f32 %v5662, %v5460
    %v5695 = vadd.f32 %v5663, %v5460
    %v5696 = vadd.f32 %v5664, %v5460
    %v5697 = vadd.f32 %v5665, %v5460
    %v5698 = vadd.f32 %v5666, %v5460
    %v5699 = vadd.f32 %v5667, %v5460
    %v5700 = vadd.f32 %v5668, %v5460
    %v5701 = vadd.f32 %v5669, %v5460
    %v5702 = vadd.f32 %v5670, %v5460
    %v5703 = vadd.f32 %v5671, %v5460
    %v5704 = vadd.f32 %v5672, %v5460
    %v5705 = vadd.f32 %v5673, %v5460
    %v5706 = vadd.f32 %v5674, %v5460
    %v5707 = vadd.f32 %v5675, %v5460
    %v5708 = vadd.f32 %v5676, %v5460
    %v5709 = vadd.f32 %v5677, %v5460
    %v5710 = vadd.f32 %v5678, %v5460
    %v5711 = vadd.f32 %v5679, %v5460
    %v5712 = vadd.f32 %v5680, %v5460
    %v5713 = vadd.f32 %v5681, %v5460
    %v5714 = vadd.f32 %v5682, %v5460
    %v5715 = vadd.f32 %v5683, %v5460
    %v5716 = vadd.f32 %v5684, %v5460
    %v5717 = vadd.f32 %v5685, %v5460
    %v5718 = vmax.f32 %v5686, %v5688
    %v5719 = vmax.f32 %v5718, %v5690
    %v5720 = vmax.f32 %v5719, %v5692
    %v5721 = vmax.f32 %v5720, %v5694
    %v5722 = vmax.f32 %v5721, %v5696
    %v5723 = vmax.f32 %v5722, %v5698
    %v5724 = vmax.f32 %v5723, %v5700
    %v5725 = vmax.f32 %v5687, %v5689
    %v5726 = vmax.f32 %v5725, %v5691
    %v5727 = vmax.f32 %v5726, %v5693
    %v5728 = vmax.f32 %v5727, %v5695
    %v5729 = vmax.f32 %v5728, %v5697
    %v5730 = vmax.f32 %v5729, %v5699
    %v5731 = vmax.f32 %v5730, %v5701
    %v5732 = vmax.f32 %v5702, %v5704
    %v5733 = vmax.f32 %v5732, %v5706
    %v5734 = vmax.f32 %v5733, %v5708
    %v5735 = vmax.f32 %v5734, %v5710
    %v5736 = vmax.f32 %v5735, %v5712
    %v5737 = vmax.f32 %v5736, %v5714
    %v5738 = vmax.f32 %v5737, %v5716
    %v5739 = vmax.f32 %v5703, %v5705
    %v5740 = vmax.f32 %v5739, %v5707
    %v5741 = vmax.f32 %v5740, %v5709
    %v5742 = vmax.f32 %v5741, %v5711
    %v5743 = vmax.f32 %v5742, %v5713
    %v5744 = vmax.f32 %v5743, %v5715
    %v5745 = vmax.f32 %v5744, %v5717
    %v5746 = vsub.f32 %v5686, %v5724
    %v5747 = vsub.f32 %v5687, %v5731
    %v5748 = vsub.f32 %v5688, %v5724
    %v5749 = vsub.f32 %v5689, %v5731
    %v5750 = vsub.f32 %v5690, %v5724
    %v5751 = vsub.f32 %v5691, %v5731
    %v5752 = vsub.f32 %v5692, %v5724
    %v5753 = vsub.f32 %v5693, %v5731
    %v5754 = vsub.f32 %v5694, %v5724
    %v5755 = vsub.f32 %v5695, %v5731
    %v5756 = vsub.f32 %v5696, %v5724
    %v5757 = vsub.f32 %v5697, %v5731
    %v5758 = vsub.f32 %v5698, %v5724
    %v5759 = vsub.f32 %v5699, %v5731
    %v5760 = vsub.f32 %v5700, %v5724
    %v5761 = vsub.f32 %v5701, %v5731
    %v5762 = vsub.f32 %v5702, %v5738
    %v5763 = vsub.f32 %v5703, %v5745
    %v5764 = vsub.f32 %v5704, %v5738
    %v5765 = vsub.f32 %v5705, %v5745
    %v5766 = vsub.f32 %v5706, %v5738
    %v5767 = vsub.f32 %v5707, %v5745
    %v5768 = vsub.f32 %v5708, %v5738
    %v5769 = vsub.f32 %v5709, %v5745
    %v5770 = vsub.f32 %v5710, %v5738
    %v5771 = vsub.f32 %v5711, %v5745
    %v5772 = vsub.f32 %v5712, %v5738
    %v5773 = vsub.f32 %v5713, %v5745
    %v5774 = vsub.f32 %v5714, %v5738
    %v5775 = vsub.f32 %v5715, %v5745
    %v5776 = vsub.f32 %v5716, %v5738
    %v5777 = vsub.f32 %v5717, %v5745
    %v5778 = vmul.f32 %v5746, 1.442695
    %v5779 = vpow.pop %v5778
    %v5780 = vmul.f32 %v5747, 1.442695
    %v5781 = vpow.pop %v5780
    %v5782 = vmul.f32 %v5748, 1.442695
    %v5783 = vpow.pop %v5782
    %v5784 = vmul.f32 %v5749, 1.442695
    %v5785 = vpow.pop %v5784
    %v5786 = vmul.f32 %v5750, 1.442695
    %v5787 = vpow.pop %v5786
    %v5788 = vmul.f32 %v5751, 1.442695
    %v5789 = vpow.pop %v5788
    %v5790 = vmul.f32 %v5752, 1.442695
    %v5791 = vpow.pop %v5790
    %v5792 = vmul.f32 %v5753, 1.442695
    %v5793 = vpow.pop %v5792
    %v5794 = vmul.f32 %v5754, 1.442695
    %v5795 = vpow.pop %v5794
    %v5796 = vmul.f32 %v5755, 1.442695
    %v5797 = vpow.pop %v5796
    %v5798 = vmul.f32 %v5756, 1.442695
    %v5799 = vpow.pop %v5798
    %v5800 = vmul.f32 %v5757, 1.442695
    %v5801 = vpow.pop %v5800
    %v5802 = vmul.f32 %v5758, 1.442695
    %v5803 = vpow.pop %v5802
    %v5804 = vmul.f32 %v5759, 1.442695
    %v5805 = vpow.pop %v5804
    %v5806 = vmul.f32 %v5760, 1.442695
    %v5807 = vpow.pop %v5806
    %v5808 = vmul.f32 %v5761, 1.442695
    %v5809 = vpow.pop %v5808
    %v5810 = vmul.f32 %v5762, 1.442695
    %v5811 = vpow.pop %v5810
    %v5812 = vmul.f32 %v5763, 1.442695
    %v5813 = vpow.pop %v5812
    %v5814 = vmul.f32 %v5764, 1.442695
    %v5815 = vpow.pop %v5814
    %v5816 = vmul.f32 %v5765, 1.442695
    %v5817 = vpow.pop %v5816
    %v5818 = vmul.f32 %v5766, 1.442695
    %v5819 = vpow.pop %v5818
    %v5820 = vmul.f32 %v5767, 1.442695
    %v5821 = vpow.pop %v5820
    %v5822 = vmul.f32 %v5768, 1.442695
    %v5823 = vpow.pop %v5822
    %v5824 = vmul.f32 %v5769, 1.442695
    %v5825 = vpow.pop %v5824
    %v5826 = vmul.f32 %v5770, 1.442695
    %v5827 = vpow.pop %v5826
    %v5828 = vmul.f32 %v5771, 1.442695
    %v5829 = vpow.pop %v5828
    %v5830 = vmul.f32 %v5772, 1.442695
    %v5831 = vpow.pop %v5830
    %v5832 = vmul.f32 %v5773, 1.442695
    %v5833 = vpow.pop %v5832
    %v5834 = vmul.f32 %v5774, 1.442695
    %v5835 = vpow.pop %v5834
    %v5836 = vmul.f32 %v5775, 1.442695
    %v5837 = vpow.pop %v5836
    %v5838 = vmul.f32 %v5776, 1.442695
    %v5839 = vpow.pop %v5838
    %v5840 = vmul.f32 %v5777, 1.442695
    %v5841 = vpow.pop %v5840
    %v5842 = vadd.f32 %v5779, %v5783
    %v5843 = vadd.f32 %v5842, %v5787
    %v5844 = vadd.f32 %v5843, %v5791
    %v5845 = vadd.f32 %v5844, %v5795
    %v5846 = vadd.f32 %v5845, %v5799
    %v5847 = vadd.f32 %v5846, %v5803
    %v5848 = vadd.f32 %v5847, %v5807
    %v5849 = vadd.f32 %v5781, %v5785
    %v5850 = vadd.f32 %v5849, %v5789
    %v5851 = vadd.f32 %v5850, %v5793
    %v5852 = vadd.f32 %v5851, %v5797
    %v5853 = vadd.f32 %v5852, %v5801
    %v5854 = vadd.f32 %v5853, %v5805
    %v5855 = vadd.f32 %v5854, %v5809
    %v5856 = vadd.f32 %v5811, %v5815
    %v5857 = vadd.f32 %v5856, %v5819
    %v5858 = vadd.f32 %v5857, %v5823
    %v5859 = vadd.f32 %v5858, %v5827
    %v5860 = vadd.f32 %v5859, %v5831
    %v5861 = vadd.f32 %v5860, %v5835
    %v5862 = vadd.f32 %v5861, %v5839
    %v5863 = vadd.f32 %v5813, %v5817
    %v5864 = vadd.f32 %v5863, %v5821
    %v5865 = vadd.f32 %v5864, %v5825
    %v5866 = vadd.f32 %v5865, %v5829
    %v5867 = vadd.f32 %v5866, %v5833
    %v5868 = vadd.f32 %v5867, %v5837
    %v5869 = vadd.f32 %v5868, %v5841
    %v5870 = vmul.f32 %v5848, 3.0
    %v5871 = vmul.f32 %v5855, 3.0
    %v5872 = vmul.f32 %v5862, 3.0
    %v5873 = vmul.f32 %v5869, 3.0
    %v5874 = vrcp.pop %v5870
    %v5875 = vrcp.pop %v5871
    %v5876 = vrcp.pop %v5872
    %v5877 = vrcp.pop %v5873
    %v5878 = vmul.f32 %v5870, %v5874
    %v5879 = vmul.f32 %v5871, %v5875
    %v5880 = vmul.f32 %v5872, %v5876
    %v5881 = vmul.f32 %v5873, %v5877
    %v5882 = vsub.f32 2.0, %v5878
    %v5883 = vsub.f32 2.0, %v5879
    %v5884 = vsub.f32 2.0, %v5880
    %v5885 = vsub.f32 2.0, %v5881
    %v5886 = vmul.f32 %v5874, %v5882
    %v5887 = vmul.f32 %v5875, %v5883
    %v5888 = vmul.f32 %v5876, %v5884
    %v5889 = vmul.f32 %v5877, %v5885
    %v5890 = vmul.f32 %v5779, %v5886
    %v5891 = vmul.f32 %v5781, %v5887
    %v5892 = vmul.f32 %v5783, %v5886
    %v5893 = vmul.f32 %v5785, %v5887
    %v5894 = vmul.f32 %v5787, %v5886
    %v5895 = vmul.f32 %v5789, %v5887
    %v5896 = vmul.f32 %v5791, %v5886
    %v5897 = vmul.f32 %v5793, %v5887
    %v5898 = vmul.f32 %v5795, %v5886
    %v5899 = vmul.f32 %v5797, %v5887
    %v5900 = vmul.f32 %v5799, %v5886
    %v5901 = vmul.f32 %v5801, %v5887
    %v5902 = vmul.f32 %v5803, %v5886
    %v5903 = vmul.f32 %v5805, %v5887
    %v5904 = vmul.f32 %v5807, %v5886
    %v5905 = vmul.f32 %v5809, %v5887
    %v5906 = vmul.f32 %v5811, %v5888
    %v5907 = vmul.f32 %v5813, %v5889
    %v5908 = vmul.f32 %v5815, %v5888
    %v5909 = vmul.f32 %v5817, %v5889
    %v5910 = vmul.f32 %v5819, %v5888
    %v5911 = vmul.f32 %v5821, %v5889
    %v5912 = vmul.f32 %v5823, %v5888
    %v5913 = vmul.f32 %v5825, %v5889
    %v5914 = vmul.f32 %v5827, %v5888
    %v5915 = vmul.f32 %v5829, %v5889
    %v5916 = vmul.f32 %v5831, %v5888
    %v5917 = vmul.f32 %v5833, %v5889
    %v5918 = vmul.f32 %v5835, %v5888
    %v5919 = vmul.f32 %v5837, %v5889
    %v5920 = vmul.f32 %v5839, %v5888
    %v5921 = vmul.f32 %v5841, %v5889
    %v5922 = vmul.f32 %v5278, %v5890
    %v5923 = vmul.f32 %v5279, %v5891
    %v5924 = vmul.f32 %v5280, %v5892
    %v5925 = vmul.f32 %v5281, %v5893
    %v5926 = vmul.f32 %v5282, %v5894
    %v5927 = vmul.f32 %v5283, %v5895
    %v5928 = vmul.f32 %v5284, %v5896
    %v5929 = vmul.f32 %v5285, %v5897
    %v5930 = vmul.f32 %v5286, %v5898
    %v5931 = vmul.f32 %v5287, %v5899
    %v5932 = vmul.f32 %v5288, %v5900
    %v5933 = vmul.f32 %v5289, %v5901
    %v5934 = vmul.f32 %v5290, %v5902
    %v5935 = vmul.f32 %v5291, %v5903
    %v5936 = vmul.f32 %v5292, %v5904
    %v5937 = vmul.f32 %v5293, %v5905
    %v5938 = vmul.f32 %v5294, %v5906
    %v5939 = vmul.f32 %v5295, %v5907
    %v5940 = vmul.f32 %v5296, %v5908
    %v5941 = vmul.f32 %v5297, %v5909
    %v5942 = vmul.f32 %v5298, %v5910
    %v5943 = vmul.f32 %v5299, %v5911
    %v5944 = vmul.f32 %v5300, %v5912
    %v5945 = vmul.f32 %v5301, %v5913
    %v5946 = vmul.f32 %v5302, %v5914
    %v5947 = vmul.f32 %v5303, %v5915
    %v5948 = vmul.f32 %v5304, %v5916
    %v5949 = vmul.f32 %v5305, %v5917
    %v5950 = vmul.f32 %v5306, %v5918
    %v5951 = vmul.f32 %v5307, %v5919
    %v5952 = vmul.f32 %v5308, %v5920
    %v5953 = vmul.f32 %v5309, %v5921
    %v5954 = vmul.f32 %v5344, %v5453
    %v5955 = vmul.f32 %v5345, %v5453
    %v5956 = vmul.f32 %v5346, %v5453
    %v5957 = vmul.f32 %v5347, %v5453
    %v5958 = vmul.f32 %v5348, %v5453
    %v5959 = vmul.f32 %v5349, %v5453
    %v5960 = vmul.f32 %v5350, %v5453
    %v5961 = vmul.f32 %v5351, %v5453
    %v5962 = vmul.f32 %v5352, %v5453
    %v5963 = vmul.f32 %v5353, %v5453
    %v5964 = vmul.f32 %v5354, %v5453
    %v5965 = vmul.f32 %v5355, %v5453
    %v5966 = vmul.f32 %v5356, %v5453
    %v5967 = vmul.f32 %v5357, %v5453
    %v5968 = vmul.f32 %v5358, %v5453
    %v5969 = vmul.f32 %v5359, %v5453
    %v5970 = vmul.f32 %v5360, %v5453
    %v5971 = vmul.f32 %v5361, %v5453
    %v5972 = vmul.f32 %v5362, %v5453
    %v5973 = vmul.f32 %v5363, %v5453
    %v5974 = vmul.f32 %v5364, %v5453
    %v5975 = vmul.f32 %v5365, %v5453
    %v5976 = vmul.f32 %v5366, %v5453
    %v5977 = vmul.f32 %v5367, %v5453
    %v5978 = vmul.f32 %v5368, %v5453
    %v5979 = vmul.f32 %v5369, %v5453
    %v5980 = vmul.f32 %v5370, %v5453
    %v5981 = vmul.f32 %v5371, %v5453
    %v5982 = vmul.f32 %v5372, %v5453
    %v5983 = vmul.f32 %v5373, %v5453
    %v5984 = vmul.f32 %v5374, %v5453
    %v5985 = vmul.f32 %v5375, %v5453
    %v5986 = vsel %vm312, %v5954, 0.0
    %5987 = vadd.xlane.f32.xlu0 %v5986
    %v5988 = vpop.xlane.xlu0 %5987
    %v5989 = vsel %vm312, %v5955, 0.0
    %5990 = vadd.xlane.f32.xlu0 %v5989
    %v5991 = vpop.xlane.xlu0 %5990
    %v5992 = vsel %vm312, %v5956, 0.0
    %5993 = vadd.xlane.f32.xlu0 %v5992
    %v5994 = vpop.xlane.xlu0 %5993
    %v5995 = vsel %vm312, %v5957, 0.0
    %5996 = vadd.xlane.f32.xlu0 %v5995
    %v5997 = vpop.xlane.xlu0 %5996
    %v5998 = vsel %vm312, %v5958, 0.0
    %5999 = vadd.xlane.f32.xlu0 %v5998
    %v6000 = vpop.xlane.xlu0 %5999
    %v6001 = vsel %vm312, %v5959, 0.0
    %6002 = vadd.xlane.f32.xlu0 %v6001
    %v6003 = vpop.xlane.xlu0 %6002
    %v6004 = vsel %vm312, %v5960, 0.0
    %6005 = vadd.xlane.f32.xlu0 %v6004
    %v6006 = vpop.xlane.xlu0 %6005
    %v6007 = vsel %vm312, %v5961, 0.0
    %6008 = vadd.xlane.f32.xlu0 %v6007
    %v6009 = vpop.xlane.xlu0 %6008
    %v6010 = vsel %vm312, %v5962, 0.0
    %6011 = vadd.xlane.f32.xlu0 %v6010
    %v6012 = vpop.xlane.xlu0 %6011
    %v6013 = vsel %vm312, %v5963, 0.0
    %6014 = vadd.xlane.f32.xlu0 %v6013
    %v6015 = vpop.xlane.xlu0 %6014
    %v6016 = vsel %vm312, %v5964, 0.0
    %6017 = vadd.xlane.f32.xlu0 %v6016
    %v6018 = vpop.xlane.xlu0 %6017
    %v6019 = vsel %vm312, %v5965, 0.0
    %6020 = vadd.xlane.f32.xlu0 %v6019
    %v6021 = vpop.xlane.xlu0 %6020
    %v6022 = vsel %vm312, %v5966, 0.0
    %6023 = vadd.xlane.f32.xlu0 %v6022
    %v6024 = vpop.xlane.xlu0 %6023
    %v6025 = vsel %vm312, %v5967, 0.0
    %6026 = vadd.xlane.f32.xlu0 %v6025
    %v6027 = vpop.xlane.xlu0 %6026
    %v6028 = vsel %vm312, %v5968, 0.0
    %6029 = vadd.xlane.f32.xlu0 %v6028
    %v6030 = vpop.xlane.xlu0 %6029
    %v6031 = vsel %vm312, %v5969, 0.0
    %6032 = vadd.xlane.f32.xlu0 %v6031
    %v6033 = vpop.xlane.xlu0 %6032
    %v6034 = vsel %vm312, %v5970, 0.0
    %6035 = vadd.xlane.f32.xlu0 %v6034
    %v6036 = vpop.xlane.xlu0 %6035
    %v6037 = vsel %vm312, %v5971, 0.0
    %6038 = vadd.xlane.f32.xlu0 %v6037
    %v6039 = vpop.xlane.xlu0 %6038
    %v6040 = vsel %vm312, %v5972, 0.0
    %6041 = vadd.xlane.f32.xlu0 %v6040
    %v6042 = vpop.xlane.xlu0 %6041
    %v6043 = vsel %vm312, %v5973, 0.0
    %6044 = vadd.xlane.f32.xlu0 %v6043
    %v6045 = vpop.xlane.xlu0 %6044
    %v6046 = vsel %vm312, %v5974, 0.0
    %6047 = vadd.xlane.f32.xlu0 %v6046
    %v6048 = vpop.xlane.xlu0 %6047
    %v6049 = vsel %vm312, %v5975, 0.0
    %6050 = vadd.xlane.f32.xlu0 %v6049
    %v6051 = vpop.xlane.xlu0 %6050
    %v6052 = vsel %vm312, %v5976, 0.0
    %6053 = vadd.xlane.f32.xlu0 %v6052
    %v6054 = vpop.xlane.xlu0 %6053
    %v6055 = vsel %vm312, %v5977, 0.0
    %6056 = vadd.xlane.f32.xlu0 %v6055
    %v6057 = vpop.xlane.xlu0 %6056
    %v6058 = vsel %vm312, %v5978, 0.0
    %6059 = vadd.xlane.f32.xlu0 %v6058
    %v6060 = vpop.xlane.xlu0 %6059
    %v6061 = vsel %vm312, %v5979, 0.0
    %6062 = vadd.xlane.f32.xlu0 %v6061
    %v6063 = vpop.xlane.xlu0 %6062
    %v6064 = vsel %vm312, %v5980, 0.0
    %6065 = vadd.xlane.f32.xlu0 %v6064
    %v6066 = vpop.xlane.xlu0 %6065
    %v6067 = vsel %vm312, %v5981, 0.0
    %6068 = vadd.xlane.f32.xlu0 %v6067
    %v6069 = vpop.xlane.xlu0 %6068
    %v6070 = vsel %vm312, %v5982, 0.0
    %6071 = vadd.xlane.f32.xlu0 %v6070
    %v6072 = vpop.xlane.xlu0 %6071
    %v6073 = vsel %vm312, %v5983, 0.0
    %6074 = vadd.xlane.f32.xlu0 %v6073
    %v6075 = vpop.xlane.xlu0 %6074
    %v6076 = vsel %vm312, %v5984, 0.0
    %6077 = vadd.xlane.f32.xlu0 %v6076
    %v6078 = vpop.xlane.xlu0 %6077
    %v6079 = vsel %vm312, %v5985, 0.0
    %6080 = vadd.xlane.f32.xlu0 %v6079
    %v6081 = vpop.xlane.xlu0 %6080
    %v6082 = vadd.f32 %v5988, %v5456
    %v6083 = vadd.f32 %v5991, %v5456
    %v6084 = vadd.f32 %v5994, %v5456
    %v6085 = vadd.f32 %v5997, %v5456
    %v6086 = vadd.f32 %v6000, %v5456
    %v6087 = vadd.f32 %v6003, %v5456
    %v6088 = vadd.f32 %v6006, %v5456
    %v6089 = vadd.f32 %v6009, %v5456
    %v6090 = vadd.f32 %v6012, %v5456
    %v6091 = vadd.f32 %v6015, %v5456
    %v6092 = vadd.f32 %v6018, %v5456
    %v6093 = vadd.f32 %v6021, %v5456
    %v6094 = vadd.f32 %v6024, %v5456
    %v6095 = vadd.f32 %v6027, %v5456
    %v6096 = vadd.f32 %v6030, %v5456
    %v6097 = vadd.f32 %v6033, %v5456
    %v6098 = vadd.f32 %v6036, %v5456
    %v6099 = vadd.f32 %v6039, %v5456
    %v6100 = vadd.f32 %v6042, %v5456
    %v6101 = vadd.f32 %v6045, %v5456
    %v6102 = vadd.f32 %v6048, %v5456
    %v6103 = vadd.f32 %v6051, %v5456
    %v6104 = vadd.f32 %v6054, %v5456
    %v6105 = vadd.f32 %v6057, %v5456
    %v6106 = vadd.f32 %v6060, %v5456
    %v6107 = vadd.f32 %v6063, %v5456
    %v6108 = vadd.f32 %v6066, %v5456
    %v6109 = vadd.f32 %v6069, %v5456
    %v6110 = vadd.f32 %v6072, %v5456
    %v6111 = vadd.f32 %v6075, %v5456
    %v6112 = vadd.f32 %v6078, %v5456
    %v6113 = vadd.f32 %v6081, %v5456
    %v6114 = vmax.f32 %v6082, 0.0
    %v6115 = vmax.f32 %v6083, 0.0
    %v6116 = vmax.f32 %v6084, 0.0
    %v6117 = vmax.f32 %v6085, 0.0
    %v6118 = vmax.f32 %v6086, 0.0
    %v6119 = vmax.f32 %v6087, 0.0
    %v6120 = vmax.f32 %v6088, 0.0
    %v6121 = vmax.f32 %v6089, 0.0
    %v6122 = vmax.f32 %v6090, 0.0
    %v6123 = vmax.f32 %v6091, 0.0
    %v6124 = vmax.f32 %v6092, 0.0
    %v6125 = vmax.f32 %v6093, 0.0
    %v6126 = vmax.f32 %v6094, 0.0
    %v6127 = vmax.f32 %v6095, 0.0
    %v6128 = vmax.f32 %v6096, 0.0
    %v6129 = vmax.f32 %v6097, 0.0
    %v6130 = vmax.f32 %v6098, 0.0
    %v6131 = vmax.f32 %v6099, 0.0
    %v6132 = vmax.f32 %v6100, 0.0
    %v6133 = vmax.f32 %v6101, 0.0
    %v6134 = vmax.f32 %v6102, 0.0
    %v6135 = vmax.f32 %v6103, 0.0
    %v6136 = vmax.f32 %v6104, 0.0
    %v6137 = vmax.f32 %v6105, 0.0
    %v6138 = vmax.f32 %v6106, 0.0
    %v6139 = vmax.f32 %v6107, 0.0
    %v6140 = vmax.f32 %v6108, 0.0
    %v6141 = vmax.f32 %v6109, 0.0
    %v6142 = vmax.f32 %v6110, 0.0
    %v6143 = vmax.f32 %v6111, 0.0
    %v6144 = vmax.f32 %v6112, 0.0
    %v6145 = vmax.f32 %v6113, 0.0
    %v6146 = vmul.f32 %v6114, %v5653
    %v6147 = vmul.f32 %v6115, %v5653
    %v6148 = vmul.f32 %v6116, %v5653
    %v6149 = vmul.f32 %v6117, %v5653
    %v6150 = vmul.f32 %v6118, %v5653
    %v6151 = vmul.f32 %v6119, %v5653
    %v6152 = vmul.f32 %v6120, %v5653
    %v6153 = vmul.f32 %v6121, %v5653
    %v6154 = vmul.f32 %v6122, %v5653
    %v6155 = vmul.f32 %v6123, %v5653
    %v6156 = vmul.f32 %v6124, %v5653
    %v6157 = vmul.f32 %v6125, %v5653
    %v6158 = vmul.f32 %v6126, %v5653
    %v6159 = vmul.f32 %v6127, %v5653
    %v6160 = vmul.f32 %v6128, %v5653
    %v6161 = vmul.f32 %v6129, %v5653
    %v6162 = vmul.f32 %v6130, %v5653
    %v6163 = vmul.f32 %v6131, %v5653
    %v6164 = vmul.f32 %v6132, %v5653
    %v6165 = vmul.f32 %v6133, %v5653
    %v6166 = vmul.f32 %v6134, %v5653
    %v6167 = vmul.f32 %v6135, %v5653
    %v6168 = vmul.f32 %v6136, %v5653
    %v6169 = vmul.f32 %v6137, %v5653
    %v6170 = vmul.f32 %v6138, %v5653
    %v6171 = vmul.f32 %v6139, %v5653
    %v6172 = vmul.f32 %v6140, %v5653
    %v6173 = vmul.f32 %v6141, %v5653
    %v6174 = vmul.f32 %v6142, %v5653
    %v6175 = vmul.f32 %v6143, %v5653
    %v6176 = vmul.f32 %v6144, %v5653
    %v6177 = vmul.f32 %v6145, %v5653
    %v6178 = vadd.f32 %v6146, %v5460
    %v6179 = vadd.f32 %v6147, %v5460
    %v6180 = vadd.f32 %v6148, %v5460
    %v6181 = vadd.f32 %v6149, %v5460
    %v6182 = vadd.f32 %v6150, %v5460
    %v6183 = vadd.f32 %v6151, %v5460
    %v6184 = vadd.f32 %v6152, %v5460
    %v6185 = vadd.f32 %v6153, %v5460
    %v6186 = vadd.f32 %v6154, %v5460
    %v6187 = vadd.f32 %v6155, %v5460
    %v6188 = vadd.f32 %v6156, %v5460
    %v6189 = vadd.f32 %v6157, %v5460
    %v6190 = vadd.f32 %v6158, %v5460
    %v6191 = vadd.f32 %v6159, %v5460
    %v6192 = vadd.f32 %v6160, %v5460
    %v6193 = vadd.f32 %v6161, %v5460
    %v6194 = vadd.f32 %v6162, %v5460
    %v6195 = vadd.f32 %v6163, %v5460
    %v6196 = vadd.f32 %v6164, %v5460
    %v6197 = vadd.f32 %v6165, %v5460
    %v6198 = vadd.f32 %v6166, %v5460
    %v6199 = vadd.f32 %v6167, %v5460
    %v6200 = vadd.f32 %v6168, %v5460
    %v6201 = vadd.f32 %v6169, %v5460
    %v6202 = vadd.f32 %v6170, %v5460
    %v6203 = vadd.f32 %v6171, %v5460
    %v6204 = vadd.f32 %v6172, %v5460
    %v6205 = vadd.f32 %v6173, %v5460
    %v6206 = vadd.f32 %v6174, %v5460
    %v6207 = vadd.f32 %v6175, %v5460
    %v6208 = vadd.f32 %v6176, %v5460
    %v6209 = vadd.f32 %v6177, %v5460
    %v6210 = vmax.f32 %v6178, %v6180
    %v6211 = vmax.f32 %v6210, %v6182
    %v6212 = vmax.f32 %v6211, %v6184
    %v6213 = vmax.f32 %v6212, %v6186
    %v6214 = vmax.f32 %v6213, %v6188
    %v6215 = vmax.f32 %v6214, %v6190
    %v6216 = vmax.f32 %v6215, %v6192
    %v6217 = vmax.f32 %v6179, %v6181
    %v6218 = vmax.f32 %v6217, %v6183
    %v6219 = vmax.f32 %v6218, %v6185
    %v6220 = vmax.f32 %v6219, %v6187
    %v6221 = vmax.f32 %v6220, %v6189
    %v6222 = vmax.f32 %v6221, %v6191
    %v6223 = vmax.f32 %v6222, %v6193
    %v6224 = vmax.f32 %v6194, %v6196
    %v6225 = vmax.f32 %v6224, %v6198
    %v6226 = vmax.f32 %v6225, %v6200
    %v6227 = vmax.f32 %v6226, %v6202
    %v6228 = vmax.f32 %v6227, %v6204
    %v6229 = vmax.f32 %v6228, %v6206
    %v6230 = vmax.f32 %v6229, %v6208
    %v6231 = vmax.f32 %v6195, %v6197
    %v6232 = vmax.f32 %v6231, %v6199
    %v6233 = vmax.f32 %v6232, %v6201
    %v6234 = vmax.f32 %v6233, %v6203
    %v6235 = vmax.f32 %v6234, %v6205
    %v6236 = vmax.f32 %v6235, %v6207
    %v6237 = vmax.f32 %v6236, %v6209
    %v6238 = vsub.f32 %v6178, %v6216
    %v6239 = vsub.f32 %v6179, %v6223
    %v6240 = vsub.f32 %v6180, %v6216
    %v6241 = vsub.f32 %v6181, %v6223
    %v6242 = vsub.f32 %v6182, %v6216
    %v6243 = vsub.f32 %v6183, %v6223
    %v6244 = vsub.f32 %v6184, %v6216
    %v6245 = vsub.f32 %v6185, %v6223
    %v6246 = vsub.f32 %v6186, %v6216
    %v6247 = vsub.f32 %v6187, %v6223
    %v6248 = vsub.f32 %v6188, %v6216
    %v6249 = vsub.f32 %v6189, %v6223
    %v6250 = vsub.f32 %v6190, %v6216
    %v6251 = vsub.f32 %v6191, %v6223
    %v6252 = vsub.f32 %v6192, %v6216
    %v6253 = vsub.f32 %v6193, %v6223
    %v6254 = vsub.f32 %v6194, %v6230
    %v6255 = vsub.f32 %v6195, %v6237
    %v6256 = vsub.f32 %v6196, %v6230
    %v6257 = vsub.f32 %v6197, %v6237
    %v6258 = vsub.f32 %v6198, %v6230
    %v6259 = vsub.f32 %v6199, %v6237
    %v6260 = vsub.f32 %v6200, %v6230
    %v6261 = vsub.f32 %v6201, %v6237
    %v6262 = vsub.f32 %v6202, %v6230
    %v6263 = vsub.f32 %v6203, %v6237
    %v6264 = vsub.f32 %v6204, %v6230
    %v6265 = vsub.f32 %v6205, %v6237
    %v6266 = vsub.f32 %v6206, %v6230
    %v6267 = vsub.f32 %v6207, %v6237
    %v6268 = vsub.f32 %v6208, %v6230
    %v6269 = vsub.f32 %v6209, %v6237
    %v6270 = vmul.f32 %v6238, 1.442695
    %v6271 = vpow.pop %v6270
    %v6272 = vmul.f32 %v6239, 1.442695
    %v6273 = vpow.pop %v6272
    %v6274 = vmul.f32 %v6240, 1.442695
    %v6275 = vpow.pop %v6274
    %v6276 = vmul.f32 %v6241, 1.442695
    %v6277 = vpow.pop %v6276
    %v6278 = vmul.f32 %v6242, 1.442695
    %v6279 = vpow.pop %v6278
    %v6280 = vmul.f32 %v6243, 1.442695
    %v6281 = vpow.pop %v6280
    %v6282 = vmul.f32 %v6244, 1.442695
    %v6283 = vpow.pop %v6282
    %v6284 = vmul.f32 %v6245, 1.442695
    %v6285 = vpow.pop %v6284
    %v6286 = vmul.f32 %v6246, 1.442695
    %v6287 = vpow.pop %v6286
    %v6288 = vmul.f32 %v6247, 1.442695
    %v6289 = vpow.pop %v6288
    %v6290 = vmul.f32 %v6248, 1.442695
    %v6291 = vpow.pop %v6290
    %v6292 = vmul.f32 %v6249, 1.442695
    %v6293 = vpow.pop %v6292
    %v6294 = vmul.f32 %v6250, 1.442695
    %v6295 = vpow.pop %v6294
    %v6296 = vmul.f32 %v6251, 1.442695
    %v6297 = vpow.pop %v6296
    %v6298 = vmul.f32 %v6252, 1.442695
    %v6299 = vpow.pop %v6298
    %v6300 = vmul.f32 %v6253, 1.442695
    %v6301 = vpow.pop %v6300
    %v6302 = vmul.f32 %v6254, 1.442695
    %v6303 = vpow.pop %v6302
    %v6304 = vmul.f32 %v6255, 1.442695
    %v6305 = vpow.pop %v6304
    %v6306 = vmul.f32 %v6256, 1.442695
    %v6307 = vpow.pop %v6306
    %v6308 = vmul.f32 %v6257, 1.442695
    %v6309 = vpow.pop %v6308
    %v6310 = vmul.f32 %v6258, 1.442695
    %v6311 = vpow.pop %v6310
    %v6312 = vmul.f32 %v6259, 1.442695
    %v6313 = vpow.pop %v6312
    %v6314 = vmul.f32 %v6260, 1.442695
    %v6315 = vpow.pop %v6314
    %v6316 = vmul.f32 %v6261, 1.442695
    %v6317 = vpow.pop %v6316
    %v6318 = vmul.f32 %v6262, 1.442695
    %v6319 = vpow.pop %v6318
    %v6320 = vmul.f32 %v6263, 1.442695
    %v6321 = vpow.pop %v6320
    %v6322 = vmul.f32 %v6264, 1.442695
    %v6323 = vpow.pop %v6322
    %v6324 = vmul.f32 %v6265, 1.442695
    %v6325 = vpow.pop %v6324
    %v6326 = vmul.f32 %v6266, 1.442695
    %v6327 = vpow.pop %v6326
    %v6328 = vmul.f32 %v6267, 1.442695
    %v6329 = vpow.pop %v6328
    %v6330 = vmul.f32 %v6268, 1.442695
    %v6331 = vpow.pop %v6330
    %v6332 = vmul.f32 %v6269, 1.442695
    %v6333 = vpow.pop %v6332
    %v6334 = vadd.f32 %v6271, %v6275
    %v6335 = vadd.f32 %v6334, %v6279
    %v6336 = vadd.f32 %v6335, %v6283
    %v6337 = vadd.f32 %v6336, %v6287
    %v6338 = vadd.f32 %v6337, %v6291
    %v6339 = vadd.f32 %v6338, %v6295
    %v6340 = vadd.f32 %v6339, %v6299
    %v6341 = vadd.f32 %v6273, %v6277
    %v6342 = vadd.f32 %v6341, %v6281
    %v6343 = vadd.f32 %v6342, %v6285
    %v6344 = vadd.f32 %v6343, %v6289
    %v6345 = vadd.f32 %v6344, %v6293
    %v6346 = vadd.f32 %v6345, %v6297
    %v6347 = vadd.f32 %v6346, %v6301
    %v6348 = vadd.f32 %v6303, %v6307
    %v6349 = vadd.f32 %v6348, %v6311
    %v6350 = vadd.f32 %v6349, %v6315
    %v6351 = vadd.f32 %v6350, %v6319
    %v6352 = vadd.f32 %v6351, %v6323
    %v6353 = vadd.f32 %v6352, %v6327
    %v6354 = vadd.f32 %v6353, %v6331
    %v6355 = vadd.f32 %v6305, %v6309
    %v6356 = vadd.f32 %v6355, %v6313
    %v6357 = vadd.f32 %v6356, %v6317
    %v6358 = vadd.f32 %v6357, %v6321
    %v6359 = vadd.f32 %v6358, %v6325
    %v6360 = vadd.f32 %v6359, %v6329
    %v6361 = vadd.f32 %v6360, %v6333
    %v6362 = vmul.f32 %v6340, 3.0
    %v6363 = vmul.f32 %v6347, 3.0
    %v6364 = vmul.f32 %v6354, 3.0
    %v6365 = vmul.f32 %v6361, 3.0
    %v6366 = vrcp.pop %v6362
    %v6367 = vrcp.pop %v6363
    %v6368 = vrcp.pop %v6364
    %v6369 = vrcp.pop %v6365
    %v6370 = vmul.f32 %v6362, %v6366
    %v6371 = vmul.f32 %v6363, %v6367
    %v6372 = vmul.f32 %v6364, %v6368
    %v6373 = vmul.f32 %v6365, %v6369
    %v6374 = vsub.f32 2.0, %v6370
    %v6375 = vsub.f32 2.0, %v6371
    %v6376 = vsub.f32 2.0, %v6372
    %v6377 = vsub.f32 2.0, %v6373
    %v6378 = vmul.f32 %v6366, %v6374
    %v6379 = vmul.f32 %v6367, %v6375
    %v6380 = vmul.f32 %v6368, %v6376
    %v6381 = vmul.f32 %v6369, %v6377
    %v6382 = vmul.f32 %v6271, %v6378
    %v6383 = vmul.f32 %v6273, %v6379
    %v6384 = vmul.f32 %v6275, %v6378
    %v6385 = vmul.f32 %v6277, %v6379
    %v6386 = vmul.f32 %v6279, %v6378
    %v6387 = vmul.f32 %v6281, %v6379
    %v6388 = vmul.f32 %v6283, %v6378
    %v6389 = vmul.f32 %v6285, %v6379
    %v6390 = vmul.f32 %v6287, %v6378
    %v6391 = vmul.f32 %v6289, %v6379
    %v6392 = vmul.f32 %v6291, %v6378
    %v6393 = vmul.f32 %v6293, %v6379
    %v6394 = vmul.f32 %v6295, %v6378
    %v6395 = vmul.f32 %v6297, %v6379
    %v6396 = vmul.f32 %v6299, %v6378
    %v6397 = vmul.f32 %v6301, %v6379
    %v6398 = vmul.f32 %v6303, %v6380
    %v6399 = vmul.f32 %v6305, %v6381
    %v6400 = vmul.f32 %v6307, %v6380
    %v6401 = vmul.f32 %v6309, %v6381
    %v6402 = vmul.f32 %v6311, %v6380
    %v6403 = vmul.f32 %v6313, %v6381
    %v6404 = vmul.f32 %v6315, %v6380
    %v6405 = vmul.f32 %v6317, %v6381
    %v6406 = vmul.f32 %v6319, %v6380
    %v6407 = vmul.f32 %v6321, %v6381
    %v6408 = vmul.f32 %v6323, %v6380
    %v6409 = vmul.f32 %v6325, %v6381
    %v6410 = vmul.f32 %v6327, %v6380
    %v6411 = vmul.f32 %v6329, %v6381
    %v6412 = vmul.f32 %v6331, %v6380
    %v6413 = vmul.f32 %v6333, %v6381
    %v6414 = vmul.f32 %v5344, %v6382
    %v6415 = vmul.f32 %v5345, %v6383
    %v6416 = vmul.f32 %v5346, %v6384
    %v6417 = vmul.f32 %v5347, %v6385
    %v6418 = vmul.f32 %v5348, %v6386
    %v6419 = vmul.f32 %v5349, %v6387
    %v6420 = vmul.f32 %v5350, %v6388
    %v6421 = vmul.f32 %v5351, %v6389
    %v6422 = vmul.f32 %v5352, %v6390
    %v6423 = vmul.f32 %v5353, %v6391
    %v6424 = vmul.f32 %v5354, %v6392
    %v6425 = vmul.f32 %v5355, %v6393
    %v6426 = vmul.f32 %v5356, %v6394
    %v6427 = vmul.f32 %v5357, %v6395
    %v6428 = vmul.f32 %v5358, %v6396
    %v6429 = vmul.f32 %v5359, %v6397
    %v6430 = vmul.f32 %v5360, %v6398
    %v6431 = vmul.f32 %v5361, %v6399
    %v6432 = vmul.f32 %v5362, %v6400
    %v6433 = vmul.f32 %v5363, %v6401
    %v6434 = vmul.f32 %v5364, %v6402
    %v6435 = vmul.f32 %v5365, %v6403
    %v6436 = vmul.f32 %v5366, %v6404
    %v6437 = vmul.f32 %v5367, %v6405
    %v6438 = vmul.f32 %v5368, %v6406
    %v6439 = vmul.f32 %v5369, %v6407
    %v6440 = vmul.f32 %v5370, %v6408
    %v6441 = vmul.f32 %v5371, %v6409
    %v6442 = vmul.f32 %v5372, %v6410
    %v6443 = vmul.f32 %v5373, %v6411
    %v6444 = vmul.f32 %v5374, %v6412
    %v6445 = vmul.f32 %v5375, %v6413
    %v6446 = vadd.f32 %v5922, %v6414
    %v6447 = vadd.f32 %v5923, %v6415
    %v6448 = vadd.f32 %v5924, %v6416
    %v6449 = vadd.f32 %v5925, %v6417
    %v6450 = vadd.f32 %v5926, %v6418
    %v6451 = vadd.f32 %v5927, %v6419
    %v6452 = vadd.f32 %v5928, %v6420
    %v6453 = vadd.f32 %v5929, %v6421
    %v6454 = vadd.f32 %v5930, %v6422
    %v6455 = vadd.f32 %v5931, %v6423
    %v6456 = vadd.f32 %v5932, %v6424
    %v6457 = vadd.f32 %v5933, %v6425
    %v6458 = vadd.f32 %v5934, %v6426
    %v6459 = vadd.f32 %v5935, %v6427
    %v6460 = vadd.f32 %v5936, %v6428
    %v6461 = vadd.f32 %v5937, %v6429
    %v6462 = vadd.f32 %v5938, %v6430
    %v6463 = vadd.f32 %v5939, %v6431
    %v6464 = vadd.f32 %v5940, %v6432
    %v6465 = vadd.f32 %v5941, %v6433
    %v6466 = vadd.f32 %v5942, %v6434
    %v6467 = vadd.f32 %v5943, %v6435
    %v6468 = vadd.f32 %v5944, %v6436
    %v6469 = vadd.f32 %v5945, %v6437
    %v6470 = vadd.f32 %v5946, %v6438
    %v6471 = vadd.f32 %v5947, %v6439
    %v6472 = vadd.f32 %v5948, %v6440
    %v6473 = vadd.f32 %v5949, %v6441
    %v6474 = vadd.f32 %v5950, %v6442
    %v6475 = vadd.f32 %v5951, %v6443
    %v6476 = vadd.f32 %v5952, %v6444
    %v6477 = vadd.f32 %v5953, %v6445
    %v6478 = vmul.f32 %v5410, %v5453
    %v6479 = vmul.f32 %v5411, %v5453
    %v6480 = vmul.f32 %v5412, %v5453
    %v6481 = vmul.f32 %v5413, %v5453
    %v6482 = vmul.f32 %v5414, %v5453
    %v6483 = vmul.f32 %v5415, %v5453
    %v6484 = vmul.f32 %v5416, %v5453
    %v6485 = vmul.f32 %v5417, %v5453
    %v6486 = vmul.f32 %v5418, %v5453
    %v6487 = vmul.f32 %v5419, %v5453
    %v6488 = vmul.f32 %v5420, %v5453
    %v6489 = vmul.f32 %v5421, %v5453
    %v6490 = vmul.f32 %v5422, %v5453
    %v6491 = vmul.f32 %v5423, %v5453
    %v6492 = vmul.f32 %v5424, %v5453
    %v6493 = vmul.f32 %v5425, %v5453
    %v6494 = vmul.f32 %v5426, %v5453
    %v6495 = vmul.f32 %v5427, %v5453
    %v6496 = vmul.f32 %v5428, %v5453
    %v6497 = vmul.f32 %v5429, %v5453
    %v6498 = vmul.f32 %v5430, %v5453
    %v6499 = vmul.f32 %v5431, %v5453
    %v6500 = vmul.f32 %v5432, %v5453
    %v6501 = vmul.f32 %v5433, %v5453
    %v6502 = vmul.f32 %v5434, %v5453
    %v6503 = vmul.f32 %v5435, %v5453
    %v6504 = vmul.f32 %v5436, %v5453
    %v6505 = vmul.f32 %v5437, %v5453
    %v6506 = vmul.f32 %v5438, %v5453
    %v6507 = vmul.f32 %v5439, %v5453
    %v6508 = vmul.f32 %v5440, %v5453
    %v6509 = vmul.f32 %v5441, %v5453
    %v6510 = vsel %vm312, %v6478, 0.0
    %6511 = vadd.xlane.f32.xlu0 %v6510
    %v6512 = vpop.xlane.xlu0 %6511
    %v6513 = vsel %vm312, %v6479, 0.0
    %6514 = vadd.xlane.f32.xlu0 %v6513
    %v6515 = vpop.xlane.xlu0 %6514
    %v6516 = vsel %vm312, %v6480, 0.0
    %6517 = vadd.xlane.f32.xlu0 %v6516
    %v6518 = vpop.xlane.xlu0 %6517
    %v6519 = vsel %vm312, %v6481, 0.0
    %6520 = vadd.xlane.f32.xlu0 %v6519
    %v6521 = vpop.xlane.xlu0 %6520
    %v6522 = vsel %vm312, %v6482, 0.0
    %6523 = vadd.xlane.f32.xlu0 %v6522
    %v6524 = vpop.xlane.xlu0 %6523
    %v6525 = vsel %vm312, %v6483, 0.0
    %6526 = vadd.xlane.f32.xlu0 %v6525
    %v6527 = vpop.xlane.xlu0 %6526
    %v6528 = vsel %vm312, %v6484, 0.0
    %6529 = vadd.xlane.f32.xlu0 %v6528
    %v6530 = vpop.xlane.xlu0 %6529
    %v6531 = vsel %vm312, %v6485, 0.0
    %6532 = vadd.xlane.f32.xlu0 %v6531
    %v6533 = vpop.xlane.xlu0 %6532
    %v6534 = vsel %vm312, %v6486, 0.0
    %6535 = vadd.xlane.f32.xlu0 %v6534
    %v6536 = vpop.xlane.xlu0 %6535
    %v6537 = vsel %vm312, %v6487, 0.0
    %6538 = vadd.xlane.f32.xlu0 %v6537
    %v6539 = vpop.xlane.xlu0 %6538
    %v6540 = vsel %vm312, %v6488, 0.0
    %6541 = vadd.xlane.f32.xlu0 %v6540
    %v6542 = vpop.xlane.xlu0 %6541
    %v6543 = vsel %vm312, %v6489, 0.0
    %6544 = vadd.xlane.f32.xlu0 %v6543
    %v6545 = vpop.xlane.xlu0 %6544
    %v6546 = vsel %vm312, %v6490, 0.0
    %6547 = vadd.xlane.f32.xlu0 %v6546
    %v6548 = vpop.xlane.xlu0 %6547
    %v6549 = vsel %vm312, %v6491, 0.0
    %6550 = vadd.xlane.f32.xlu0 %v6549
    %v6551 = vpop.xlane.xlu0 %6550
    %v6552 = vsel %vm312, %v6492, 0.0
    %6553 = vadd.xlane.f32.xlu0 %v6552
    %v6554 = vpop.xlane.xlu0 %6553
    %v6555 = vsel %vm312, %v6493, 0.0
    %6556 = vadd.xlane.f32.xlu0 %v6555
    %v6557 = vpop.xlane.xlu0 %6556
    %v6558 = vsel %vm312, %v6494, 0.0
    %6559 = vadd.xlane.f32.xlu0 %v6558
    %v6560 = vpop.xlane.xlu0 %6559
    %v6561 = vsel %vm312, %v6495, 0.0
    %6562 = vadd.xlane.f32.xlu0 %v6561
    %v6563 = vpop.xlane.xlu0 %6562
    %v6564 = vsel %vm312, %v6496, 0.0
    %6565 = vadd.xlane.f32.xlu0 %v6564
    %v6566 = vpop.xlane.xlu0 %6565
    %v6567 = vsel %vm312, %v6497, 0.0
    %6568 = vadd.xlane.f32.xlu0 %v6567
    %v6569 = vpop.xlane.xlu0 %6568
    %v6570 = vsel %vm312, %v6498, 0.0
    %6571 = vadd.xlane.f32.xlu0 %v6570
    %v6572 = vpop.xlane.xlu0 %6571
    %v6573 = vsel %vm312, %v6499, 0.0
    %6574 = vadd.xlane.f32.xlu0 %v6573
    %v6575 = vpop.xlane.xlu0 %6574
    %v6576 = vsel %vm312, %v6500, 0.0
    %6577 = vadd.xlane.f32.xlu0 %v6576
    %v6578 = vpop.xlane.xlu0 %6577
    %v6579 = vsel %vm312, %v6501, 0.0
    %6580 = vadd.xlane.f32.xlu0 %v6579
    %v6581 = vpop.xlane.xlu0 %6580
    %v6582 = vsel %vm312, %v6502, 0.0
    %6583 = vadd.xlane.f32.xlu0 %v6582
    %v6584 = vpop.xlane.xlu0 %6583
    %v6585 = vsel %vm312, %v6503, 0.0
    %6586 = vadd.xlane.f32.xlu0 %v6585
    %v6587 = vpop.xlane.xlu0 %6586
    %v6588 = vsel %vm312, %v6504, 0.0
    %6589 = vadd.xlane.f32.xlu0 %v6588
    %v6590 = vpop.xlane.xlu0 %6589
    %v6591 = vsel %vm312, %v6505, 0.0
    %6592 = vadd.xlane.f32.xlu0 %v6591
    %v6593 = vpop.xlane.xlu0 %6592
    %v6594 = vsel %vm312, %v6506, 0.0
    %6595 = vadd.xlane.f32.xlu0 %v6594
    %v6596 = vpop.xlane.xlu0 %6595
    %v6597 = vsel %vm312, %v6507, 0.0
    %6598 = vadd.xlane.f32.xlu0 %v6597
    %v6599 = vpop.xlane.xlu0 %6598
    %v6600 = vsel %vm312, %v6508, 0.0
    %6601 = vadd.xlane.f32.xlu0 %v6600
    %v6602 = vpop.xlane.xlu0 %6601
    %v6603 = vsel %vm312, %v6509, 0.0
    %6604 = vadd.xlane.f32.xlu0 %v6603
    %v6605 = vpop.xlane.xlu0 %6604
    %v6606 = vadd.f32 %v6512, %v5456
    %v6607 = vadd.f32 %v6515, %v5456
    %v6608 = vadd.f32 %v6518, %v5456
    %v6609 = vadd.f32 %v6521, %v5456
    %v6610 = vadd.f32 %v6524, %v5456
    %v6611 = vadd.f32 %v6527, %v5456
    %v6612 = vadd.f32 %v6530, %v5456
    %v6613 = vadd.f32 %v6533, %v5456
    %v6614 = vadd.f32 %v6536, %v5456
    %v6615 = vadd.f32 %v6539, %v5456
    %v6616 = vadd.f32 %v6542, %v5456
    %v6617 = vadd.f32 %v6545, %v5456
    %v6618 = vadd.f32 %v6548, %v5456
    %v6619 = vadd.f32 %v6551, %v5456
    %v6620 = vadd.f32 %v6554, %v5456
    %v6621 = vadd.f32 %v6557, %v5456
    %v6622 = vadd.f32 %v6560, %v5456
    %v6623 = vadd.f32 %v6563, %v5456
    %v6624 = vadd.f32 %v6566, %v5456
    %v6625 = vadd.f32 %v6569, %v5456
    %v6626 = vadd.f32 %v6572, %v5456
    %v6627 = vadd.f32 %v6575, %v5456
    %v6628 = vadd.f32 %v6578, %v5456
    %v6629 = vadd.f32 %v6581, %v5456
    %v6630 = vadd.f32 %v6584, %v5456
    %v6631 = vadd.f32 %v6587, %v5456
    %v6632 = vadd.f32 %v6590, %v5456
    %v6633 = vadd.f32 %v6593, %v5456
    %v6634 = vadd.f32 %v6596, %v5456
    %v6635 = vadd.f32 %v6599, %v5456
    %v6636 = vadd.f32 %v6602, %v5456
    %v6637 = vadd.f32 %v6605, %v5456
    %v6638 = vmax.f32 %v6606, 0.0
    %v6639 = vmax.f32 %v6607, 0.0
    %v6640 = vmax.f32 %v6608, 0.0
    %v6641 = vmax.f32 %v6609, 0.0
    %v6642 = vmax.f32 %v6610, 0.0
    %v6643 = vmax.f32 %v6611, 0.0
    %v6644 = vmax.f32 %v6612, 0.0
    %v6645 = vmax.f32 %v6613, 0.0
    %v6646 = vmax.f32 %v6614, 0.0
    %v6647 = vmax.f32 %v6615, 0.0
    %v6648 = vmax.f32 %v6616, 0.0
    %v6649 = vmax.f32 %v6617, 0.0
    %v6650 = vmax.f32 %v6618, 0.0
    %v6651 = vmax.f32 %v6619, 0.0
    %v6652 = vmax.f32 %v6620, 0.0
    %v6653 = vmax.f32 %v6621, 0.0
    %v6654 = vmax.f32 %v6622, 0.0
    %v6655 = vmax.f32 %v6623, 0.0
    %v6656 = vmax.f32 %v6624, 0.0
    %v6657 = vmax.f32 %v6625, 0.0
    %v6658 = vmax.f32 %v6626, 0.0
    %v6659 = vmax.f32 %v6627, 0.0
    %v6660 = vmax.f32 %v6628, 0.0
    %v6661 = vmax.f32 %v6629, 0.0
    %v6662 = vmax.f32 %v6630, 0.0
    %v6663 = vmax.f32 %v6631, 0.0
    %v6664 = vmax.f32 %v6632, 0.0
    %v6665 = vmax.f32 %v6633, 0.0
    %v6666 = vmax.f32 %v6634, 0.0
    %v6667 = vmax.f32 %v6635, 0.0
    %v6668 = vmax.f32 %v6636, 0.0
    %v6669 = vmax.f32 %v6637, 0.0
    %v6670 = vmul.f32 %v6638, %v5653
    %v6671 = vmul.f32 %v6639, %v5653
    %v6672 = vmul.f32 %v6640, %v5653
    %v6673 = vmul.f32 %v6641, %v5653
    %v6674 = vmul.f32 %v6642, %v5653
    %v6675 = vmul.f32 %v6643, %v5653
    %v6676 = vmul.f32 %v6644, %v5653
    %v6677 = vmul.f32 %v6645, %v5653
    %v6678 = vmul.f32 %v6646, %v5653
    %v6679 = vmul.f32 %v6647, %v5653
    %v6680 = vmul.f32 %v6648, %v5653
    %v6681 = vmul.f32 %v6649, %v5653
    %v6682 = vmul.f32 %v6650, %v5653
    %v6683 = vmul.f32 %v6651, %v5653
    %v6684 = vmul.f32 %v6652, %v5653
    %v6685 = vmul.f32 %v6653, %v5653
    %v6686 = vmul.f32 %v6654, %v5653
    %v6687 = vmul.f32 %v6655, %v5653
    %v6688 = vmul.f32 %v6656, %v5653
    %v6689 = vmul.f32 %v6657, %v5653
    %v6690 = vmul.f32 %v6658, %v5653
    %v6691 = vmul.f32 %v6659, %v5653
    %v6692 = vmul.f32 %v6660, %v5653
    %v6693 = vmul.f32 %v6661, %v5653
    %v6694 = vmul.f32 %v6662, %v5653
    %v6695 = vmul.f32 %v6663, %v5653
    %v6696 = vmul.f32 %v6664, %v5653
    %v6697 = vmul.f32 %v6665, %v5653
    %v6698 = vmul.f32 %v6666, %v5653
    %v6699 = vmul.f32 %v6667, %v5653
    %v6700 = vmul.f32 %v6668, %v5653
    %v6701 = vmul.f32 %v6669, %v5653
    %v6702 = vadd.f32 %v6670, %v5460
    %v6703 = vadd.f32 %v6671, %v5460
    %v6704 = vadd.f32 %v6672, %v5460
    %v6705 = vadd.f32 %v6673, %v5460
    %v6706 = vadd.f32 %v6674, %v5460
    %v6707 = vadd.f32 %v6675, %v5460
    %v6708 = vadd.f32 %v6676, %v5460
    %v6709 = vadd.f32 %v6677, %v5460
    %v6710 = vadd.f32 %v6678, %v5460
    %v6711 = vadd.f32 %v6679, %v5460
    %v6712 = vadd.f32 %v6680, %v5460
    %v6713 = vadd.f32 %v6681, %v5460
    %v6714 = vadd.f32 %v6682, %v5460
    %v6715 = vadd.f32 %v6683, %v5460
    %v6716 = vadd.f32 %v6684, %v5460
    %v6717 = vadd.f32 %v6685, %v5460
    %v6718 = vadd.f32 %v6686, %v5460
    %v6719 = vadd.f32 %v6687, %v5460
    %v6720 = vadd.f32 %v6688, %v5460
    %v6721 = vadd.f32 %v6689, %v5460
    %v6722 = vadd.f32 %v6690, %v5460
    %v6723 = vadd.f32 %v6691, %v5460
    %v6724 = vadd.f32 %v6692, %v5460
    %v6725 = vadd.f32 %v6693, %v5460
    %v6726 = vadd.f32 %v6694, %v5460
    %v6727 = vadd.f32 %v6695, %v5460
    %v6728 = vadd.f32 %v6696, %v5460
    %v6729 = vadd.f32 %v6697, %v5460
    %v6730 = vadd.f32 %v6698, %v5460
    %v6731 = vadd.f32 %v6699, %v5460
    %v6732 = vadd.f32 %v6700, %v5460
    %v6733 = vadd.f32 %v6701, %v5460
    %v6734 = vmax.f32 %v6702, %v6704
    %v6735 = vmax.f32 %v6734, %v6706
    %v6736 = vmax.f32 %v6735, %v6708
    %v6737 = vmax.f32 %v6736, %v6710
    %v6738 = vmax.f32 %v6737, %v6712
    %v6739 = vmax.f32 %v6738, %v6714
    %v6740 = vmax.f32 %v6739, %v6716
    %v6741 = vmax.f32 %v6703, %v6705
    %v6742 = vmax.f32 %v6741, %v6707
    %v6743 = vmax.f32 %v6742, %v6709
    %v6744 = vmax.f32 %v6743, %v6711
    %v6745 = vmax.f32 %v6744, %v6713
    %v6746 = vmax.f32 %v6745, %v6715
    %v6747 = vmax.f32 %v6746, %v6717
    %v6748 = vmax.f32 %v6718, %v6720
    %v6749 = vmax.f32 %v6748, %v6722
    %v6750 = vmax.f32 %v6749, %v6724
    %v6751 = vmax.f32 %v6750, %v6726
    %v6752 = vmax.f32 %v6751, %v6728
    %v6753 = vmax.f32 %v6752, %v6730
    %v6754 = vmax.f32 %v6753, %v6732
    %v6755 = vmax.f32 %v6719, %v6721
    %v6756 = vmax.f32 %v6755, %v6723
    %v6757 = vmax.f32 %v6756, %v6725
    %v6758 = vmax.f32 %v6757, %v6727
    %v6759 = vmax.f32 %v6758, %v6729
    %v6760 = vmax.f32 %v6759, %v6731
    %v6761 = vmax.f32 %v6760, %v6733
    %v6762 = vsub.f32 %v6702, %v6740
    %v6763 = vsub.f32 %v6703, %v6747
    %v6764 = vsub.f32 %v6704, %v6740
    %v6765 = vsub.f32 %v6705, %v6747
    %v6766 = vsub.f32 %v6706, %v6740
    %v6767 = vsub.f32 %v6707, %v6747
    %v6768 = vsub.f32 %v6708, %v6740
    %v6769 = vsub.f32 %v6709, %v6747
    %v6770 = vsub.f32 %v6710, %v6740
    %v6771 = vsub.f32 %v6711, %v6747
    %v6772 = vsub.f32 %v6712, %v6740
    %v6773 = vsub.f32 %v6713, %v6747
    %v6774 = vsub.f32 %v6714, %v6740
    %v6775 = vsub.f32 %v6715, %v6747
    %v6776 = vsub.f32 %v6716, %v6740
    %v6777 = vsub.f32 %v6717, %v6747
    %v6778 = vsub.f32 %v6718, %v6754
    %v6779 = vsub.f32 %v6719, %v6761
    %v6780 = vsub.f32 %v6720, %v6754
    %v6781 = vsub.f32 %v6721, %v6761
    %v6782 = vsub.f32 %v6722, %v6754
    %v6783 = vsub.f32 %v6723, %v6761
    %v6784 = vsub.f32 %v6724, %v6754
    %v6785 = vsub.f32 %v6725, %v6761
    %v6786 = vsub.f32 %v6726, %v6754
    %v6787 = vsub.f32 %v6727, %v6761
    %v6788 = vsub.f32 %v6728, %v6754
    %v6789 = vsub.f32 %v6729, %v6761
    %v6790 = vsub.f32 %v6730, %v6754
    %v6791 = vsub.f32 %v6731, %v6761
    %v6792 = vsub.f32 %v6732, %v6754
    %v6793 = vsub.f32 %v6733, %v6761
    %v6794 = vmul.f32 %v6762, 1.442695
    %v6795 = vpow.pop %v6794
    %v6796 = vmul.f32 %v6763, 1.442695
    %v6797 = vpow.pop %v6796
    %v6798 = vmul.f32 %v6764, 1.442695
    %v6799 = vpow.pop %v6798
    %v6800 = vmul.f32 %v6765, 1.442695
    %v6801 = vpow.pop %v6800
    %v6802 = vmul.f32 %v6766, 1.442695
    %v6803 = vpow.pop %v6802
    %v6804 = vmul.f32 %v6767, 1.442695
    %v6805 = vpow.pop %v6804
    %v6806 = vmul.f32 %v6768, 1.442695
    %v6807 = vpow.pop %v6806
    %v6808 = vmul.f32 %v6769, 1.442695
    %v6809 = vpow.pop %v6808
    %v6810 = vmul.f32 %v6770, 1.442695
    %v6811 = vpow.pop %v6810
    %v6812 = vmul.f32 %v6771, 1.442695
    %v6813 = vpow.pop %v6812
    %v6814 = vmul.f32 %v6772, 1.442695
    %v6815 = vpow.pop %v6814
    %v6816 = vmul.f32 %v6773, 1.442695
    %v6817 = vpow.pop %v6816
    %v6818 = vmul.f32 %v6774, 1.442695
    %v6819 = vpow.pop %v6818
    %v6820 = vmul.f32 %v6775, 1.442695
    %v6821 = vpow.pop %v6820
    %v6822 = vmul.f32 %v6776, 1.442695
    %v6823 = vpow.pop %v6822
    %v6824 = vmul.f32 %v6777, 1.442695
    %v6825 = vpow.pop %v6824
    %v6826 = vmul.f32 %v6778, 1.442695
    %v6827 = vpow.pop %v6826
    %v6828 = vmul.f32 %v6779, 1.442695
    %v6829 = vpow.pop %v6828
    %v6830 = vmul.f32 %v6780, 1.442695
    %v6831 = vpow.pop %v6830
    %v6832 = vmul.f32 %v6781, 1.442695
    %v6833 = vpow.pop %v6832
    %v6834 = vmul.f32 %v6782, 1.442695
    %v6835 = vpow.pop %v6834
    %v6836 = vmul.f32 %v6783, 1.442695
    %v6837 = vpow.pop %v6836
    %v6838 = vmul.f32 %v6784, 1.442695
    %v6839 = vpow.pop %v6838
    %v6840 = vmul.f32 %v6785, 1.442695
    %v6841 = vpow.pop %v6840
    %v6842 = vmul.f32 %v6786, 1.442695
    %v6843 = vpow.pop %v6842
    %v6844 = vmul.f32 %v6787, 1.442695
    %v6845 = vpow.pop %v6844
    %v6846 = vmul.f32 %v6788, 1.442695
    %v6847 = vpow.pop %v6846
    %v6848 = vmul.f32 %v6789, 1.442695
    %v6849 = vpow.pop %v6848
    %v6850 = vmul.f32 %v6790, 1.442695
    %v6851 = vpow.pop %v6850
    %v6852 = vmul.f32 %v6791, 1.442695
    %v6853 = vpow.pop %v6852
    %v6854 = vmul.f32 %v6792, 1.442695
    %v6855 = vpow.pop %v6854
    %v6856 = vmul.f32 %v6793, 1.442695
    %v6857 = vpow.pop %v6856
    %v6858 = vadd.f32 %v6795, %v6799
    %v6859 = vadd.f32 %v6858, %v6803
    %v6860 = vadd.f32 %v6859, %v6807
    %v6861 = vadd.f32 %v6860, %v6811
    %v6862 = vadd.f32 %v6861, %v6815
    %v6863 = vadd.f32 %v6862, %v6819
    %v6864 = vadd.f32 %v6863, %v6823
    %v6865 = vadd.f32 %v6797, %v6801
    %v6866 = vadd.f32 %v6865, %v6805
    %v6867 = vadd.f32 %v6866, %v6809
    %v6868 = vadd.f32 %v6867, %v6813
    %v6869 = vadd.f32 %v6868, %v6817
    %v6870 = vadd.f32 %v6869, %v6821
    %v6871 = vadd.f32 %v6870, %v6825
    %v6872 = vadd.f32 %v6827, %v6831
    %v6873 = vadd.f32 %v6872, %v6835
    %v6874 = vadd.f32 %v6873, %v6839
    %v6875 = vadd.f32 %v6874, %v6843
    %v6876 = vadd.f32 %v6875, %v6847
    %v6877 = vadd.f32 %v6876, %v6851
    %v6878 = vadd.f32 %v6877, %v6855
    %v6879 = vadd.f32 %v6829, %v6833
    %v6880 = vadd.f32 %v6879, %v6837
    %v6881 = vadd.f32 %v6880, %v6841
    %v6882 = vadd.f32 %v6881, %v6845
    %v6883 = vadd.f32 %v6882, %v6849
    %v6884 = vadd.f32 %v6883, %v6853
    %v6885 = vadd.f32 %v6884, %v6857
    %v6886 = vmul.f32 %v6864, 3.0
    %v6887 = vmul.f32 %v6871, 3.0
    %v6888 = vmul.f32 %v6878, 3.0
    %v6889 = vmul.f32 %v6885, 3.0
    %v6890 = vrcp.pop %v6886
    %v6891 = vrcp.pop %v6887
    %v6892 = vrcp.pop %v6888
    %v6893 = vrcp.pop %v6889
    %v6894 = vmul.f32 %v6886, %v6890
    %v6895 = vmul.f32 %v6887, %v6891
    %v6896 = vmul.f32 %v6888, %v6892
    %v6897 = vmul.f32 %v6889, %v6893
    %v6898 = vsub.f32 2.0, %v6894
    %v6899 = vsub.f32 2.0, %v6895
    %v6900 = vsub.f32 2.0, %v6896
    %v6901 = vsub.f32 2.0, %v6897
    %v6902 = vmul.f32 %v6890, %v6898
    %v6903 = vmul.f32 %v6891, %v6899
    %v6904 = vmul.f32 %v6892, %v6900
    %v6905 = vmul.f32 %v6893, %v6901
    %v6906 = vmul.f32 %v6795, %v6902
    %v6907 = vmul.f32 %v6797, %v6903
    %v6908 = vmul.f32 %v6799, %v6902
    %v6909 = vmul.f32 %v6801, %v6903
    %v6910 = vmul.f32 %v6803, %v6902
    %v6911 = vmul.f32 %v6805, %v6903
    %v6912 = vmul.f32 %v6807, %v6902
    %v6913 = vmul.f32 %v6809, %v6903
    %v6914 = vmul.f32 %v6811, %v6902
    %v6915 = vmul.f32 %v6813, %v6903
    %v6916 = vmul.f32 %v6815, %v6902
    %v6917 = vmul.f32 %v6817, %v6903
    %v6918 = vmul.f32 %v6819, %v6902
    %v6919 = vmul.f32 %v6821, %v6903
    %v6920 = vmul.f32 %v6823, %v6902
    %v6921 = vmul.f32 %v6825, %v6903
    %v6922 = vmul.f32 %v6827, %v6904
    %v6923 = vmul.f32 %v6829, %v6905
    %v6924 = vmul.f32 %v6831, %v6904
    %v6925 = vmul.f32 %v6833, %v6905
    %v6926 = vmul.f32 %v6835, %v6904
    %v6927 = vmul.f32 %v6837, %v6905
    %v6928 = vmul.f32 %v6839, %v6904
    %v6929 = vmul.f32 %v6841, %v6905
    %v6930 = vmul.f32 %v6843, %v6904
    %v6931 = vmul.f32 %v6845, %v6905
    %v6932 = vmul.f32 %v6847, %v6904
    %v6933 = vmul.f32 %v6849, %v6905
    %v6934 = vmul.f32 %v6851, %v6904
    %v6935 = vmul.f32 %v6853, %v6905
    %v6936 = vmul.f32 %v6855, %v6904
    %v6937 = vmul.f32 %v6857, %v6905
    %v6938 = vmul.f32 %v5410, %v6906
    %v6939 = vmul.f32 %v5411, %v6907
    %v6940 = vmul.f32 %v5412, %v6908
    %v6941 = vmul.f32 %v5413, %v6909
    %v6942 = vmul.f32 %v5414, %v6910
    %v6943 = vmul.f32 %v5415, %v6911
    %v6944 = vmul.f32 %v5416, %v6912
    %v6945 = vmul.f32 %v5417, %v6913
    %v6946 = vmul.f32 %v5418, %v6914
    %v6947 = vmul.f32 %v5419, %v6915
    %v6948 = vmul.f32 %v5420, %v6916
    %v6949 = vmul.f32 %v5421, %v6917
    %v6950 = vmul.f32 %v5422, %v6918
    %v6951 = vmul.f32 %v5423, %v6919
    %v6952 = vmul.f32 %v5424, %v6920
    %v6953 = vmul.f32 %v5425, %v6921
    %v6954 = vmul.f32 %v5426, %v6922
    %v6955 = vmul.f32 %v5427, %v6923
    %v6956 = vmul.f32 %v5428, %v6924
    %v6957 = vmul.f32 %v5429, %v6925
    %v6958 = vmul.f32 %v5430, %v6926
    %v6959 = vmul.f32 %v5431, %v6927
    %v6960 = vmul.f32 %v5432, %v6928
    %v6961 = vmul.f32 %v5433, %v6929
    %v6962 = vmul.f32 %v5434, %v6930
    %v6963 = vmul.f32 %v5435, %v6931
    %v6964 = vmul.f32 %v5436, %v6932
    %v6965 = vmul.f32 %v5437, %v6933
    %v6966 = vmul.f32 %v5438, %v6934
    %v6967 = vmul.f32 %v5439, %v6935
    %v6968 = vmul.f32 %v5440, %v6936
    %v6969 = vmul.f32 %v5441, %v6937
    %v6970 = vadd.f32 %v6446, %v6938
    %v6971 = vadd.f32 %v6447, %v6939
    %v6972 = vadd.f32 %v6448, %v6940
    %v6973 = vadd.f32 %v6449, %v6941
    %v6974 = vadd.f32 %v6450, %v6942
    %v6975 = vadd.f32 %v6451, %v6943
    %v6976 = vadd.f32 %v6452, %v6944
    %v6977 = vadd.f32 %v6453, %v6945
    %v6978 = vadd.f32 %v6454, %v6946
    %v6979 = vadd.f32 %v6455, %v6947
    %v6980 = vadd.f32 %v6456, %v6948
    %v6981 = vadd.f32 %v6457, %v6949
    %v6982 = vadd.f32 %v6458, %v6950
    %v6983 = vadd.f32 %v6459, %v6951
    %v6984 = vadd.f32 %v6460, %v6952
    %v6985 = vadd.f32 %v6461, %v6953
    %v6986 = vadd.f32 %v6462, %v6954
    %v6987 = vadd.f32 %v6463, %v6955
    %v6988 = vadd.f32 %v6464, %v6956
    %v6989 = vadd.f32 %v6465, %v6957
    %v6990 = vadd.f32 %v6466, %v6958
    %v6991 = vadd.f32 %v6467, %v6959
    %v6992 = vadd.f32 %v6468, %v6960
    %v6993 = vadd.f32 %v6469, %v6961
    %v6994 = vadd.f32 %v6470, %v6962
    %v6995 = vadd.f32 %v6471, %v6963
    %v6996 = vadd.f32 %v6472, %v6964
    %v6997 = vadd.f32 %v6473, %v6965
    %v6998 = vadd.f32 %v6474, %v6966
    %v6999 = vadd.f32 %v6475, %v6967
    %v7000 = vadd.f32 %v6476, %v6968
    %v7001 = vadd.f32 %v6477, %v6969
    %7002 = vst.msk [vmem:[%s2] sm:$0xff] %vm312, %v6970
    %7003 = vst.msk [vmem:[%s2 + $0x8] sm:$0xff] %vm312, %v6971
    %7004 = vst.msk [vmem:[%s2 + $0x10] sm:$0xff] %vm312, %v6972
    %7005 = vst.msk [vmem:[%s2 + $0x18] sm:$0xff] %vm312, %v6973
    %7006 = vst.msk [vmem:[%s2 + $0x20] sm:$0xff] %vm312, %v6974
    %7007 = vst.msk [vmem:[%s2 + $0x28] sm:$0xff] %vm312, %v6975
    %7008 = vst.msk [vmem:[%s2 + $0x30] sm:$0xff] %vm312, %v6976
    %7009 = vst.msk [vmem:[%s2 + $0x38] sm:$0xff] %vm312, %v6977
    %7010 = vst.msk [vmem:[%s2 + $0x40] sm:$0xff] %vm312, %v6978
    %7011 = vst.msk [vmem:[%s2 + $0x48] sm:$0xff] %vm312, %v6979
    %7012 = vst.msk [vmem:[%s2 + $0x50] sm:$0xff] %vm312, %v6980
    %7013 = vst.msk [vmem:[%s2 + $0x58] sm:$0xff] %vm312, %v6981
    %7014 = vst.msk [vmem:[%s2 + $0x60] sm:$0xff] %vm312, %v6982
    %7015 = vst.msk [vmem:[%s2 + $0x68] sm:$0xff] %vm312, %v6983
    %7016 = vst.msk [vmem:[%s2 + $0x70] sm:$0xff] %vm312, %v6984
    %7017 = vst.msk [vmem:[%s2 + $0x78] sm:$0xff] %vm312, %v6985
    %7018 = vst.msk [vmem:[%s2 + $0x80] sm:$0xff] %vm312, %v6986
    %7019 = vst.msk [vmem:[%s2 + $0x88] sm:$0xff] %vm312, %v6987
    %7020 = vst.msk [vmem:[%s2 + $0x90] sm:$0xff] %vm312, %v6988
    %7021 = vst.msk [vmem:[%s2 + $0x98] sm:$0xff] %vm312, %v6989
    %7022 = vst.msk [vmem:[%s2 + $0xa0] sm:$0xff] %vm312, %v6990
    %7023 = vst.msk [vmem:[%s2 + $0xa8] sm:$0xff] %vm312, %v6991
    %7024 = vst.msk [vmem:[%s2 + $0xb0] sm:$0xff] %vm312, %v6992
    %7025 = vst.msk [vmem:[%s2 + $0xb8] sm:$0xff] %vm312, %v6993
    %7026 = vst.msk [vmem:[%s2 + $0xc0] sm:$0xff] %vm312, %v6994
    %7027 = vst.msk [vmem:[%s2 + $0xc8] sm:$0xff] %vm312, %v6995
    %7028 = vst.msk [vmem:[%s2 + $0xd0] sm:$0xff] %vm312, %v6996
    %7029 = vst.msk [vmem:[%s2 + $0xd8] sm:$0xff] %vm312, %v6997
    %7030 = vst.msk [vmem:[%s2 + $0xe0] sm:$0xff] %vm312, %v6998
    %7031 = vst.msk [vmem:[%s2 + $0xe8] sm:$0xff] %vm312, %v6999
    %7032 = vst.msk [vmem:[%s2 + $0xf0] sm:$0xff] %vm312, %v7000
    %7033 = vst.msk [vmem:[%s2 + $0xf8] sm:$0xff] %vm312, %v7001
    // Predicated region
    $region14: #{mca_layer.1} parent=1 // pred_check
      _
    $region15: #{mca_layer.1} parent=1 // pred_check_branch
      %7035 = sbr.rel (0) target = $region17
    $region16: #{mca_layer.1} parent=1 // pred_region
      _
    $region17: #{mca_layer.1} parent=1 // pred_fallthru
      _
    // Predicated region
    $region18: #{mca_layer.1} parent=1 // pred_check
      _
    $region19: #{mca_layer.1} parent=1 // pred_check_branch
      %7037 = sbr.rel (0) target = $region21
    $region20: #{mca_layer.1} parent=1 // pred_region
      _
    $region21: #{mca_layer.1} parent=1 // pred_fallthru
      _
    %7038 = vsyncpa [#allocation4], 1

</llo_original>
